<compile_context>
chip_gen: v7x
topology: tpu7x:2x2x1
jax: 0.10.0
libtpu: 0.0.40
codegen_flags: <defaults>
</compile_context>

<pallas_src>
import jax
import jax.numpy as jnp
from jax.experimental import pallas as pl
from jax.experimental.pallas import tpu as pltpu

BF16 = jnp.bfloat16
F32 = jnp.float32


# --------------------------------------------------------------------------
# Kernels
# --------------------------------------------------------------------------
def encoder_kernel(x_ref, w1_ref, b1_ref, w2_ref, b2_ref,
                   wl_ref, wg_ref, bh_ref, w3_ref, b3_ref,
                   g2_ref,
                   feat_sc, g1_sc, g1t_sc, g2_sc):
    """Fused first_conv + max + second_conv + max.

    grid = (B, 2, Ntiles).  Pass p=0 streams point tiles through first_conv,
    caches `feat` (bf16) in VMEM and builds the running max g1.  Pass p=1
    re-reads `feat` from VMEM (no HBM round trip), applies second_conv with
    the hoisted global term, builds the latent code g2 and writes it out on
    the last step only.

    NOTE: correctness relies on the g2 output block staying resident across
    the whole (pass, tile) sub-grid of a batch (out index_map depends only on
    b).  Do not change the out_specs index_map without also writing g2 during
    pass 0.
    """
    p = pl.program_id(1)
    n = pl.program_id(2)

    @pl.when(p == 0)
    def _pass0():
        @pl.when(n == 0)
        def _():
            g1_sc[...] = jnp.full_like(g1_sc, -jnp.inf)

        x = x_ref[0]                                               # (tn, 3) bf16
        h = jnp.dot(x, w1_ref[...], preferred_element_type=F32) + b1_ref[...]
        h = jnp.maximum(h, 0.0)                                    # Conv+BN+ReLU
        f = (jnp.dot(h.astype(BF16), w2_ref[...],
                     preferred_element_type=F32) + b2_ref[...])    # (tn, c2) f32
        # running max on the f32 activations; cache in bf16 (half VMEM / vst)
        g1_sc[...] = jnp.maximum(g1_sc[...], jnp.max(f, axis=0, keepdims=True))
        feat_sc[n] = f.astype(BF16)

    @pl.when(p == 1)
    def _pass1():
        @pl.when(n == 0)
        def _():
            g2_sc[...] = jnp.full_like(g2_sc, -jnp.inf)
            # hoist the M=1 global-feature matmul out of the per-tile loop
            g1t_sc[...] = (jnp.dot(g1_sc[...].astype(BF16), wg_ref[...],
                                   preferred_element_type=F32) + bh_ref[...])

        f = feat_sc[n]                                             # (tn, c2) bf16
        h = jnp.maximum(
            jnp.dot(f, wl_ref[...], preferred_element_type=F32) + g1t_sc[...],
            0.0)
        z = (jnp.dot(h.astype(BF16), w3_ref[...],
                     preferred_element_type=F32) + b3_ref[...])    # (tn, latent)
        g2_sc[...] = jnp.maximum(g2_sc[...], jnp.max(z, axis=0, keepdims=True))

        @pl.when(n == pl.num_programs(2) - 1)
        def _():
            g2_ref[0] = g2_sc[...]          # single store per batch


def fold_kernel(s1_ref, g2_ref, f1_wg, f1_b1, f2_wg, b2f_ref,
                f1_w2, f1_b2, wfuse, f2_w2, f2_b2, f2_w3, f2_b3,
                out_ref, gb1_sc, gb2_sc):
    """folding1 + folding2 on a tile of grid points.

    s1 = seed @ f1_ws is precomputed (batch independent).  The activation-free
    pair f1_w3 @ f2_wf is fused into one (hf, hf) weight, so fd1 is never
    materialised.  The per-batch M=1 matmuls gb1/gb2 are computed once per
    batch (q == 0) into VMEM scratch; the q axis must be "arbitrary".
    """
    q = pl.program_id(1)

    @pl.when(q == 0)
    def _():
        g2 = g2_ref[0].astype(BF16)                                # (1, latent)
        gb1_sc[...] = (jnp.dot(g2, f1_wg[...],
                               preferred_element_type=F32) + f1_b1[...])
        gb2_sc[...] = (jnp.dot(g2, f2_wg[...],
                               preferred_element_type=F32) + b2f_ref[...])

    # folding1 layer 1: relu(seed@Ws + g2@Wg + b)   (seed term precomputed)
    h = jnp.maximum(s1_ref[...].astype(F32) + gb1_sc[...], 0.0)
    # folding1 layer 2
    h = jnp.maximum(
        jnp.dot(h.astype(BF16), f1_w2[...], preferred_element_type=F32)
        + f1_b2[...], 0.0)
    # fused (folding1 layer 3) @ (folding2 layer 1) + folding2 bias/global
    h = jnp.maximum(
        jnp.dot(h.astype(BF16), wfuse[...], preferred_element_type=F32)
        + gb2_sc[...], 0.0)
    # folding2 layer 2
    h = jnp.maximum(
        jnp.dot(h.astype(BF16), f2_w2[...], preferred_element_type=F32)
        + f2_b2[...], 0.0)
    # folding2 layer 3 -> 3-D points
    out_ref[0] = (jnp.dot(h.astype(BF16), f2_w3[...],
                          preferred_element_type=F32) + f2_b3[...])


# --------------------------------------------------------------------------
# Wrapper
# --------------------------------------------------------------------------
def foldingnet_forward(x, p, *, tn=256, tp=256):
    B, N, _ = x.shape
    num_pred = p["seed"].shape[0]
    c1 = p["e1_w1"].shape[1]
    c2 = p["e1_w2"].shape[1]
    h2 = p["e2_wl"].shape[1]
    latent = p["e2_w2"].shape[1]
    hf = p["f1_w2"].shape[0]

    def w(name):                     # matmul operands feed the MXU in bf16
        return p[name].astype(BF16)

    # ---- pad N / num_pred so the tiles divide evenly -----------------------
    n_tiles = pl.cdiv(N, tn)
    n_pad = n_tiles * tn
    xb = x.astype(BF16)
    if n_pad != N:
        # replicate the last real point -> both running maxes are unchanged
        xb = jnp.concatenate(
            [xb, jnp.broadcast_to(xb[:, -1:, :], (B, n_pad - N, 3))], axis=1)

    q_tiles = pl.cdiv(num_pred, tp)
    p_pad = q_tiles * tp
    seed = p["seed"].astype(BF16)
    if p_pad != num_pred:
        seed = jnp.pad(seed, ((0, p_pad - num_pred), (0, 0)))

    # ---- batch-independent fold constants (precomputed once) ---------------
    s1 = jnp.dot(seed, w("f1_ws"),
                 preferred_element_type=F32).astype(BF16)        # (p_pad, hf)
    w_fuse = jnp.dot(p["f1_w3"], p["f2_wf"],
                     preferred_element_type=F32)                 # (hf, hf) f32
    b2_fused = p["f2_b1"] + jnp.dot(p["f1_b3"], p["f2_wf"],
                                    preferred_element_type=F32)  # (1, hf)

    # ---------- fused encoder: first_conv + max + second_conv + max ---------
    g2 = pl.pallas_call(
        encoder_kernel,
        out_shape=jax.ShapeDtypeStruct((B, 1, latent), F32),
        grid_spec=pltpu.PrefetchScalarGridSpec(
            num_scalar_prefetch=0,
            grid=(B, 2, n_tiles),
            in_specs=[
                # x streams in pass 0; block index pinned during pass 1 so the
                # tile stays resident (no wasted HBM re-reads).
                pl.BlockSpec((1, tn, 3), lambda b, s, n: (b, n * (1 - s), 0)),
                pl.BlockSpec((3, c1), lambda b, s, n: (0, 0)),
                pl.BlockSpec((1, c1), lambda b, s, n: (0, 0)),
                pl.BlockSpec((c1, c2), lambda b, s, n: (0, 0)),
                pl.BlockSpec((1, c2), lambda b, s, n: (0, 0)),
                pl.BlockSpec((c2, h2), lambda b, s, n: (0, 0)),
                pl.BlockSpec((c2, h2), lambda b, s, n: (0, 0)),
                pl.BlockSpec((1, h2), lambda b, s, n: (0, 0)),
                pl.BlockSpec((h2, latent), lambda b, s, n: (0, 0)),
                pl.BlockSpec((1, latent), lambda b, s, n: (0, 0)),
            ],
            out_specs=pl.BlockSpec((1, 1, latent), lambda b, s, n: (b, 0, 0)),
            scratch_shapes=[
                pltpu.VMEM((n_tiles, tn, c2), BF16),  # feat cache (bf16, no HBM trip)
                pltpu.VMEM((1, c2), F32),             # running max g1
                pltpu.VMEM((1, h2), F32),             # hoisted g1 @ Wg + b
                pltpu.VMEM((1, latent), F32),         # running max g2
            ]),
        compiler_params=pltpu.CompilerParams(
            dimension_semantics=("parallel", "arbitrary", "arbitrary")),
    )(xb, w("e1_w1"), p["e1_b1"], w("e1_w2"), p["e1_b2"],
      w("e2_wl"), w("e2_wg"), p["e2_b1"], w("e2_w2"), p["e2_b2"])

    # ---------- folding1 + folding2 over the grid seed ----------------------
    fd2 = pl.pallas_call(
        fold_kernel,
        out_shape=jax.ShapeDtypeStruct((B, p_pad, 3), F32),
        grid_spec=pltpu.PrefetchScalarGridSpec(
            num_scalar_prefetch=0,
            grid=(B, q_tiles),
            in_specs=[
                pl.BlockSpec((tp, hf), lambda b, q: (q, 0)),        # s1 tile
                pl.BlockSpec((1, 1, latent), lambda b, q: (b, 0, 0)),
                pl.BlockSpec((latent, hf), lambda b, q: (0, 0)),    # f1_wg
                pl.BlockSpec((1, hf), lambda b, q: (0, 0)),         # f1_b1
                pl.BlockSpec((latent, hf), lambda b, q: (0, 0)),    # f2_wg
                pl.BlockSpec((1, hf), lambda b, q: (0, 0)),         # fused f2 bias
                pl.BlockSpec((hf, hf), lambda b, q: (0, 0)),        # f1_w2
                pl.BlockSpec((1, hf), lambda b, q: (0, 0)),         # f1_b2
                pl.BlockSpec((hf, hf), lambda b, q: (0, 0)),        # W_fuse
                pl.BlockSpec((hf, hf), lambda b, q: (0, 0)),        # f2_w2
                pl.BlockSpec((1, hf), lambda b, q: (0, 0)),         # f2_b2
                pl.BlockSpec((hf, 3), lambda b, q: (0, 0)),         # f2_w3
                pl.BlockSpec((1, 3), lambda b, q: (0, 0)),          # f2_b3
            ],
            out_specs=pl.BlockSpec((1, tp, 3), lambda b, q: (b, q, 0)),
            scratch_shapes=[
                pltpu.VMEM((1, hf), F32),   # gb1 = g2 @ f1_wg + b (per batch)
                pltpu.VMEM((1, hf), F32),   # gb2 = g2 @ f2_wg + fused bias
            ]),
        compiler_params=pltpu.CompilerParams(
            # q carries the per-batch gb scratch -> must stay "arbitrary"
            dimension_semantics=("parallel", "arbitrary")),
    )(s1, g2,
      w("f1_wg"), p["f1_b1"], w("f2_wg"), b2_fused,
      w("f1_w2"), p["f1_b2"], w_fuse.astype(BF16),
      w("f2_w2"), p["f2_b2"], w("f2_w3"), p["f2_b3"])

    return fd2[:, :num_pred, :]


# --------------------------------------------------------------------------
# Deterministic parameter setup (BN eval-mode folded into preceding conv)
# --------------------------------------------------------------------------
def _conv(key, cin, cout):
    kw, kb = jax.random.split(key)
    w = 0.1 * jax.random.normal(kw, (cin, cout), F32)
    b = 0.1 * jax.random.normal(kb, (1, cout), F32)
    return w, b


def _conv_bn(key, cin, cout, eps=1e-5):
    kw, kb, kg, kt = jax.random.split(key, 4)
    w = 0.1 * jax.random.normal(kw, (cin, cout), F32)
    b = 0.1 * jax.random.normal(kb, (1, cout), F32)
    gamma = 1.0 + 0.1 * jax.random.normal(kg, (1, cout), F32)
    beta = 0.1 * jax.random.normal(kt, (1, cout), F32)
    scale = gamma / jnp.sqrt(1.0 + eps)     # eval BN, mean=0 / var=1, folded
    return w * scale, b * scale + beta


def init_params(key, *, c1, c2, h2, latent, hf, num_pred):
    keys = jax.random.split(key, 10)
    p = {}
    # first_conv: Conv1d(3,c1) BN ReLU Conv1d(c1,c2)
    p["e1_w1"], p["e1_b1"] = _conv_bn(keys[0], 3, c1)
    p["e1_w2"], p["e1_b2"] = _conv(keys[1], c1, c2)
    # second_conv on cat([global, local]): Conv1d(2*c2,h2) BN ReLU Conv1d(h2,latent)
    w, b = _conv_bn(keys[2], 2 * c2, h2)
    p["e2_wg"], p["e2_wl"], p["e2_b1"] = w[:c2], w[c2:], b
    p["e2_w2"], p["e2_b2"] = _conv(keys[3], h2, latent)
    # folding1: Conv1d(latent+2,hf) BN ReLU Conv1d(hf,hf) BN ReLU Conv1d(hf,3)
    w, b = _conv_bn(keys[4], 2 + latent, hf)
    p["f1_ws"], p["f1_wg"], p["f1_b1"] = w[:2], w[2:], b
    p["f1_w2"], p["f1_b2"] = _conv_bn(keys[5], hf, hf)
    p["f1_w3"], p["f1_b3"] = _conv(keys[6], hf, 3)
    # folding2: Conv1d(latent+3,hf) BN ReLU Conv1d(hf,hf) BN ReLU Conv1d(hf,3)
    w, b = _conv_bn(keys[7], 3 + latent, hf)
    p["f2_wf"], p["f2_wg"], p["f2_b1"] = w[:3], w[3:], b
    p["f2_w2"], p["f2_b2"] = _conv_bn(keys[8], hf, hf)
    p["f2_w3"], p["f2_b3"] = _conv(keys[9], hf, 3)
    # folding_seed grid, matching the torch linspace/expand construction
    g = int(num_pred ** 0.5 + 0.5)
    assert g * g == num_pred
    lin = jnp.linspace(-0.5, 0.5, g, dtype=F32)
    a = jnp.tile(lin[None, :], (g, 1)).reshape(-1)    # lin[i % g]
    bb = jnp.tile(lin[:, None], (1, g)).reshape(-1)   # lin[i // g]
    p["seed"] = jnp.stack([a, bb], axis=-1)           # (num_pred, 2)
    return p


# --------------------------------------------------------------------------
# Pure-JAX reference (same folded params, original unfused computation order,
# bf16-matmul / f32-accumulate like the kernels)
# --------------------------------------------------------------------------
def ref_forward(x, p):
    def bdot(eq, a, b):
        return jnp.einsum(eq, a.astype(BF16), b.astype(BF16),
                          preferred_element_type=F32)

    h = jnp.maximum(bdot("bnc,cd->bnd", x, p["e1_w1"]) + p["e1_b1"], 0.0)
    feat = bdot("bnd,de->bne", h, p["e1_w2"]) + p["e1_b2"]
    g1 = jnp.max(feat, axis=1, keepdims=True)
    g1t = bdot("bod,de->boe", g1, p["e2_wg"]) + p["e2_b1"]
    h = jnp.maximum(bdot("bnd,de->bne", feat, p["e2_wl"]) + g1t, 0.0)
    z = bdot("bnd,de->bne", h, p["e2_w2"]) + p["e2_b2"]
    g2 = jnp.max(z, axis=1, keepdims=True)                       # (B,1,latent)

    gb1 = bdot("bol,lh->boh", g2, p["f1_wg"]) + p["f1_b1"]
    gb2 = bdot("bol,lh->boh", g2, p["f2_wg"]) + p["f2_b1"]

    s1 = bdot("pc,ch->ph", p["seed"], p["f1_ws"])
    h = jnp.maximum(s1[None] + gb1, 0.0)
    h = jnp.maximum(bdot("bph,hk->bpk", h, p["f1_w2"]) + p["f1_b2"], 0.0)
    fd1 = bdot("bph,hk->bpk", h, p["f1_w3"]) + p["f1_b3"]
    h = jnp.maximum(bdot("bpc,ch->bph", fd1, p["f2_wf"]) + gb2, 0.0)
    h = jnp.maximum(bdot("bph,hk->bpk", h, p["f2_w2"]) + p["f2_b2"], 0.0)
    return bdot("bph,hk->bpk", h, p["f2_w3"]) + p["f2_b3"]      # (B,num_pred,3)


# --------------------------------------------------------------------------
if __name__ == "__main__":
    # Small shapes consistent with the module (scaled-down FoldingNet):
    #   B=2 point clouds, N=500 input points (pads to 512 with tn=256),
    #   num_pred=900 (30x30 folding grid, pads to 1024 with tp=256),
    #   first_conv 3->16->32, second_conv 64->64->latent(64), folding hidden 64.
    B, N = 2, 500
    c1, c2, h2, latent, hf = 16, 32, 64, 64, 64
    num_pred = 900

    key = jax.random.PRNGKey(0)
    kp, kx = jax.random.split(key)
    params = init_params(kp, c1=c1, c2=c2, h2=h2, latent=latent, hf=hf,
                         num_pred=num_pred)
    x = jax.random.normal(kx, (B, N, 3), F32)        # (B, N, 3), like PyTorch

    fwd = jax.jit(foldingnet_forward)
    out = jax.block_until_ready(fwd(x, params))
    assert out.shape == (B, num_pred, 3), out.shape

    ref = ref_forward(x, params)
    err = float(jnp.max(jnp.abs(out - ref)))
    assert jnp.allclose(out, ref, atol=5e-3, rtol=5e-3), err

    print("KERNEL_OK")
</pallas_src>

<mosaic_0001>
module attributes {stable_mosaic.version = 11 : i64} {
  func.func @fold_kernel(%arg0: i32, %arg1: i32, %arg2: memref<256x64xbf16, #tpu.memory_space<vmem>>, %arg3: memref<1x1x64xf32, #tpu.memory_space<vmem>>, %arg4: memref<64x64xbf16, #tpu.memory_space<vmem>>, %arg5: memref<1x64xf32, #tpu.memory_space<vmem>>, %arg6: memref<64x64xbf16, #tpu.memory_space<vmem>>, %arg7: memref<1x64xf32, #tpu.memory_space<vmem>>, %arg8: memref<64x64xbf16, #tpu.memory_space<vmem>>, %arg9: memref<1x64xf32, #tpu.memory_space<vmem>>, %arg10: memref<64x64xbf16, #tpu.memory_space<vmem>>, %arg11: memref<64x64xbf16, #tpu.memory_space<vmem>>, %arg12: memref<1x64xf32, #tpu.memory_space<vmem>>, %arg13: memref<64x3xbf16, #tpu.memory_space<vmem>>, %arg14: memref<1x3xf32, #tpu.memory_space<vmem>>, %arg15: memref<1x256x3xf32, #tpu.memory_space<vmem>>, %arg16: memref<1x64xf32, #tpu.memory_space<vmem>>, %arg17: memref<1x64xf32, #tpu.memory_space<vmem>>) attributes {dimension_semantics = [#tpu.dimension_semantics<parallel>, #tpu.dimension_semantics<arbitrary>], iteration_bounds = array<i64: 2, 4>, scalar_prefetch = 0 : i64, scratch_operands = 2 : i64, tpu.core_type = #tpu.core_type<tc>, window_params = [{transform_indices = @transform_0, window_bounds = array<i64: 256, 64>}, {transform_indices = @transform_1, window_bounds = array<i64: 1, 1, 64>}, {pipeline_mode = #tpu.pipeline_mode<synchronous>, transform_indices = @transform_2, window_bounds = array<i64: 64, 64>}, {pipeline_mode = #tpu.pipeline_mode<synchronous>, transform_indices = @transform_3, window_bounds = array<i64: 1, 64>}, {pipeline_mode = #tpu.pipeline_mode<synchronous>, transform_indices = @transform_4, window_bounds = array<i64: 64, 64>}, {pipeline_mode = #tpu.pipeline_mode<synchronous>, transform_indices = @transform_5, window_bounds = array<i64: 1, 64>}, {pipeline_mode = #tpu.pipeline_mode<synchronous>, transform_indices = @transform_6, window_bounds = array<i64: 64, 64>}, {pipeline_mode = #tpu.pipeline_mode<synchronous>, transform_indices = @transform_7, window_bounds = array<i64: 1, 64>}, {pipeline_mode = #tpu.pipeline_mode<synchronous>, transform_indices = @transform_8, window_bounds = array<i64: 64, 64>}, {pipeline_mode = #tpu.pipeline_mode<synchronous>, transform_indices = @transform_9, window_bounds = array<i64: 64, 64>}, {pipeline_mode = #tpu.pipeline_mode<synchronous>, transform_indices = @transform_10, window_bounds = array<i64: 1, 64>}, {pipeline_mode = #tpu.pipeline_mode<synchronous>, transform_indices = @transform_11, window_bounds = array<i64: 64, 3>}, {pipeline_mode = #tpu.pipeline_mode<synchronous>, transform_indices = @transform_12, window_bounds = array<i64: 1, 3>}, {transform_indices = @transform_13, window_bounds = array<i64: 1, 256, 3>}]} {
    %c0_i32 = arith.constant 0 : i32
    %0 = arith.cmpi eq, %arg1, %c0_i32 : i32
    %1 = arith.extui %0 : i1 to i32
    %c0_i32_0 = arith.constant 0 : i32
    %2 = arith.cmpi ne, %1, %c0_i32_0 : i32
    scf.if %2 {
      %c0_30 = arith.constant 0 : index
      %c0_31 = arith.constant 0 : index
      %c0_32 = arith.constant 0 : index
      %43 = vector.load %arg3[%c0_30, %c0_31, %c0_32] : memref<1x1x64xf32, #tpu.memory_space<vmem>>, vector<1x1x64xf32>
      %44 = vector.shape_cast %43 : vector<1x1x64xf32> to vector<1x64xf32>
      %45 = arith.truncf %44 : vector<1x64xf32> to vector<1x64xbf16>
      %c0_33 = arith.constant 0 : index
      %c0_34 = arith.constant 0 : index
      %46 = vector.load %arg4[%c0_33, %c0_34] : memref<64x64xbf16, #tpu.memory_space<vmem>>, vector<64x64xbf16>
      %cst_35 = arith.constant dense<0.000000e+00> : vector<1x64xf32>
      %47 = tpu.matmul %45, %46, %cst_35 {dimension_numbers = #tpu.dot_dimension_numbers<[1], [0], [0], [1], [0, 0, 1, 1], [], []>} : vector<1x64xbf16>, vector<64x64xbf16>, vector<1x64xf32> -> vector<1x64xf32>
      %c0_36 = arith.constant 0 : index
      %c0_37 = arith.constant 0 : index
      %48 = vector.load %arg5[%c0_36, %c0_37] : memref<1x64xf32, #tpu.memory_space<vmem>>, vector<1x64xf32>
      %49 = arith.addf %47, %48 : vector<1x64xf32>
      %c0_38 = arith.constant 0 : index
      %c0_39 = arith.constant 0 : index
      %50 = vector.load %arg16[%c0_38, %c0_39] : memref<1x64xf32, #tpu.memory_space<vmem>>, vector<1x64xf32>
      tpu.vector_store %arg16[%c0_38, %c0_39], %49 {strides = array<i32>} : memref<1x64xf32, #tpu.memory_space<vmem>>, vector<1x64xf32>,
      %c0_40 = arith.constant 0 : index
      %c0_41 = arith.constant 0 : index
      %51 = vector.load %arg6[%c0_40, %c0_41] : memref<64x64xbf16, #tpu.memory_space<vmem>>, vector<64x64xbf16>
      %cst_42 = arith.constant dense<0.000000e+00> : vector<1x64xf32>
      %52 = tpu.matmul %45, %51, %cst_42 {dimension_numbers = #tpu.dot_dimension_numbers<[1], [0], [0], [1], [0, 0, 1, 1], [], []>} : vector<1x64xbf16>, vector<64x64xbf16>, vector<1x64xf32> -> vector<1x64xf32>
      %c0_43 = arith.constant 0 : index
      %c0_44 = arith.constant 0 : index
      %53 = vector.load %arg7[%c0_43, %c0_44] : memref<1x64xf32, #tpu.memory_space<vmem>>, vector<1x64xf32>
      %54 = arith.addf %52, %53 : vector<1x64xf32>
      %c0_45 = arith.constant 0 : index
      %c0_46 = arith.constant 0 : index
      %55 = vector.load %arg17[%c0_45, %c0_46] : memref<1x64xf32, #tpu.memory_space<vmem>>, vector<1x64xf32>
      tpu.vector_store %arg17[%c0_45, %c0_46], %54 {strides = array<i32>} : memref<1x64xf32, #tpu.memory_space<vmem>>, vector<1x64xf32>,
    } else {
    }
    %c0 = arith.constant 0 : index
    %c0_1 = arith.constant 0 : index
    %3 = vector.load %arg2[%c0, %c0_1] : memref<256x64xbf16, #tpu.memory_space<vmem>>, vector<256x64xbf16>
    %4 = arith.extf %3 : vector<256x64xbf16> to vector<256x64xf32>
    %c0_2 = arith.constant 0 : index
    %c0_3 = arith.constant 0 : index
    %5 = vector.load %arg16[%c0_2, %c0_3] : memref<1x64xf32, #tpu.memory_space<vmem>>, vector<1x64xf32>
    %6 = vector.broadcast %5 : vector<1x64xf32> to vector<256x64xf32>
    %7 = arith.addf %4, %6 : vector<256x64xf32>
    %cst = arith.constant 0.000000e+00 : f32
    %8 = vector.broadcast %cst : f32 to vector<256x64xf32>
    %9 = arith.maximumf %7, %8 : vector<256x64xf32>
    %10 = arith.truncf %9 : vector<256x64xf32> to vector<256x64xbf16>
    %c0_4 = arith.constant 0 : index
    %c0_5 = arith.constant 0 : index
    %11 = vector.load %arg8[%c0_4, %c0_5] : memref<64x64xbf16, #tpu.memory_space<vmem>>, vector<64x64xbf16>
    %cst_6 = arith.constant dense<0.000000e+00> : vector<256x64xf32>
    %12 = tpu.matmul %10, %11, %cst_6 {dimension_numbers = #tpu.dot_dimension_numbers<[1], [0], [0], [1], [0, 0, 1, 1], [], []>} : vector<256x64xbf16>, vector<64x64xbf16>, vector<256x64xf32> -> vector<256x64xf32>
    %c0_7 = arith.constant 0 : index
    %c0_8 = arith.constant 0 : index
    %13 = vector.load %arg9[%c0_7, %c0_8] : memref<1x64xf32, #tpu.memory_space<vmem>>, vector<1x64xf32>
    %14 = vector.broadcast %13 : vector<1x64xf32> to vector<256x64xf32>
    %15 = arith.addf %12, %14 : vector<256x64xf32>
    %cst_9 = arith.constant 0.000000e+00 : f32
    %16 = vector.broadcast %cst_9 : f32 to vector<256x64xf32>
    %17 = arith.maximumf %15, %16 : vector<256x64xf32>
    %18 = arith.truncf %17 : vector<256x64xf32> to vector<256x64xbf16>
    %c0_10 = arith.constant 0 : index
    %c0_11 = arith.constant 0 : index
    %19 = vector.load %arg10[%c0_10, %c0_11] : memref<64x64xbf16, #tpu.memory_space<vmem>>, vector<64x64xbf16>
    %cst_12 = arith.constant dense<0.000000e+00> : vector<256x64xf32>
    %20 = tpu.matmul %18, %19, %cst_12 {dimension_numbers = #tpu.dot_dimension_numbers<[1], [0], [0], [1], [0, 0, 1, 1], [], []>} : vector<256x64xbf16>, vector<64x64xbf16>, vector<256x64xf32> -> vector<256x64xf32>
    %c0_13 = arith.constant 0 : index
    %c0_14 = arith.constant 0 : index
    %21 = vector.load %arg17[%c0_13, %c0_14] : memref<1x64xf32, #tpu.memory_space<vmem>>, vector<1x64xf32>
    %22 = vector.broadcast %21 : vector<1x64xf32> to vector<256x64xf32>
    %23 = arith.addf %20, %22 : vector<256x64xf32>
    %cst_15 = arith.constant 0.000000e+00 : f32
    %24 = vector.broadcast %cst_15 : f32 to vector<256x64xf32>
    %25 = arith.maximumf %23, %24 : vector<256x64xf32>
    %26 = arith.truncf %25 : vector<256x64xf32> to vector<256x64xbf16>
    %c0_16 = arith.constant 0 : index
    %c0_17 = arith.constant 0 : index
    %27 = vector.load %arg11[%c0_16, %c0_17] : memref<64x64xbf16, #tpu.memory_space<vmem>>, vector<64x64xbf16>
    %cst_18 = arith.constant dense<0.000000e+00> : vector<256x64xf32>
    %28 = tpu.matmul %26, %27, %cst_18 {dimension_numbers = #tpu.dot_dimension_numbers<[1], [0], [0], [1], [0, 0, 1, 1], [], []>} : vector<256x64xbf16>, vector<64x64xbf16>, vector<256x64xf32> -> vector<256x64xf32>
    %c0_19 = arith.constant 0 : index
    %c0_20 = arith.constant 0 : index
    %29 = vector.load %arg12[%c0_19, %c0_20] : memref<1x64xf32, #tpu.memory_space<vmem>>, vector<1x64xf32>
    %30 = vector.broadcast %29 : vector<1x64xf32> to vector<256x64xf32>
    %31 = arith.addf %28, %30 : vector<256x64xf32>
    %cst_21 = arith.constant 0.000000e+00 : f32
    %32 = vector.broadcast %cst_21 : f32 to vector<256x64xf32>
    %33 = arith.maximumf %31, %32 : vector<256x64xf32>
    %34 = arith.truncf %33 : vector<256x64xf32> to vector<256x64xbf16>
    %c0_22 = arith.constant 0 : index
    %c0_23 = arith.constant 0 : index
    %35 = vector.load %arg13[%c0_22, %c0_23] : memref<64x3xbf16, #tpu.memory_space<vmem>>, vector<64x3xbf16>
    %cst_24 = arith.constant dense<0.000000e+00> : vector<256x3xf32>
    %36 = tpu.matmul %34, %35, %cst_24 {dimension_numbers = #tpu.dot_dimension_numbers<[1], [0], [0], [1], [0, 0, 1, 1], [], []>} : vector<256x64xbf16>, vector<64x3xbf16>, vector<256x3xf32> -> vector<256x3xf32>
    %c0_25 = arith.constant 0 : index
    %c0_26 = arith.constant 0 : index
    %37 = vector.load %arg14[%c0_25, %c0_26] : memref<1x3xf32, #tpu.memory_space<vmem>>, vector<1x3xf32>
    %38 = vector.broadcast %37 : vector<1x3xf32> to vector<256x3xf32>
    %39 = arith.addf %36, %38 : vector<256x3xf32>
    %c0_27 = arith.constant 0 : index
    %c0_28 = arith.constant 0 : index
    %c0_29 = arith.constant 0 : index
    %40 = vector.load %arg15[%c0_27, %c0_28, %c0_29] : memref<1x256x3xf32, #tpu.memory_space<vmem>>, vector<1x256x3xf32>
    %41 = vector.shape_cast %40 : vector<1x256x3xf32> to vector<256x3xf32>
    %42 = vector.shape_cast %39 : vector<256x3xf32> to vector<1x256x3xf32>
    tpu.vector_store %arg15[%c0_27, %c0_28, %c0_29], %42 {strides = array<i32>} : memref<1x256x3xf32, #tpu.memory_space<vmem>>, vector<1x256x3xf32>,
    return
  }
  func.func @transform_0(%arg0: i32, %arg1: i32) -> (i32, i32) {
    %c0_i32 = arith.constant 0 : i32
    %c0_i32_0 = arith.constant 0 : i32
    return %arg1, %c0_i32 : i32, i32
  }
  func.func @transform_1(%arg0: i32, %arg1: i32) -> (i32, i32, i32) {
    %c0_i32 = arith.constant 0 : i32
    %c0_i32_0 = arith.constant 0 : i32
    %c0_i32_1 = arith.constant 0 : i32
    return %arg0, %c0_i32, %c0_i32_0 : i32, i32, i32
  }
  func.func @transform_2(%arg0: i32, %arg1: i32) -> (i32, i32) {
    %c0_i32 = arith.constant 0 : i32
    %c0_i32_0 = arith.constant 0 : i32
    %c0_i32_1 = arith.constant 0 : i32
    return %c0_i32, %c0_i32_0 : i32, i32
  }
  func.func @transform_3(%arg0: i32, %arg1: i32) -> (i32, i32) {
    %c0_i32 = arith.constant 0 : i32
    %c0_i32_0 = arith.constant 0 : i32
    %c0_i32_1 = arith.constant 0 : i32
    return %c0_i32, %c0_i32_0 : i32, i32
  }
  func.func @transform_4(%arg0: i32, %arg1: i32) -> (i32, i32) {
    %c0_i32 = arith.constant 0 : i32
    %c0_i32_0 = arith.constant 0 : i32
    %c0_i32_1 = arith.constant 0 : i32
    return %c0_i32, %c0_i32_0 : i32, i32
  }
  func.func @transform_5(%arg0: i32, %arg1: i32) -> (i32, i32) {
    %c0_i32 = arith.constant 0 : i32
    %c0_i32_0 = arith.constant 0 : i32
    %c0_i32_1 = arith.constant 0 : i32
    return %c0_i32, %c0_i32_0 : i32, i32
  }
  func.func @transform_6(%arg0: i32, %arg1: i32) -> (i32, i32) {
    %c0_i32 = arith.constant 0 : i32
    %c0_i32_0 = arith.constant 0 : i32
    %c0_i32_1 = arith.constant 0 : i32
    return %c0_i32, %c0_i32_0 : i32, i32
  }
  func.func @transform_7(%arg0: i32, %arg1: i32) -> (i32, i32) {
    %c0_i32 = arith.constant 0 : i32
    %c0_i32_0 = arith.constant 0 : i32
    %c0_i32_1 = arith.constant 0 : i32
    return %c0_i32, %c0_i32_0 : i32, i32
  }
  func.func @transform_8(%arg0: i32, %arg1: i32) -> (i32, i32) {
    %c0_i32 = arith.constant 0 : i32
    %c0_i32_0 = arith.constant 0 : i32
    %c0_i32_1 = arith.constant 0 : i32
    return %c0_i32, %c0_i32_0 : i32, i32
  }
  func.func @transform_9(%arg0: i32, %arg1: i32) -> (i32, i32) {
    %c0_i32 = arith.constant 0 : i32
    %c0_i32_0 = arith.constant 0 : i32
    %c0_i32_1 = arith.constant 0 : i32
    return %c0_i32, %c0_i32_0 : i32, i32
  }
  func.func @transform_10(%arg0: i32, %arg1: i32) -> (i32, i32) {
    %c0_i32 = arith.constant 0 : i32
    %c0_i32_0 = arith.constant 0 : i32
    %c0_i32_1 = arith.constant 0 : i32
    return %c0_i32, %c0_i32_0 : i32, i32
  }
  func.func @transform_11(%arg0: i32, %arg1: i32) -> (i32, i32) {
    %c0_i32 = arith.constant 0 : i32
    %c0_i32_0 = arith.constant 0 : i32
    %c0_i32_1 = arith.constant 0 : i32
    return %c0_i32, %c0_i32_0 : i32, i32
  }
  func.func @transform_12(%arg0: i32, %arg1: i32) -> (i32, i32) {
    %c0_i32 = arith.constant 0 : i32
    %c0_i32_0 = arith.constant 0 : i32
    %c0_i32_1 = arith.constant 0 : i32
    return %c0_i32, %c0_i32_0 : i32, i32
  }
  func.func @transform_13(%arg0: i32, %arg1: i32) -> (i32, i32, i32) {
    %c0_i32 = arith.constant 0 : i32
    %c0_i32_0 = arith.constant 0 : i32
    return %arg0, %arg1, %c0_i32 : i32, i32, i32
  }
}

module attributes {stable_mosaic.version = 11 : i64} {
  func.func @encoder_kernel(%arg0: i32, %arg1: i32, %arg2: i32, %arg3: memref<1x256x3xbf16, #tpu.memory_space<vmem>>, %arg4: memref<3x16xbf16, #tpu.memory_space<vmem>>, %arg5: memref<1x16xf32, #tpu.memory_space<vmem>>, %arg6: memref<16x32xbf16, #tpu.memory_space<vmem>>, %arg7: memref<1x32xf32, #tpu.memory_space<vmem>>, %arg8: memref<32x64xbf16, #tpu.memory_space<vmem>>, %arg9: memref<32x64xbf16, #tpu.memory_space<vmem>>, %arg10: memref<1x64xf32, #tpu.memory_space<vmem>>, %arg11: memref<64x64xbf16, #tpu.memory_space<vmem>>, %arg12: memref<1x64xf32, #tpu.memory_space<vmem>>, %arg13: memref<1x1x64xf32, #tpu.memory_space<vmem>>, %arg14: memref<2x256x32xbf16, #tpu.memory_space<vmem>>, %arg15: memref<1x32xf32, #tpu.memory_space<vmem>>, %arg16: memref<1x64xf32, #tpu.memory_space<vmem>>, %arg17: memref<1x64xf32, #tpu.memory_space<vmem>>) attributes {dimension_semantics = [#tpu.dimension_semantics<parallel>, #tpu.dimension_semantics<arbitrary>, #tpu.dimension_semantics<arbitrary>], iteration_bounds = array<i64: 2, 2, 2>, scalar_prefetch = 0 : i64, scratch_operands = 4 : i64, tpu.core_type = #tpu.core_type<tc>, window_params = [{transform_indices = @transform_0, window_bounds = array<i64: 1, 256, 3>}, {pipeline_mode = #tpu.pipeline_mode<synchronous>, transform_indices = @transform_1, window_bounds = array<i64: 3, 16>}, {pipeline_mode = #tpu.pipeline_mode<synchronous>, transform_indices = @transform_2, window_bounds = array<i64: 1, 16>}, {pipeline_mode = #tpu.pipeline_mode<synchronous>, transform_indices = @transform_3, window_bounds = array<i64: 16, 32>}, {pipeline_mode = #tpu.pipeline_mode<synchronous>, transform_indices = @transform_4, window_bounds = array<i64: 1, 32>}, {pipeline_mode = #tpu.pipeline_mode<synchronous>, transform_indices = @transform_5, window_bounds = array<i64: 32, 64>}, {pipeline_mode = #tpu.pipeline_mode<synchronous>, transform_indices = @transform_6, window_bounds = array<i64: 32, 64>}, {pipeline_mode = #tpu.pipeline_mode<synchronous>, transform_indices = @transform_7, window_bounds = array<i64: 1, 64>}, {pipeline_mode = #tpu.pipeline_mode<synchronous>, transform_indices = @transform_8, window_bounds = array<i64: 64, 64>}, {pipeline_mode = #tpu.pipeline_mode<synchronous>, transform_indices = @transform_9, window_bounds = array<i64: 1, 64>}, {transform_indices = @transform_10, window_bounds = array<i64: 1, 1, 64>}]} {
    %c0_i32 = arith.constant 0 : i32
    %0 = arith.cmpi eq, %arg1, %c0_i32 : i32
    %1 = arith.extui %0 : i1 to i32
    %c0_i32_0 = arith.constant 0 : i32
    %2 = arith.cmpi ne, %1, %c0_i32_0 : i32
    scf.if %2 {
      %c0_i32_2 = arith.constant 0 : i32
      %6 = arith.cmpi eq, %arg2, %c0_i32_2 : i32
      %7 = arith.extui %6 : i1 to i32
      %c0_i32_3 = arith.constant 0 : i32
      %8 = arith.cmpi ne, %7, %c0_i32_3 : i32
      scf.if %8 {
        %cst_23 = arith.constant 0xFF800000 : f32
        %34 = vector.broadcast %cst_23 : f32 to vector<1x32xf32>
        %c0_24 = arith.constant 0 : index
        %c0_25 = arith.constant 0 : index
        %35 = vector.load %arg15[%c0_24, %c0_25] : memref<1x32xf32, #tpu.memory_space<vmem>>, vector<1x32xf32>
        tpu.vector_store %arg15[%c0_24, %c0_25], %34 {strides = array<i32>} : memref<1x32xf32, #tpu.memory_space<vmem>>, vector<1x32xf32>,
      } else {
      }
      %c0 = arith.constant 0 : index
      %c0_4 = arith.constant 0 : index
      %c0_5 = arith.constant 0 : index
      %9 = vector.load %arg3[%c0, %c0_4, %c0_5] : memref<1x256x3xbf16, #tpu.memory_space<vmem>>, vector<1x256x3xbf16>
      %10 = vector.shape_cast %9 : vector<1x256x3xbf16> to vector<256x3xbf16>
      %c0_6 = arith.constant 0 : index
      %c0_7 = arith.constant 0 : index
      %11 = vector.load %arg4[%c0_6, %c0_7] : memref<3x16xbf16, #tpu.memory_space<vmem>>, vector<3x16xbf16>
      %cst = arith.constant dense<0.000000e+00> : vector<256x16xf32>
      %12 = tpu.matmul %10, %11, %cst {dimension_numbers = #tpu.dot_dimension_numbers<[1], [0], [0], [1], [0, 0, 1, 1], [], []>} : vector<256x3xbf16>, vector<3x16xbf16>, vector<256x16xf32> -> vector<256x16xf32>
      %c0_8 = arith.constant 0 : index
      %c0_9 = arith.constant 0 : index
      %13 = vector.load %arg5[%c0_8, %c0_9] : memref<1x16xf32, #tpu.memory_space<vmem>>, vector<1x16xf32>
      %14 = vector.broadcast %13 : vector<1x16xf32> to vector<256x16xf32>
      %15 = arith.addf %12, %14 : vector<256x16xf32>
      %cst_10 = arith.constant 0.000000e+00 : f32
      %16 = vector.broadcast %cst_10 : f32 to vector<256x16xf32>
      %17 = arith.maximumf %15, %16 : vector<256x16xf32>
      %18 = arith.truncf %17 : vector<256x16xf32> to vector<256x16xbf16>
      %c0_11 = arith.constant 0 : index
      %c0_12 = arith.constant 0 : index
      %19 = vector.load %arg6[%c0_11, %c0_12] : memref<16x32xbf16, #tpu.memory_space<vmem>>, vector<16x32xbf16>
      %cst_13 = arith.constant dense<0.000000e+00> : vector<256x32xf32>
      %20 = tpu.matmul %18, %19, %cst_13 {dimension_numbers = #tpu.dot_dimension_numbers<[1], [0], [0], [1], [0, 0, 1, 1], [], []>} : vector<256x16xbf16>, vector<16x32xbf16>, vector<256x32xf32> -> vector<256x32xf32>
      %c0_14 = arith.constant 0 : index
      %c0_15 = arith.constant 0 : index
      %21 = vector.load %arg7[%c0_14, %c0_15] : memref<1x32xf32, #tpu.memory_space<vmem>>, vector<1x32xf32>
      %22 = vector.broadcast %21 : vector<1x32xf32> to vector<256x32xf32>
      %23 = arith.addf %20, %22 : vector<256x32xf32>
      %c0_16 = arith.constant 0 : index
      %c0_17 = arith.constant 0 : index
      %24 = vector.load %arg15[%c0_16, %c0_17] : memref<1x32xf32, #tpu.memory_space<vmem>>, vector<1x32xf32>
      %cst_18 = arith.constant dense<0xFF800000> : vector<32xf32>
      %25 = vector.multi_reduction <maximumf>, %23, %cst_18 [0] : vector<256x32xf32> to vector<32xf32>
      %26 = vector.shape_cast %25 : vector<32xf32> to vector<1x32xf32>
      %27 = arith.maximumf %24, %26 : vector<1x32xf32>
      %c0_19 = arith.constant 0 : index
      %c0_20 = arith.constant 0 : index
      %28 = vector.load %arg15[%c0_19, %c0_20] : memref<1x32xf32, #tpu.memory_space<vmem>>, vector<1x32xf32>
      tpu.vector_store %arg15[%c0_19, %c0_20], %27 {strides = array<i32>} : memref<1x32xf32, #tpu.memory_space<vmem>>, vector<1x32xf32>,
      %29 = arith.truncf %23 : vector<256x32xf32> to vector<256x32xbf16>
      %30 = arith.index_cast %arg2 : i32 to index
      %c0_21 = arith.constant 0 : index
      %c0_22 = arith.constant 0 : index
      %31 = vector.load %arg14[%30, %c0_21, %c0_22] : memref<2x256x32xbf16, #tpu.memory_space<vmem>>, vector<1x256x32xbf16>
      %32 = vector.shape_cast %31 : vector<1x256x32xbf16> to vector<256x32xbf16>
      %33 = vector.shape_cast %29 : vector<256x32xbf16> to vector<1x256x32xbf16>
      tpu.vector_store %arg14[%30, %c0_21, %c0_22], %33 {strides = array<i32>} : memref<2x256x32xbf16, #tpu.memory_space<vmem>>, vector<1x256x32xbf16>,
    } else {
    }
    %c1_i32 = arith.constant 1 : i32
    %3 = arith.cmpi eq, %arg1, %c1_i32 : i32
    %4 = arith.extui %3 : i1 to i32
    %c0_i32_1 = arith.constant 0 : i32
    %5 = arith.cmpi ne, %4, %c0_i32_1 : i32
    scf.if %5 {
      %c0_i32_2 = arith.constant 0 : i32
      %6 = arith.cmpi eq, %arg2, %c0_i32_2 : i32
      %7 = arith.extui %6 : i1 to i32
      %c0_i32_3 = arith.constant 0 : i32
      %8 = arith.cmpi ne, %7, %c0_i32_3 : i32
      scf.if %8 {
        %cst_22 = arith.constant 0xFF800000 : f32
        %33 = vector.broadcast %cst_22 : f32 to vector<1x64xf32>
        %c0_23 = arith.constant 0 : index
        %c0_24 = arith.constant 0 : index
        %34 = vector.load %arg17[%c0_23, %c0_24] : memref<1x64xf32, #tpu.memory_space<vmem>>, vector<1x64xf32>
        tpu.vector_store %arg17[%c0_23, %c0_24], %33 {strides = array<i32>} : memref<1x64xf32, #tpu.memory_space<vmem>>, vector<1x64xf32>,
        %c0_25 = arith.constant 0 : index
        %c0_26 = arith.constant 0 : index
        %35 = vector.load %arg15[%c0_25, %c0_26] : memref<1x32xf32, #tpu.memory_space<vmem>>, vector<1x32xf32>
        %36 = arith.truncf %35 : vector<1x32xf32> to vector<1x32xbf16>
        %c0_27 = arith.constant 0 : index
        %c0_28 = arith.constant 0 : index
        %37 = vector.load %arg9[%c0_27, %c0_28] : memref<32x64xbf16, #tpu.memory_space<vmem>>, vector<32x64xbf16>
        %cst_29 = arith.constant dense<0.000000e+00> : vector<1x64xf32>
        %38 = tpu.matmul %36, %37, %cst_29 {dimension_numbers = #tpu.dot_dimension_numbers<[1], [0], [0], [1], [0, 0, 1, 1], [], []>} : vector<1x32xbf16>, vector<32x64xbf16>, vector<1x64xf32> -> vector<1x64xf32>
        %c0_30 = arith.constant 0 : index
        %c0_31 = arith.constant 0 : index
        %39 = vector.load %arg10[%c0_30, %c0_31] : memref<1x64xf32, #tpu.memory_space<vmem>>, vector<1x64xf32>
        %40 = arith.addf %38, %39 : vector<1x64xf32>
        %c0_32 = arith.constant 0 : index
        %c0_33 = arith.constant 0 : index
        %41 = vector.load %arg16[%c0_32, %c0_33] : memref<1x64xf32, #tpu.memory_space<vmem>>, vector<1x64xf32>
        tpu.vector_store %arg16[%c0_32, %c0_33], %40 {strides = array<i32>} : memref<1x64xf32, #tpu.memory_space<vmem>>, vector<1x64xf32>,
      } else {
      }
      %9 = arith.index_cast %arg2 : i32 to index
      %c0 = arith.constant 0 : index
      %c0_4 = arith.constant 0 : index
      %10 = vector.load %arg14[%9, %c0, %c0_4] : memref<2x256x32xbf16, #tpu.memory_space<vmem>>, vector<1x256x32xbf16>
      %11 = vector.shape_cast %10 : vector<1x256x32xbf16> to vector<256x32xbf16>
      %c0_5 = arith.constant 0 : index
      %c0_6 = arith.constant 0 : index
      %12 = vector.load %arg8[%c0_5, %c0_6] : memref<32x64xbf16, #tpu.memory_space<vmem>>, vector<32x64xbf16>
      %cst = arith.constant dense<0.000000e+00> : vector<256x64xf32>
      %13 = tpu.matmul %11, %12, %cst {dimension_numbers = #tpu.dot_dimension_numbers<[1], [0], [0], [1], [0, 0, 1, 1], [], []>} : vector<256x32xbf16>, vector<32x64xbf16>, vector<256x64xf32> -> vector<256x64xf32>
      %c0_7 = arith.constant 0 : index
      %c0_8 = arith.constant 0 : index
      %14 = vector.load %arg16[%c0_7, %c0_8] : memref<1x64xf32, #tpu.memory_space<vmem>>, vector<1x64xf32>
      %15 = vector.broadcast %14 : vector<1x64xf32> to vector<256x64xf32>
      %16 = arith.addf %13, %15 : vector<256x64xf32>
      %cst_9 = arith.constant 0.000000e+00 : f32
      %17 = vector.broadcast %cst_9 : f32 to vector<256x64xf32>
      %18 = arith.maximumf %16, %17 : vector<256x64xf32>
      %19 = arith.truncf %18 : vector<256x64xf32> to vector<256x64xbf16>
      %c0_10 = arith.constant 0 : index
      %c0_11 = arith.constant 0 : index
      %20 = vector.load %arg11[%c0_10, %c0_11] : memref<64x64xbf16, #tpu.memory_space<vmem>>, vector<64x64xbf16>
      %cst_12 = arith.constant dense<0.000000e+00> : vector<256x64xf32>
      %21 = tpu.matmul %19, %20, %cst_12 {dimension_numbers = #tpu.dot_dimension_numbers<[1], [0], [0], [1], [0, 0, 1, 1], [], []>} : vector<256x64xbf16>, vector<64x64xbf16>, vector<256x64xf32> -> vector<256x64xf32>
      %c0_13 = arith.constant 0 : index
      %c0_14 = arith.constant 0 : index
      %22 = vector.load %arg12[%c0_13, %c0_14] : memref<1x64xf32, #tpu.memory_space<vmem>>, vector<1x64xf32>
      %23 = vector.broadcast %22 : vector<1x64xf32> to vector<256x64xf32>
      %24 = arith.addf %21, %23 : vector<256x64xf32>
      %c0_15 = arith.constant 0 : index
      %c0_16 = arith.constant 0 : index
      %25 = vector.load %arg17[%c0_15, %c0_16] : memref<1x64xf32, #tpu.memory_space<vmem>>, vector<1x64xf32>
      %cst_17 = arith.constant dense<0xFF800000> : vector<64xf32>
      %26 = vector.multi_reduction <maximumf>, %24, %cst_17 [0] : vector<256x64xf32> to vector<64xf32>
      %27 = vector.shape_cast %26 : vector<64xf32> to vector<1x64xf32>
      %28 = arith.maximumf %25, %27 : vector<1x64xf32>
      %c0_18 = arith.constant 0 : index
      %c0_19 = arith.constant 0 : index
      %29 = vector.load %arg17[%c0_18, %c0_19] : memref<1x64xf32, #tpu.memory_space<vmem>>, vector<1x64xf32>
      tpu.vector_store %arg17[%c0_18, %c0_19], %28 {strides = array<i32>} : memref<1x64xf32, #tpu.memory_space<vmem>>, vector<1x64xf32>,
      %c1_i32_20 = arith.constant 1 : i32
      %30 = arith.cmpi eq, %arg2, %c1_i32_20 : i32
      %31 = arith.extui %30 : i1 to i32
      %c0_i32_21 = arith.constant 0 : i32
      %32 = arith.cmpi ne, %31, %c0_i32_21 : i32
      scf.if %32 {
        %c0_22 = arith.constant 0 : index
        %c0_23 = arith.constant 0 : index
        %33 = vector.load %arg17[%c0_22, %c0_23] : memref<1x64xf32, #tpu.memory_space<vmem>>, vector<1x64xf32>
        %c0_24 = arith.constant 0 : index
        %c0_25 = arith.constant 0 : index
        %c0_26 = arith.constant 0 : index
        %34 = vector.load %arg13[%c0_24, %c0_25, %c0_26] : memref<1x1x64xf32, #tpu.memory_space<vmem>>, vector<1x1x64xf32>
        %35 = vector.shape_cast %34 : vector<1x1x64xf32> to vector<1x64xf32>
        %36 = vector.shape_cast %33 : vector<1x64xf32> to vector<1x1x64xf32>
        tpu.vector_store %arg13[%c0_24, %c0_25, %c0_26], %36 {strides = array<i32>} : memref<1x1x64xf32, #tpu.memory_space<vmem>>, vector<1x1x64xf32>,
      } else {
      }
    } else {
    }
    return
  }
  func.func @transform_0(%arg0: i32, %arg1: i32, %arg2: i32) -> (i32, i32, i32) {
    %c1_i32 = arith.constant 1 : i32
    %0 = arith.subi %c1_i32, %arg1 : i32
    %1 = arith.muli %arg2, %0 : i32
    %c0_i32 = arith.constant 0 : i32
    %c0_i32_0 = arith.constant 0 : i32
    return %arg0, %1, %c0_i32 : i32, i32, i32
  }
  func.func @transform_1(%arg0: i32, %arg1: i32, %arg2: i32) -> (i32, i32) {
    %c0_i32 = arith.constant 0 : i32
    %c0_i32_0 = arith.constant 0 : i32
    %c0_i32_1 = arith.constant 0 : i32
    return %c0_i32, %c0_i32_0 : i32, i32
  }
  func.func @transform_2(%arg0: i32, %arg1: i32, %arg2: i32) -> (i32, i32) {
    %c0_i32 = arith.constant 0 : i32
    %c0_i32_0 = arith.constant 0 : i32
    %c0_i32_1 = arith.constant 0 : i32
    return %c0_i32, %c0_i32_0 : i32, i32
  }
  func.func @transform_3(%arg0: i32, %arg1: i32, %arg2: i32) -> (i32, i32) {
    %c0_i32 = arith.constant 0 : i32
    %c0_i32_0 = arith.constant 0 : i32
    %c0_i32_1 = arith.constant 0 : i32
    return %c0_i32, %c0_i32_0 : i32, i32
  }
  func.func @transform_4(%arg0: i32, %arg1: i32, %arg2: i32) -> (i32, i32) {
    %c0_i32 = arith.constant 0 : i32
    %c0_i32_0 = arith.constant 0 : i32
    %c0_i32_1 = arith.constant 0 : i32
    return %c0_i32, %c0_i32_0 : i32, i32
  }
  func.func @transform_5(%arg0: i32, %arg1: i32, %arg2: i32) -> (i32, i32) {
    %c0_i32 = arith.constant 0 : i32
    %c0_i32_0 = arith.constant 0 : i32
    %c0_i32_1 = arith.constant 0 : i32
    return %c0_i32, %c0_i32_0 : i32, i32
  }
  func.func @transform_6(%arg0: i32, %arg1: i32, %arg2: i32) -> (i32, i32) {
    %c0_i32 = arith.constant 0 : i32
    %c0_i32_0 = arith.constant 0 : i32
    %c0_i32_1 = arith.constant 0 : i32
    return %c0_i32, %c0_i32_0 : i32, i32
  }
  func.func @transform_7(%arg0: i32, %arg1: i32, %arg2: i32) -> (i32, i32) {
    %c0_i32 = arith.constant 0 : i32
    %c0_i32_0 = arith.constant 0 : i32
    %c0_i32_1 = arith.constant 0 : i32
    return %c0_i32, %c0_i32_0 : i32, i32
  }
  func.func @transform_8(%arg0: i32, %arg1: i32, %arg2: i32) -> (i32, i32) {
    %c0_i32 = arith.constant 0 : i32
    %c0_i32_0 = arith.constant 0 : i32
    %c0_i32_1 = arith.constant 0 : i32
    return %c0_i32, %c0_i32_0 : i32, i32
  }
  func.func @transform_9(%arg0: i32, %arg1: i32, %arg2: i32) -> (i32, i32) {
    %c0_i32 = arith.constant 0 : i32
    %c0_i32_0 = arith.constant 0 : i32
    %c0_i32_1 = arith.constant 0 : i32
    return %c0_i32, %c0_i32_0 : i32, i32
  }
  func.func @transform_10(%arg0: i32, %arg1: i32, %arg2: i32) -> (i32, i32, i32) {
    %c0_i32 = arith.constant 0 : i32
    %c0_i32_0 = arith.constant 0 : i32
    %c0_i32_1 = arith.constant 0 : i32
    return %arg0, %c0_i32, %c0_i32_0 : i32, i32, i32
  }
}

</mosaic_0001>

<llo_original>
// kernel: foldingnet_forward.2
$region0: #{foldingnet_forward.2}
  #allocation0 [shape = 'u32[]', space=smem, size = 0x4, offset = 0x4, fixed_abs, tag = 'smem constant byte address 0x4 - core index']
  #allocation1 [shape = 'u32[144,128]{1,0:T(1,128)}', space=vmem, size = 0x12000, scoped, tag = 'internal scratch']
  #allocation2 [shape = 'bf16[2,256,32]{2,1,0:T(16,128)(2,1)}', space=vmem, size = 0x20000, scoped, tag = 'scratch operand']
  #allocation3 [shape = 'f32[1,32]{1,0:T(1,128)}', space=vmem, size = 0x200, scoped, tag = 'scratch operand']
  #allocation4 [shape = 'f32[1,64]{1,0:T(1,128)}', space=vmem, size = 0x200, scoped, tag = 'scratch operand']
  #allocation5 [shape = 'f32[1,64]{1,0:T(1,128)}', space=vmem, size = 0x200, scoped, tag = 'scratch operand']
  %s0 = inlined_call_operand.vmem [shape: bf16[2,512,3], index: 0, kind: input, shape index: {}]
  %s1 = inlined_call_operand.vmem [shape: bf16[3,16], index: 1, kind: input, shape index: {}]
  %s2 = inlined_call_operand.vmem [shape: f32[1,16], index: 2, kind: input, shape index: {}]
  %s3 = inlined_call_operand.vmem [shape: bf16[16,32], index: 3, kind: input, shape index: {}]
  %s4 = inlined_call_operand.vmem [shape: f32[1,32], index: 4, kind: input, shape index: {}]
  %s5 = inlined_call_operand.vmem [shape: bf16[32,64], index: 5, kind: input, shape index: {}]
  %s6 = inlined_call_operand.vmem [shape: bf16[32,64], index: 6, kind: input, shape index: {}]
  %s7 = inlined_call_operand.vmem [shape: f32[1,64], index: 7, kind: input, shape index: {}]
  %s8 = inlined_call_operand.vmem [shape: bf16[64,64], index: 8, kind: input, shape index: {}]
  %s9 = inlined_call_operand.vmem [shape: f32[1,64], index: 9, kind: input, shape index: {}]
  %s10 = inlined_call_operand.vmem [shape: f32[2,1,64], index: 10, kind: output, shape index: {}]
  %s11 = sld [smem:[#allocation0]]
  $region93: #{foldingnet_forward.2} parent=0
    _
  %s13 = ssub.s32 1, %s11
  %s14 = scalar_select 0, %s13, %s11
  loop: start=0, step=1, limit=10
  $region2: #{foldingnet_forward.2} parent=0 // loop_pre_header
    _
  $region3: #{foldingnet_forward.2} parent=0 // loop_header
    %s16 = sphi 0, %s20
    %p17 = scmp.ge.s32.totalorder %s16, 10
    %s23 = sphi 0, %s42
    %s24 = sphi 0, %s38
    %s25 = sphi 0, %s34
    %s26 = sphi 0, %s23
    %s27 = sphi 0, %s24
    %s28 = sphi 0, %s25
    %s29 = sphi 0, %s26
    %s30 = sphi 0, %s27
    %s31 = sphi 0, %s28
    %s51 = sphi 0, %s53
    %s54 = sphi 0, %s51
    %s55 = sphi 0, %s54
    %s71 = sphi 0, %s55
    %s75 = sphi 0, %s75
    %s77 = sphi 0, %s75
    %s78 = sphi 0, %s77
    %s92 = sphi 0, %s78
    %s96 = sphi 0, %s96
    %s98 = sphi 0, %s96
    %s99 = sphi 0, %s98
    %s113 = sphi 0, %s99
    %s117 = sphi 0, %s117
    %s119 = sphi 0, %s117
    %s120 = sphi 0, %s119
    %s134 = sphi 0, %s120
    %s138 = sphi 0, %s138
    %s140 = sphi 0, %s138
    %s141 = sphi 0, %s140
    %s155 = sphi 0, %s141
    %s159 = sphi 0, %s159
    %s161 = sphi 0, %s159
    %s162 = sphi 0, %s161
    %s176 = sphi 0, %s162
    %s180 = sphi 0, %s180
    %s182 = sphi 0, %s180
    %s183 = sphi 0, %s182
    %s197 = sphi 0, %s183
    %s201 = sphi 0, %s201
    %s203 = sphi 0, %s201
    %s204 = sphi 0, %s203
    %s218 = sphi 0, %s204
    %s222 = sphi 0, %s222
    %s224 = sphi 0, %s222
    %s225 = sphi 0, %s224
    %s239 = sphi 0, %s225
    %s243 = sphi 0, %s243
    %s245 = sphi 0, %s243
    %s246 = sphi 0, %s245
    %s260 = sphi 0, %s246
    %s266 = sphi 0, %s268
    %s269 = sphi 0, %s266
    %s270 = sphi 0, %s269
    %s286 = sphi 0, %s270
  $region4: #{foldingnet_forward.2} parent=0 // loop_header_branch
    %19 = sbr.rel (%p17) target = $region8
  $region5: #{foldingnet_forward.2} parent=0 // loop_body
    %s21 = ssub.s32 %s16, 1
    %s22 = ssub.s32 %s16, 2
    %s32 = sadd.s32 1, %s25
    %p33 = scmp.ge.s32.totalorder %s32, 2
    %s34 = scalar_select %p33, 0, %s32
    %s35 = sadd.s32 1, %s24
    %s36 = scalar_select %p33, %s35, %s24
    %p37 = scmp.ge.s32.totalorder %s36, 2
    %s38 = scalar_select %p37, 0, %s36
    %s39 = sadd.s32 1, %s23
    %s40 = scalar_select %p37, %s39, %s23
    %p41 = scmp.ge.s32.totalorder %s40, 2
    %s42 = scalar_select %p41, 0, %s40
    %s43 = ssub.s32 1, %s24
    %s44 = smul.u32 %s25, %s43
    %s45 = ssub.s32 1, %s38
    %s46 = smul.u32 %s34, %s45
    %s47 = ssub.s32 %s23, %s42
    %s48 = ssub.s32 %s44, %s46
    %s49 = sor.u32 %s47, %s48
    %p50 = scmp.eq.s32.totalorder %s49, 0
    %s52 = sadd.s32 %s51, 1
    %s53 = scalar_select %p50, %s51, %s52
    %p56 = pneg %p50
    %p57 = scmp.eq.s32.totalorder %s16, 7
    %p58 = por %p56, %p57
    %p59 = scmp.ne.s32.totalorder %s51, %s54
    %p60 = scmp.eq.s32.totalorder %s16, 0
    %p61 = por %p59, %p60
    %p62 = scmp.ne.s32.totalorder %s51, %s54
    %p63 = scmp.eq.s32.totalorder %s21, 7
    %p64 = por %p62, %p63
    %p65 = scmp.ne.s32.totalorder %s54, %s55
    %p66 = scmp.eq.s32.totalorder %s21, 0
    %p67 = por %p65, %p66
    %p68 = scmp.ne.s32.totalorder %s54, %s55
    %p69 = scmp.eq.s32.totalorder %s22, 7
    %p70 = por %p68, %p69
    %p72 = scmp.ne.s32.totalorder %s55, %s71
    %p73 = scmp.eq.s32.totalorder %s22, 0
    %p74 = por %p72, %p73
    %s76 = sadd.s32 %s75, 1
    %p79 = scmp.eq.s32.totalorder %s16, 7
    %p80 = scmp.ne.s32.totalorder %s75, %s77
    %p81 = scmp.eq.s32.totalorder %s16, 0
    %p82 = por %p80, %p81
    %p83 = scmp.ne.s32.totalorder %s75, %s77
    %p84 = scmp.eq.s32.totalorder %s21, 7
    %p85 = por %p83, %p84
    %p86 = scmp.ne.s32.totalorder %s77, %s78
    %p87 = scmp.eq.s32.totalorder %s21, 0
    %p88 = por %p86, %p87
    %p89 = scmp.ne.s32.totalorder %s77, %s78
    %p90 = scmp.eq.s32.totalorder %s22, 7
    %p91 = por %p89, %p90
    %p93 = scmp.ne.s32.totalorder %s78, %s92
    %p94 = scmp.eq.s32.totalorder %s22, 0
    %p95 = por %p93, %p94
    %s97 = sadd.s32 %s96, 1
    %p100 = scmp.eq.s32.totalorder %s16, 7
    %p101 = scmp.ne.s32.totalorder %s96, %s98
    %p102 = scmp.eq.s32.totalorder %s16, 0
    %p103 = por %p101, %p102
    %p104 = scmp.ne.s32.totalorder %s96, %s98
    %p105 = scmp.eq.s32.totalorder %s21, 7
    %p106 = por %p104, %p105
    %p107 = scmp.ne.s32.totalorder %s98, %s99
    %p108 = scmp.eq.s32.totalorder %s21, 0
    %p109 = por %p107, %p108
    %p110 = scmp.ne.s32.totalorder %s98, %s99
    %p111 = scmp.eq.s32.totalorder %s22, 7
    %p112 = por %p110, %p111
    %p114 = scmp.ne.s32.totalorder %s99, %s113
    %p115 = scmp.eq.s32.totalorder %s22, 0
    %p116 = por %p114, %p115
    %s118 = sadd.s32 %s117, 1
    %p121 = scmp.eq.s32.totalorder %s16, 7
    %p122 = scmp.ne.s32.totalorder %s117, %s119
    %p123 = scmp.eq.s32.totalorder %s16, 0
    %p124 = por %p122, %p123
    %p125 = scmp.ne.s32.totalorder %s117, %s119
    %p126 = scmp.eq.s32.totalorder %s21, 7
    %p127 = por %p125, %p126
    %p128 = scmp.ne.s32.totalorder %s119, %s120
    %p129 = scmp.eq.s32.totalorder %s21, 0
    %p130 = por %p128, %p129
    %p131 = scmp.ne.s32.totalorder %s119, %s120
    %p132 = scmp.eq.s32.totalorder %s22, 7
    %p133 = por %p131, %p132
    %p135 = scmp.ne.s32.totalorder %s120, %s134
    %p136 = scmp.eq.s32.totalorder %s22, 0
    %p137 = por %p135, %p136
    %s139 = sadd.s32 %s138, 1
    %p142 = scmp.eq.s32.totalorder %s16, 7
    %p143 = scmp.ne.s32.totalorder %s138, %s140
    %p144 = scmp.eq.s32.totalorder %s16, 0
    %p145 = por %p143, %p144
    %p146 = scmp.ne.s32.totalorder %s138, %s140
    %p147 = scmp.eq.s32.totalorder %s21, 7
    %p148 = por %p146, %p147
    %p149 = scmp.ne.s32.totalorder %s140, %s141
    %p150 = scmp.eq.s32.totalorder %s21, 0
    %p151 = por %p149, %p150
    %p152 = scmp.ne.s32.totalorder %s140, %s141
    %p153 = scmp.eq.s32.totalorder %s22, 7
    %p154 = por %p152, %p153
    %p156 = scmp.ne.s32.totalorder %s141, %s155
    %p157 = scmp.eq.s32.totalorder %s22, 0
    %p158 = por %p156, %p157
    %s160 = sadd.s32 %s159, 1
    %p163 = scmp.eq.s32.totalorder %s16, 7
    %p164 = scmp.ne.s32.totalorder %s159, %s161
    %p165 = scmp.eq.s32.totalorder %s16, 0
    %p166 = por %p164, %p165
    %p167 = scmp.ne.s32.totalorder %s159, %s161
    %p168 = scmp.eq.s32.totalorder %s21, 7
    %p169 = por %p167, %p168
    %p170 = scmp.ne.s32.totalorder %s161, %s162
    %p171 = scmp.eq.s32.totalorder %s21, 0
    %p172 = por %p170, %p171
    %p173 = scmp.ne.s32.totalorder %s161, %s162
    %p174 = scmp.eq.s32.totalorder %s22, 7
    %p175 = por %p173, %p174
    %p177 = scmp.ne.s32.totalorder %s162, %s176
    %p178 = scmp.eq.s32.totalorder %s22, 0
    %p179 = por %p177, %p178
    %s181 = sadd.s32 %s180, 1
    %p184 = scmp.eq.s32.totalorder %s16, 7
    %p185 = scmp.ne.s32.totalorder %s180, %s182
    %p186 = scmp.eq.s32.totalorder %s16, 0
    %p187 = por %p185, %p186
    %p188 = scmp.ne.s32.totalorder %s180, %s182
    %p189 = scmp.eq.s32.totalorder %s21, 7
    %p190 = por %p188, %p189
    %p191 = scmp.ne.s32.totalorder %s182, %s183
    %p192 = scmp.eq.s32.totalorder %s21, 0
    %p193 = por %p191, %p192
    %p194 = scmp.ne.s32.totalorder %s182, %s183
    %p195 = scmp.eq.s32.totalorder %s22, 7
    %p196 = por %p194, %p195
    %p198 = scmp.ne.s32.totalorder %s183, %s197
    %p199 = scmp.eq.s32.totalorder %s22, 0
    %p200 = por %p198, %p199
    %s202 = sadd.s32 %s201, 1
    %p205 = scmp.eq.s32.totalorder %s16, 7
    %p206 = scmp.ne.s32.totalorder %s201, %s203
    %p207 = scmp.eq.s32.totalorder %s16, 0
    %p208 = por %p206, %p207
    %p209 = scmp.ne.s32.totalorder %s201, %s203
    %p210 = scmp.eq.s32.totalorder %s21, 7
    %p211 = por %p209, %p210
    %p212 = scmp.ne.s32.totalorder %s203, %s204
    %p213 = scmp.eq.s32.totalorder %s21, 0
    %p214 = por %p212, %p213
    %p215 = scmp.ne.s32.totalorder %s203, %s204
    %p216 = scmp.eq.s32.totalorder %s22, 7
    %p217 = por %p215, %p216
    %p219 = scmp.ne.s32.totalorder %s204, %s218
    %p220 = scmp.eq.s32.totalorder %s22, 0
    %p221 = por %p219, %p220
    %s223 = sadd.s32 %s222, 1
    %p226 = scmp.eq.s32.totalorder %s16, 7
    %p227 = scmp.ne.s32.totalorder %s222, %s224
    %p228 = scmp.eq.s32.totalorder %s16, 0
    %p229 = por %p227, %p228
    %p230 = scmp.ne.s32.totalorder %s222, %s224
    %p231 = scmp.eq.s32.totalorder %s21, 7
    %p232 = por %p230, %p231
    %p233 = scmp.ne.s32.totalorder %s224, %s225
    %p234 = scmp.eq.s32.totalorder %s21, 0
    %p235 = por %p233, %p234
    %p236 = scmp.ne.s32.totalorder %s224, %s225
    %p237 = scmp.eq.s32.totalorder %s22, 7
    %p238 = por %p236, %p237
    %p240 = scmp.ne.s32.totalorder %s225, %s239
    %p241 = scmp.eq.s32.totalorder %s22, 0
    %p242 = por %p240, %p241
    %s244 = sadd.s32 %s243, 1
    %p247 = scmp.eq.s32.totalorder %s16, 7
    %p248 = scmp.ne.s32.totalorder %s243, %s245
    %p249 = scmp.eq.s32.totalorder %s16, 0
    %p250 = por %p248, %p249
    %p251 = scmp.ne.s32.totalorder %s243, %s245
    %p252 = scmp.eq.s32.totalorder %s21, 7
    %p253 = por %p251, %p252
    %p254 = scmp.ne.s32.totalorder %s245, %s246
    %p255 = scmp.eq.s32.totalorder %s21, 0
    %p256 = por %p254, %p255
    %p257 = scmp.ne.s32.totalorder %s245, %s246
    %p258 = scmp.eq.s32.totalorder %s22, 7
    %p259 = por %p257, %p258
    %p261 = scmp.ne.s32.totalorder %s246, %s260
    %p262 = scmp.eq.s32.totalorder %s22, 0
    %p263 = por %p261, %p262
    %s264 = ssub.s32 %s23, %s42
    %p265 = scmp.eq.s32.totalorder %s264, 0
    %s267 = sadd.s32 %s266, 1
    %s268 = scalar_select %p265, %s266, %s267
    %p271 = pneg %p265
    %p272 = scmp.eq.s32.totalorder %s16, 7
    %p273 = por %p271, %p272
    %p274 = scmp.ne.s32.totalorder %s266, %s269
    %p275 = scmp.eq.s32.totalorder %s16, 0
    %p276 = por %p274, %p275
    %p277 = scmp.ne.s32.totalorder %s266, %s269
    %p278 = scmp.eq.s32.totalorder %s21, 7
    %p279 = por %p277, %p278
    %p280 = scmp.ne.s32.totalorder %s269, %s270
    %p281 = scmp.eq.s32.totalorder %s21, 0
    %p282 = por %p280, %p281
    %p283 = scmp.ne.s32.totalorder %s269, %s270
    %p284 = scmp.eq.s32.totalorder %s22, 7
    %p285 = por %p283, %p284
    %p287 = scmp.ne.s32.totalorder %s270, %s286
    %p288 = scmp.eq.s32.totalorder %s22, 0
    %p289 = por %p287, %p288
    %p290 = scmp.le.s32.totalorder 1, %s16
    %p291 = scmp.lt.s32.totalorder %s16, 9
    %p292 = pnand %p290, %p291
    %p293 = pneg %p292
    // Predicated region
    $region9: #{foldingnet_forward.2} parent=5 // pred_check
      _
    $region10: #{foldingnet_forward.2} parent=5 // pred_check_branch
      %295 = sbr.rel (%p292) target = $region12
    $region11: #{foldingnet_forward.2} parent=5 // pred_region
      %s296 = ssub.s32 %s16, 1
      // Predicated region
      $region13: #{foldingnet_forward.2} parent=11 // pred_check
        %p297 = pneg %p88
      $region14: #{foldingnet_forward.2} parent=11 // pred_check_branch
        %299 = sbr.rel (%p297) target = $region16
      $region15: #{foldingnet_forward.2} parent=11 // pred_region
        _
      $region16: #{foldingnet_forward.2} parent=11 // pred_fallthru
        _
      // Predicated region
      $region17: #{foldingnet_forward.2} parent=11 // pred_check
        %p300 = pneg %p109
      $region18: #{foldingnet_forward.2} parent=11 // pred_check_branch
        %302 = sbr.rel (%p300) target = $region20
      $region19: #{foldingnet_forward.2} parent=11 // pred_region
        _
      $region20: #{foldingnet_forward.2} parent=11 // pred_fallthru
        _
      // Predicated region
      $region21: #{foldingnet_forward.2} parent=11 // pred_check
        %p303 = pneg %p130
      $region22: #{foldingnet_forward.2} parent=11 // pred_check_branch
        %305 = sbr.rel (%p303) target = $region24
      $region23: #{foldingnet_forward.2} parent=11 // pred_region
        _
      $region24: #{foldingnet_forward.2} parent=11 // pred_fallthru
        _
      // Predicated region
      $region25: #{foldingnet_forward.2} parent=11 // pred_check
        %p306 = pneg %p151
      $region26: #{foldingnet_forward.2} parent=11 // pred_check_branch
        %308 = sbr.rel (%p306) target = $region28
      $region27: #{foldingnet_forward.2} parent=11 // pred_region
        _
      $region28: #{foldingnet_forward.2} parent=11 // pred_fallthru
        _
      // Predicated region
      $region29: #{foldingnet_forward.2} parent=11 // pred_check
        %p309 = pneg %p172
      $region30: #{foldingnet_forward.2} parent=11 // pred_check_branch
        %311 = sbr.rel (%p309) target = $region32
      $region31: #{foldingnet_forward.2} parent=11 // pred_region
        _
      $region32: #{foldingnet_forward.2} parent=11 // pred_fallthru
        _
      // Predicated region
      $region33: #{foldingnet_forward.2} parent=11 // pred_check
        %p312 = pneg %p193
      $region34: #{foldingnet_forward.2} parent=11 // pred_check_branch
        %314 = sbr.rel (%p312) target = $region36
      $region35: #{foldingnet_forward.2} parent=11 // pred_region
        _
      $region36: #{foldingnet_forward.2} parent=11 // pred_fallthru
        _
      // Predicated region
      $region37: #{foldingnet_forward.2} parent=11 // pred_check
        %p315 = pneg %p214
      $region38: #{foldingnet_forward.2} parent=11 // pred_check_branch
        %317 = sbr.rel (%p315) target = $region40
      $region39: #{foldingnet_forward.2} parent=11 // pred_region
        _
      $region40: #{foldingnet_forward.2} parent=11 // pred_fallthru
        _
      // Predicated region
      $region41: #{foldingnet_forward.2} parent=11 // pred_check
        %p318 = pneg %p235
      $region42: #{foldingnet_forward.2} parent=11 // pred_check_branch
        %320 = sbr.rel (%p318) target = $region44
      $region43: #{foldingnet_forward.2} parent=11 // pred_region
        _
      $region44: #{foldingnet_forward.2} parent=11 // pred_fallthru
        _
      // Predicated region
      $region45: #{foldingnet_forward.2} parent=11 // pred_check
        %p321 = pneg %p256
      $region46: #{foldingnet_forward.2} parent=11 // pred_check_branch
        %323 = sbr.rel (%p321) target = $region48
      $region47: #{foldingnet_forward.2} parent=11 // pred_region
        _
      $region48: #{foldingnet_forward.2} parent=11 // pred_fallthru
        _
    $region12: #{foldingnet_forward.2} parent=5 // pred_fallthru
      _
    %p324 = scmp.lt.s32.totalorder %s16, 8
    // Predicated region
    $region49: #{foldingnet_forward.2} parent=5 // pred_check
      %p325 = pneg %p324
    $region50: #{foldingnet_forward.2} parent=5 // pred_check_branch
      %327 = sbr.rel (%p325) target = $region52
    $region51: #{foldingnet_forward.2} parent=5 // pred_region
      // Predicated region
      $region53: #{foldingnet_forward.2} parent=51 // pred_check
        %p328 = pneg %p61
      $region54: #{foldingnet_forward.2} parent=51 // pred_check_branch
        %330 = sbr.rel (%p328) target = $region56
      $region55: #{foldingnet_forward.2} parent=51 // pred_region
        %s331 = ssub.s32 1, %s24
        %s332 = smul.u32 %s25, %s331
        %s333 = smul.u32 32, %s332
        %p334 = scmp.lt.s32.totalorder %s23, 1
        %s335 = scalar_select %p334, %s23, 1
        %p336 = scmp.lt.s32.totalorder %s333, 63
        %s337 = scalar_select %p336, %s333, 63
        %s338 = smul.addr %s335, 64
        %s339 = sadd.s32 %s337, %s338
        %s340 = smul.addr %s339, 4
        %s341 = scalar_lea.vmem %s0, %s340
        %s342 = ssub.s32 1, %s24
        %s343 = smul.u32 %s25, %s342
        %s344 = smul.u32 32, %s343
      $region56: #{foldingnet_forward.2} parent=51 // pred_fallthru
        _
    $region52: #{foldingnet_forward.2} parent=5 // pred_fallthru
      _
    %p345 = scmp.le.s32.totalorder 1, %s16
    %p346 = scmp.lt.s32.totalorder %s16, 9
    %p347 = pnand %p345, %p346
    %p348 = pneg %p347
    // Predicated region
    $region57: #{foldingnet_forward.2} parent=5 // pred_check
      _
    $region58: #{foldingnet_forward.2} parent=5 // pred_check_branch
      %350 = sbr.rel (%p347) target = $region60
    $region59: #{foldingnet_forward.2} parent=5 // pred_region
      %s351 = ssub.s32 %s16, 1
      %s352 = ssub.s32 1, %s27
      %s353 = smul.u32 %s28, %s352
      %s354 = smul.u32 32, %s353
      %p355 = scmp.lt.s32.totalorder %s26, 1
      %s356 = scalar_select %p355, %s26, 1
      %p357 = scmp.lt.s32.totalorder %s354, 63
      %s358 = scalar_select %p357, %s354, 63
      %s359 = smul.addr %s356, 64
      %s360 = sadd.s32 %s358, %s359
      %s361 = smul.addr %s360, 4
      %s362 = scalar_lea.vmem %s0, %s361
      %p363 = pneg %p67
      %p364 = pneg %p64
      %p365 = pneg %p88
      %p366 = pneg %p85
      %p367 = pneg %p109
      %p368 = pneg %p106
      %p369 = pneg %p130
      %p370 = pneg %p127
      %p371 = pneg %p151
      %p372 = pneg %p148
      %p373 = pneg %p172
      %p374 = pneg %p169
      %p375 = pneg %p193
      %p376 = pneg %p190
      %p377 = pneg %p214
      %p378 = pneg %p211
      %p379 = pneg %p235
      %p380 = pneg %p232
      %p381 = pneg %p256
      %p382 = pneg %p253
      %p383 = pneg %p282
      %p384 = pneg %p279
      %p385 = scmp.lt.s32.totalorder %s26, 1
      %s386 = scalar_select %p385, %s26, 1
      %s387 = scalar_lea.vmem %s10, %s386
      %s388 = ssub.s32 1, %s27
      %s389 = smul.u32 %s28, %s388
      %s390 = smul.u32 32, %s389
      %p391 = scmp.lt.s32.totalorder %s26, 1
      %s392 = scalar_select %p391, %s26, 1
      %p393 = scmp.lt.s32.totalorder %s390, 63
      %s394 = scalar_select %p393, %s390, 63
      %s395 = smul.addr %s392, 64
      %s396 = sadd.s32 %s394, %s395
      %s397 = smul.addr %s396, 4
      %s398 = scalar_lea.vmem %s0, %s397
      %s399 = ssub.s32 1, %s27
      %s400 = smul.u32 %s28, %s399
      %s401 = smul.u32 32, %s400
      %p402 = scmp.lt.s32.totalorder %s26, 1
      %s403 = scalar_select %p402, %s26, 1
      %s404 = scalar_lea.vmem %s10, %s403
      %p406 = scmp.eq.s32.totalorder %s27, 0
      // Predicated region
      $region61: #{foldingnet_forward.2} parent=59 // pred_check
        %p407 = pneg %p406
      $region62: #{foldingnet_forward.2} parent=59 // pred_check_branch
        %409 = sbr.rel (%p407) target = $region64
      $region63: #{foldingnet_forward.2} parent=59 // pred_region
        %p410 = scmp.eq.s32.totalorder %s28, 0
        // Predicated region
        $region65: #{foldingnet_forward.2} parent=63 // pred_check
          %p411 = pneg %p410
        $region66: #{foldingnet_forward.2} parent=63 // pred_check_branch
          %413 = sbr.rel (%p411) target = $region68
        $region67: #{foldingnet_forward.2} parent=63 // pred_region
          %vm414 = vcmask 253952
          %415 = vst.msk [vmem:[#allocation3] sm:$0x1] %vm414, -inf
        $region68: #{foldingnet_forward.2} parent=63 // pred_fallthru
          _
        %v416 = vld [vmem:[%s398] sm:$0xf]
        %v417 = vld [vmem:[%s398 + $0x4] sm:$0xf]
        %v418 = vld [vmem:[%s398 + $0x8] sm:$0xf]
        %v419 = vld [vmem:[%s398 + $0xc] sm:$0xf]
        %v420 = vld [vmem:[%s398 + $0x10] sm:$0xf]
        %v421 = vld [vmem:[%s398 + $0x14] sm:$0xf]
        %v422 = vld [vmem:[%s398 + $0x18] sm:$0xf]
        %v423 = vld [vmem:[%s398 + $0x1c] sm:$0xf]
        %v424 = vld [vmem:[%s398 + $0x20] sm:$0xf]
        %v425 = vld [vmem:[%s398 + $0x24] sm:$0xf]
        %v426 = vld [vmem:[%s398 + $0x28] sm:$0xf]
        %v427 = vld [vmem:[%s398 + $0x2c] sm:$0xf]
        %v428 = vld [vmem:[%s398 + $0x30] sm:$0xf]
        %v429 = vld [vmem:[%s398 + $0x34] sm:$0xf]
        %v430 = vld [vmem:[%s398 + $0x38] sm:$0xf]
        %v431 = vld [vmem:[%s398 + $0x3c] sm:$0xf]
        %v432 = vld [vmem:[%s398 + $0x40] sm:$0xf]
        %v433 = vld [vmem:[%s398 + $0x44] sm:$0xf]
        %v434 = vld [vmem:[%s398 + $0x48] sm:$0xf]
        %v435 = vld [vmem:[%s398 + $0x4c] sm:$0xf]
        %v436 = vld [vmem:[%s398 + $0x50] sm:$0xf]
        %v437 = vld [vmem:[%s398 + $0x54] sm:$0xf]
        %v438 = vld [vmem:[%s398 + $0x58] sm:$0xf]
        %v439 = vld [vmem:[%s398 + $0x5c] sm:$0xf]
        %v440 = vld [vmem:[%s398 + $0x60] sm:$0xf]
        %v441 = vld [vmem:[%s398 + $0x64] sm:$0xf]
        %v442 = vld [vmem:[%s398 + $0x68] sm:$0xf]
        %v443 = vld [vmem:[%s398 + $0x6c] sm:$0xf]
        %v444 = vld [vmem:[%s398 + $0x70] sm:$0xf]
        %v445 = vld [vmem:[%s398 + $0x74] sm:$0xf]
        %v446 = vld [vmem:[%s398 + $0x78] sm:$0xf]
        %v447 = vld [vmem:[%s398 + $0x7c] sm:$0xf]
        %v448 = vld [vmem:[%s1] sm:$0x3]
        %v449 = vld [vmem:[%s2] sm:$0x1]
        %v451 = vlaneseq
        %v452 = vshrl.u32 %v451, 7
        %v453 = vsub.s32 0, %v452
        %v454 = vrot.slane %v449, %v453
        %v488 = vunpack.c.l.b16 %v416
        %v489 = vunpack.c.l.b16 %v417
        %v490 = vunpack.c.l.b16 %v418
        %v491 = vunpack.c.l.b16 %v419
        %v492 = vunpack.c.l.b16 %v420
        %v493 = vunpack.c.l.b16 %v421
        %v494 = vunpack.c.l.b16 %v422
        %v495 = vunpack.c.l.b16 %v423
        %v496 = vunpack.c.l.b16 %v424
        %v497 = vunpack.c.l.b16 %v425
        %v498 = vunpack.c.l.b16 %v426
        %v499 = vunpack.c.l.b16 %v427
        %v500 = vunpack.c.l.b16 %v428
        %v501 = vunpack.c.l.b16 %v429
        %v502 = vunpack.c.l.b16 %v430
        %v503 = vunpack.c.l.b16 %v431
        %v504 = vunpack.c.l.b16 %v432
        %v505 = vunpack.c.l.b16 %v433
        %v506 = vunpack.c.l.b16 %v434
        %v507 = vunpack.c.l.b16 %v435
        %v508 = vunpack.c.l.b16 %v436
        %v509 = vunpack.c.l.b16 %v437
        %v510 = vunpack.c.l.b16 %v438
        %v511 = vunpack.c.l.b16 %v439
        %v512 = vunpack.c.l.b16 %v440
        %v513 = vunpack.c.l.b16 %v441
        %v514 = vunpack.c.l.b16 %v442
        %v515 = vunpack.c.l.b16 %v443
        %v516 = vunpack.c.l.b16 %v444
        %v517 = vunpack.c.l.b16 %v445
        %v518 = vunpack.c.l.b16 %v446
        %v519 = vunpack.c.l.b16 %v447
        %v520 = vpack.c.b16 %v489, %v488
        %v521 = vpack.c.b16 %v491, %v490
        %v522 = vpack.c.b16 %v493, %v492
        %v523 = vpack.c.b16 %v495, %v494
        %v524 = vpack.c.b16 %v497, %v496
        %v525 = vpack.c.b16 %v499, %v498
        %v526 = vpack.c.b16 %v501, %v500
        %v527 = vpack.c.b16 %v503, %v502
        %v528 = vpack.c.b16 %v505, %v504
        %v529 = vpack.c.b16 %v507, %v506
        %v530 = vpack.c.b16 %v509, %v508
        %v531 = vpack.c.b16 %v511, %v510
        %v532 = vpack.c.b16 %v513, %v512
        %v533 = vpack.c.b16 %v515, %v514
        %v534 = vpack.c.b16 %v517, %v516
        %v535 = vpack.c.b16 %v519, %v518
        %vm536 = vcmask 23552
        %v538 = vsel %vm536, %v520, 0
        %v541 = vsel %vm536, %v521, 0
        %v544 = vsel %vm536, %v522, 0
        %v547 = vsel %vm536, %v523, 0
        %v550 = vsel %vm536, %v524, 0
        %v553 = vsel %vm536, %v525, 0
        %v556 = vsel %vm536, %v526, 0
        %v559 = vsel %vm536, %v527, 0
        %v562 = vsel %vm536, %v528, 0
        %v565 = vsel %vm536, %v529, 0
        %v568 = vsel %vm536, %v530, 0
        %v571 = vsel %vm536, %v531, 0
        %v574 = vsel %vm536, %v532, 0
        %v577 = vsel %vm536, %v533, 0
        %v580 = vsel %vm536, %v534, 0
        %v583 = vsel %vm536, %v535, 0
        %vm585 = vcmask 1040384
        %vm586 = vcmask 1041408
        %v587 = vsel %vm585, 4294967295, 65535
        %v588 = vsel %vm586, %v587, 0
        %v590 = vand.u32 %v448, %v588
        %592 = vmatprep.subr.bf16.mxu0 0
        %593 = vmatpush1.bf16.msra.mxu0 %v590
        %594 = vmatprep.subr.bf16.mxu0 0
        %595 = vmatpush1.bf16.msra.mxu0 0
        %596 = vmatprep.subr.bf16.mxu0 0
        %597 = vmatpush1.bf16.msra.mxu0 0
        %598 = vmatprep.subr.bf16.mxu0 0
        %599 = vmatpush1.bf16.msra.mxu0 0
        %600 = vmatprep.subr.bf16.mxu0 0
        %601 = vmatpush1.bf16.msra.mxu0 0
        %602 = vmatprep.subr.bf16.mxu0 0
        %603 = vmatpush1.bf16.msra.mxu0 0
        %604 = vmatprep.subr.bf16.mxu0 0
        %605 = vmatpush1.bf16.msra.mxu0 0
        %606 = vmatprep.subr.bf16.mxu0 0
        %607 = vmatpush1.bf16.msra.mxu0 0
        %608 = vmatprep.subr.bf16.mxu0 0
        %609 = vmatpush1.bf16.msra.mxu0 0
        %610 = vmatprep.subr.bf16.mxu0 0
        %611 = vmatpush1.bf16.msra.mxu0 0
        %612 = vmatprep.subr.bf16.mxu0 0
        %613 = vmatpush1.bf16.msra.mxu0 0
        %614 = vmatprep.subr.bf16.mxu0 0
        %615 = vmatpush1.bf16.msra.mxu0 0
        %616 = vmatprep.subr.bf16.mxu0 0
        %617 = vmatpush1.bf16.msra.mxu0 0
        %618 = vmatprep.subr.bf16.mxu0 0
        %619 = vmatpush1.bf16.msra.mxu0 0
        %620 = vmatprep.subr.bf16.mxu0 0
        %621 = vmatpush1.bf16.msra.mxu0 0
        %622 = vmatprep.subr.bf16.mxu0 0
        %623 = vmatpush1.bf16.msra.mxu0 0
        %624 = vmatprep.mubr.bf16.mxu0 0
        %625 = vmatmul.mubr.bf16.gmra.mrb[0].mxu0 %v538
        %v626 = vpop.f32.mrb[0].mxu0
        %v627 = vadd.f32 %v454, %v626
        %v628 = vpop.f32.mrb[0].mxu0
        %v629 = vpop.f32.mrb[0].mxu0
        %v630 = vadd.f32 %v454, %v629
        %v631 = vpop.f32.mrb[0].mxu0
        %632 = vmatprep.mubr.bf16.mxu0 0
        %633 = vmatmul.mubr.bf16.gmra.mrb[0].mxu0 %v541
        %v634 = vpop.f32.mrb[0].mxu0
        %v635 = vadd.f32 %v454, %v634
        %v636 = vpop.f32.mrb[0].mxu0
        %v637 = vpop.f32.mrb[0].mxu0
        %v638 = vadd.f32 %v454, %v637
        %v639 = vpop.f32.mrb[0].mxu0
        %640 = vmatprep.mubr.bf16.mxu0 0
        %641 = vmatmul.mubr.bf16.gmra.mrb[0].mxu0 %v544
        %v642 = vpop.f32.mrb[0].mxu0
        %v643 = vadd.f32 %v454, %v642
        %v644 = vpop.f32.mrb[0].mxu0
        %v645 = vpop.f32.mrb[0].mxu0
        %v646 = vadd.f32 %v454, %v645
        %v647 = vpop.f32.mrb[0].mxu0
        %648 = vmatprep.mubr.bf16.mxu0 0
        %649 = vmatmul.mubr.bf16.gmra.mrb[0].mxu0 %v547
        %v650 = vpop.f32.mrb[0].mxu0
        %v651 = vadd.f32 %v454, %v650
        %v652 = vpop.f32.mrb[0].mxu0
        %v653 = vpop.f32.mrb[0].mxu0
        %v654 = vadd.f32 %v454, %v653
        %v655 = vpop.f32.mrb[0].mxu0
        %656 = vmatprep.mubr.bf16.mxu0 0
        %657 = vmatmul.mubr.bf16.gmra.mrb[0].mxu0 %v550
        %v658 = vpop.f32.mrb[0].mxu0
        %v659 = vadd.f32 %v454, %v658
        %v660 = vpop.f32.mrb[0].mxu0
        %v661 = vpop.f32.mrb[0].mxu0
        %v662 = vadd.f32 %v454, %v661
        %v663 = vpop.f32.mrb[0].mxu0
        %664 = vmatprep.mubr.bf16.mxu0 0
        %665 = vmatmul.mubr.bf16.gmra.mrb[0].mxu0 %v553
        %v666 = vpop.f32.mrb[0].mxu0
        %v667 = vadd.f32 %v454, %v666
        %v668 = vpop.f32.mrb[0].mxu0
        %v669 = vpop.f32.mrb[0].mxu0
        %v670 = vadd.f32 %v454, %v669
        %v671 = vpop.f32.mrb[0].mxu0
        %672 = vmatprep.mubr.bf16.mxu0 0
        %673 = vmatmul.mubr.bf16.gmra.mrb[0].mxu0 %v556
        %v674 = vpop.f32.mrb[0].mxu0
        %v675 = vadd.f32 %v454, %v674
        %v676 = vpop.f32.mrb[0].mxu0
        %v677 = vpop.f32.mrb[0].mxu0
        %v678 = vadd.f32 %v454, %v677
        %v679 = vpop.f32.mrb[0].mxu0
        %680 = vmatprep.mubr.bf16.mxu0 0
        %681 = vmatmul.mubr.bf16.gmra.mrb[0].mxu0 %v559
        %v682 = vpop.f32.mrb[0].mxu0
        %v683 = vadd.f32 %v454, %v682
        %v684 = vpop.f32.mrb[0].mxu0
        %v685 = vpop.f32.mrb[0].mxu0
        %v686 = vadd.f32 %v454, %v685
        %v687 = vpop.f32.mrb[0].mxu0
        %688 = vmatprep.mubr.bf16.mxu0 0
        %689 = vmatmul.mubr.bf16.gmra.mrb[0].mxu0 %v562
        %v690 = vpop.f32.mrb[0].mxu0
        %v691 = vadd.f32 %v454, %v690
        %v692 = vpop.f32.mrb[0].mxu0
        %v693 = vpop.f32.mrb[0].mxu0
        %v694 = vadd.f32 %v454, %v693
        %v695 = vpop.f32.mrb[0].mxu0
        %696 = vmatprep.mubr.bf16.mxu0 0
        %697 = vmatmul.mubr.bf16.gmra.mrb[0].mxu0 %v565
        %v698 = vpop.f32.mrb[0].mxu0
        %v699 = vadd.f32 %v454, %v698
        %v700 = vpop.f32.mrb[0].mxu0
        %v701 = vpop.f32.mrb[0].mxu0
        %v702 = vadd.f32 %v454, %v701
        %v703 = vpop.f32.mrb[0].mxu0
        %704 = vmatprep.mubr.bf16.mxu0 0
        %705 = vmatmul.mubr.bf16.gmra.mrb[0].mxu0 %v568
        %v706 = vpop.f32.mrb[0].mxu0
        %v707 = vadd.f32 %v454, %v706
        %v708 = vpop.f32.mrb[0].mxu0
        %v709 = vpop.f32.mrb[0].mxu0
        %v710 = vadd.f32 %v454, %v709
        %v711 = vpop.f32.mrb[0].mxu0
        %712 = vmatprep.mubr.bf16.mxu0 0
        %713 = vmatmul.mubr.bf16.gmra.mrb[0].mxu0 %v571
        %v714 = vpop.f32.mrb[0].mxu0
        %v715 = vadd.f32 %v454, %v714
        %v716 = vpop.f32.mrb[0].mxu0
        %v717 = vpop.f32.mrb[0].mxu0
        %v718 = vadd.f32 %v454, %v717
        %v719 = vpop.f32.mrb[0].mxu0
        %720 = vmatprep.mubr.bf16.mxu0 0
        %721 = vmatmul.mubr.bf16.gmra.mrb[0].mxu0 %v574
        %v722 = vpop.f32.mrb[0].mxu0
        %v723 = vadd.f32 %v454, %v722
        %v724 = vpop.f32.mrb[0].mxu0
        %v725 = vpop.f32.mrb[0].mxu0
        %v726 = vadd.f32 %v454, %v725
        %v727 = vpop.f32.mrb[0].mxu0
        %728 = vmatprep.mubr.bf16.mxu0 0
        %729 = vmatmul.mubr.bf16.gmra.mrb[0].mxu0 %v577
        %v730 = vpop.f32.mrb[0].mxu0
        %v731 = vadd.f32 %v454, %v730
        %v732 = vpop.f32.mrb[0].mxu0
        %v733 = vpop.f32.mrb[0].mxu0
        %v734 = vadd.f32 %v454, %v733
        %v735 = vpop.f32.mrb[0].mxu0
        %736 = vmatprep.mubr.bf16.mxu0 0
        %737 = vmatmul.mubr.bf16.gmra.mrb[0].mxu0 %v580
        %v738 = vpop.f32.mrb[0].mxu0
        %v739 = vadd.f32 %v454, %v738
        %v740 = vpop.f32.mrb[0].mxu0
        %v741 = vpop.f32.mrb[0].mxu0
        %v742 = vadd.f32 %v454, %v741
        %v743 = vpop.f32.mrb[0].mxu0
        %744 = vmatprep.mubr.bf16.mxu0 0
        %745 = vmatmul.mubr.bf16.gmra.mrb[0].mxu0 %v583
        %v746 = vpop.f32.mrb[0].mxu0
        %v747 = vadd.f32 %v454, %v746
        %v748 = vpop.f32.mrb[0].mxu0
        %v749 = vpop.f32.mrb[0].mxu0
        %v750 = vadd.f32 %v454, %v749
        %v751 = vpop.f32.mrb[0].mxu0
        %752 = vdwg.mxu0
        %v753 = vmax.f32 %v627, 0.0
        %v754 = vmax.f32 %v630, 0.0
        %v755 = vmax.f32 %v635, 0.0
        %v756 = vmax.f32 %v638, 0.0
        %v757 = vmax.f32 %v643, 0.0
        %v758 = vmax.f32 %v646, 0.0
        %v759 = vmax.f32 %v651, 0.0
        %v760 = vmax.f32 %v654, 0.0
        %v761 = vmax.f32 %v659, 0.0
        %v762 = vmax.f32 %v662, 0.0
        %v763 = vmax.f32 %v667, 0.0
        %v764 = vmax.f32 %v670, 0.0
        %v765 = vmax.f32 %v675, 0.0
        %v766 = vmax.f32 %v678, 0.0
        %v767 = vmax.f32 %v683, 0.0
        %v768 = vmax.f32 %v686, 0.0
        %v769 = vmax.f32 %v691, 0.0
        %v770 = vmax.f32 %v694, 0.0
        %v771 = vmax.f32 %v699, 0.0
        %v772 = vmax.f32 %v702, 0.0
        %v773 = vmax.f32 %v707, 0.0
        %v774 = vmax.f32 %v710, 0.0
        %v775 = vmax.f32 %v715, 0.0
        %v776 = vmax.f32 %v718, 0.0
        %v777 = vmax.f32 %v723, 0.0
        %v778 = vmax.f32 %v726, 0.0
        %v779 = vmax.f32 %v731, 0.0
        %v780 = vmax.f32 %v734, 0.0
        %v781 = vmax.f32 %v739, 0.0
        %v782 = vmax.f32 %v742, 0.0
        %v783 = vmax.f32 %v747, 0.0
        %v784 = vmax.f32 %v750, 0.0
        %v785 = vpack.c.bf16 %v754, %v753
        %v786 = vpack.c.bf16 %v756, %v755
        %v787 = vpack.c.bf16 %v758, %v757
        %v788 = vpack.c.bf16 %v760, %v759
        %v789 = vpack.c.bf16 %v762, %v761
        %v790 = vpack.c.bf16 %v764, %v763
        %v791 = vpack.c.bf16 %v766, %v765
        %v792 = vpack.c.bf16 %v768, %v767
        %v793 = vpack.c.bf16 %v770, %v769
        %v794 = vpack.c.bf16 %v772, %v771
        %v795 = vpack.c.bf16 %v774, %v773
        %v796 = vpack.c.bf16 %v776, %v775
        %v797 = vpack.c.bf16 %v778, %v777
        %v798 = vpack.c.bf16 %v780, %v779
        %v799 = vpack.c.bf16 %v782, %v781
        %v800 = vpack.c.bf16 %v784, %v783
        %v801 = vld [vmem:[%s3] sm:$0xf]
        %v802 = vld [vmem:[%s3 + $0x4] sm:$0xf]
        %v803 = vld [vmem:[%s4] sm:$0x1]
        %v805 = vlaneseq
        %v806 = vshrl.u32 %v805, 7
        %v807 = vsub.s32 0, %v806
        %v808 = vrot.slane %v803, %v807
        %v812 = vunpack.c.l.b16 %v801
        %v813 = vunpack.c.l.b16 %v802
        %v814 = vpack.c.b16 %v813, %v812
        %vm816 = vcmask 130048
        %v818 = vsel %vm816, %v785, 0
        %v821 = vsel %vm816, %v786, 0
        %v824 = vsel %vm816, %v787, 0
        %v827 = vsel %vm816, %v788, 0
        %v830 = vsel %vm816, %v789, 0
        %v833 = vsel %vm816, %v790, 0
        %v836 = vsel %vm816, %v791, 0
        %v839 = vsel %vm816, %v792, 0
        %v842 = vsel %vm816, %v793, 0
        %v845 = vsel %vm816, %v794, 0
        %v848 = vsel %vm816, %v795, 0
        %v851 = vsel %vm816, %v796, 0
        %v854 = vsel %vm816, %v797, 0
        %v857 = vsel %vm816, %v798, 0
        %v860 = vsel %vm816, %v799, 0
        %v863 = vsel %vm816, %v800, 0
        %865 = vmatprep.subr.bf16.mxu0 0
        %866 = vmatpush1.bf16.msra.mxu0 %v814
        %867 = vmatprep.subr.bf16.mxu0 0
        %868 = vmatpush1.bf16.msra.mxu0 0
        %869 = vmatprep.subr.bf16.mxu0 0
        %870 = vmatpush1.bf16.msra.mxu0 0
        %871 = vmatprep.subr.bf16.mxu0 0
        %872 = vmatpush1.bf16.msra.mxu0 0
        %873 = vmatprep.subr.bf16.mxu0 0
        %874 = vmatpush1.bf16.msra.mxu0 0
        %875 = vmatprep.subr.bf16.mxu0 0
        %876 = vmatpush1.bf16.msra.mxu0 0
        %877 = vmatprep.subr.bf16.mxu0 0
        %878 = vmatpush1.bf16.msra.mxu0 0
        %879 = vmatprep.subr.bf16.mxu0 0
        %880 = vmatpush1.bf16.msra.mxu0 0
        %881 = vmatprep.subr.bf16.mxu0 0
        %882 = vmatpush1.bf16.msra.mxu0 0
        %883 = vmatprep.subr.bf16.mxu0 0
        %884 = vmatpush1.bf16.msra.mxu0 0
        %885 = vmatprep.subr.bf16.mxu0 0
        %886 = vmatpush1.bf16.msra.mxu0 0
        %887 = vmatprep.subr.bf16.mxu0 0
        %888 = vmatpush1.bf16.msra.mxu0 0
        %889 = vmatprep.subr.bf16.mxu0 0
        %890 = vmatpush1.bf16.msra.mxu0 0
        %891 = vmatprep.subr.bf16.mxu0 0
        %892 = vmatpush1.bf16.msra.mxu0 0
        %893 = vmatprep.subr.bf16.mxu0 0
        %894 = vmatpush1.bf16.msra.mxu0 0
        %895 = vmatprep.subr.bf16.mxu0 0
        %896 = vmatpush1.bf16.msra.mxu0 0
        %897 = vmatprep.mubr.bf16.mxu0 0
        %898 = vmatmul.mubr.bf16.gmra.mrb[0].mxu0 %v818
        %v899 = vpop.f32.mrb[0].mxu0
        %v900 = vadd.f32 %v808, %v899
        %v901 = vpop.f32.mrb[0].mxu0
        %v902 = vpop.f32.mrb[0].mxu0
        %v903 = vadd.f32 %v808, %v902
        %v904 = vpop.f32.mrb[0].mxu0
        %905 = vmatprep.mubr.bf16.mxu0 0
        %906 = vmatmul.mubr.bf16.gmra.mrb[0].mxu0 %v821
        %v907 = vpop.f32.mrb[0].mxu0
        %v908 = vadd.f32 %v808, %v907
        %v909 = vpop.f32.mrb[0].mxu0
        %v910 = vpop.f32.mrb[0].mxu0
        %v911 = vadd.f32 %v808, %v910
        %v912 = vpop.f32.mrb[0].mxu0
        %913 = vmatprep.mubr.bf16.mxu0 0
        %914 = vmatmul.mubr.bf16.gmra.mrb[0].mxu0 %v824
        %v915 = vpop.f32.mrb[0].mxu0
        %v916 = vadd.f32 %v808, %v915
        %v917 = vpop.f32.mrb[0].mxu0
        %v918 = vpop.f32.mrb[0].mxu0
        %v919 = vadd.f32 %v808, %v918
        %v920 = vpop.f32.mrb[0].mxu0
        %921 = vmatprep.mubr.bf16.mxu0 0
        %922 = vmatmul.mubr.bf16.gmra.mrb[0].mxu0 %v827
        %v923 = vpop.f32.mrb[0].mxu0
        %v924 = vadd.f32 %v808, %v923
        %v925 = vpop.f32.mrb[0].mxu0
        %v926 = vpop.f32.mrb[0].mxu0
        %v927 = vadd.f32 %v808, %v926
        %v928 = vpop.f32.mrb[0].mxu0
        %929 = vmatprep.mubr.bf16.mxu0 0
        %930 = vmatmul.mubr.bf16.gmra.mrb[0].mxu0 %v830
        %v931 = vpop.f32.mrb[0].mxu0
        %v932 = vadd.f32 %v808, %v931
        %v933 = vpop.f32.mrb[0].mxu0
        %v934 = vpop.f32.mrb[0].mxu0
        %v935 = vadd.f32 %v808, %v934
        %v936 = vpop.f32.mrb[0].mxu0
        %937 = vmatprep.mubr.bf16.mxu0 0
        %938 = vmatmul.mubr.bf16.gmra.mrb[0].mxu0 %v833
        %v939 = vpop.f32.mrb[0].mxu0
        %v940 = vadd.f32 %v808, %v939
        %v941 = vpop.f32.mrb[0].mxu0
        %v942 = vpop.f32.mrb[0].mxu0
        %v943 = vadd.f32 %v808, %v942
        %v944 = vpop.f32.mrb[0].mxu0
        %945 = vmatprep.mubr.bf16.mxu0 0
        %946 = vmatmul.mubr.bf16.gmra.mrb[0].mxu0 %v836
        %v947 = vpop.f32.mrb[0].mxu0
        %v948 = vadd.f32 %v808, %v947
        %v949 = vpop.f32.mrb[0].mxu0
        %v950 = vpop.f32.mrb[0].mxu0
        %v951 = vadd.f32 %v808, %v950
        %v952 = vpop.f32.mrb[0].mxu0
        %953 = vmatprep.mubr.bf16.mxu0 0
        %954 = vmatmul.mubr.bf16.gmra.mrb[0].mxu0 %v839
        %v955 = vpop.f32.mrb[0].mxu0
        %v956 = vadd.f32 %v808, %v955
        %v957 = vpop.f32.mrb[0].mxu0
        %v958 = vpop.f32.mrb[0].mxu0
        %v959 = vadd.f32 %v808, %v958
        %v960 = vpop.f32.mrb[0].mxu0
        %961 = vmatprep.mubr.bf16.mxu0 0
        %962 = vmatmul.mubr.bf16.gmra.mrb[0].mxu0 %v842
        %v963 = vpop.f32.mrb[0].mxu0
        %v964 = vadd.f32 %v808, %v963
        %v965 = vpop.f32.mrb[0].mxu0
        %v966 = vpop.f32.mrb[0].mxu0
        %v967 = vadd.f32 %v808, %v966
        %v968 = vpop.f32.mrb[0].mxu0
        %969 = vmatprep.mubr.bf16.mxu0 0
        %970 = vmatmul.mubr.bf16.gmra.mrb[0].mxu0 %v845
        %v971 = vpop.f32.mrb[0].mxu0
        %v972 = vadd.f32 %v808, %v971
        %v973 = vpop.f32.mrb[0].mxu0
        %v974 = vpop.f32.mrb[0].mxu0
        %v975 = vadd.f32 %v808, %v974
        %v976 = vpop.f32.mrb[0].mxu0
        %977 = vmatprep.mubr.bf16.mxu0 0
        %978 = vmatmul.mubr.bf16.gmra.mrb[0].mxu0 %v848
        %v979 = vpop.f32.mrb[0].mxu0
        %v980 = vadd.f32 %v808, %v979
        %v981 = vpop.f32.mrb[0].mxu0
        %v982 = vpop.f32.mrb[0].mxu0
        %v983 = vadd.f32 %v808, %v982
        %v984 = vpop.f32.mrb[0].mxu0
        %985 = vmatprep.mubr.bf16.mxu0 0
        %986 = vmatmul.mubr.bf16.gmra.mrb[0].mxu0 %v851
        %v987 = vpop.f32.mrb[0].mxu0
        %v988 = vadd.f32 %v808, %v987
        %v989 = vpop.f32.mrb[0].mxu0
        %v990 = vpop.f32.mrb[0].mxu0
        %v991 = vadd.f32 %v808, %v990
        %v992 = vpop.f32.mrb[0].mxu0
        %993 = vmatprep.mubr.bf16.mxu0 0
        %994 = vmatmul.mubr.bf16.gmra.mrb[0].mxu0 %v854
        %v995 = vpop.f32.mrb[0].mxu0
        %v996 = vadd.f32 %v808, %v995
        %v997 = vpop.f32.mrb[0].mxu0
        %v998 = vpop.f32.mrb[0].mxu0
        %v999 = vadd.f32 %v808, %v998
        %v1000 = vpop.f32.mrb[0].mxu0
        %1001 = vmatprep.mubr.bf16.mxu0 0
        %1002 = vmatmul.mubr.bf16.gmra.mrb[0].mxu0 %v857
        %v1003 = vpop.f32.mrb[0].mxu0
        %v1004 = vadd.f32 %v808, %v1003
        %v1005 = vpop.f32.mrb[0].mxu0
        %v1006 = vpop.f32.mrb[0].mxu0
        %v1007 = vadd.f32 %v808, %v1006
        %v1008 = vpop.f32.mrb[0].mxu0
        %1009 = vmatprep.mubr.bf16.mxu0 0
        %1010 = vmatmul.mubr.bf16.gmra.mrb[0].mxu0 %v860
        %v1011 = vpop.f32.mrb[0].mxu0
        %v1012 = vadd.f32 %v808, %v1011
        %v1013 = vpop.f32.mrb[0].mxu0
        %v1014 = vpop.f32.mrb[0].mxu0
        %v1015 = vadd.f32 %v808, %v1014
        %v1016 = vpop.f32.mrb[0].mxu0
        %1017 = vmatprep.mubr.bf16.mxu0 0
        %1018 = vmatmul.mubr.bf16.gmra.mrb[0].mxu0 %v863
        %v1019 = vpop.f32.mrb[0].mxu0
        %v1020 = vadd.f32 %v808, %v1019
        %v1021 = vpop.f32.mrb[0].mxu0
        %v1022 = vpop.f32.mrb[0].mxu0
        %v1023 = vadd.f32 %v808, %v1022
        %v1024 = vpop.f32.mrb[0].mxu0
        %1025 = vdwg.mxu0
        %v1026 = vld [vmem:[#allocation3] sm:$0x1]
        %vm1027 = vcmask 261120
        %v1028 = vsel %vm1027, %v900, -inf
        %v1029 = vsel %vm1027, %v903, -inf
        %v1030 = vsel %vm1027, %v908, -inf
        %v1031 = vsel %vm1027, %v911, -inf
        %v1032 = vsel %vm1027, %v916, -inf
        %v1033 = vmax.f32 %v1028, %v1032
        %v1034 = vsel %vm1027, %v919, -inf
        %v1035 = vmax.f32 %v1029, %v1034
        %v1036 = vsel %vm1027, %v924, -inf
        %v1037 = vmax.f32 %v1030, %v1036
        %v1038 = vsel %vm1027, %v927, -inf
        %v1039 = vmax.f32 %v1031, %v1038
        %v1040 = vsel %vm1027, %v932, -inf
        %v1041 = vmax.f32 %v1033, %v1040
        %v1042 = vsel %vm1027, %v935, -inf
        %v1043 = vmax.f32 %v1035, %v1042
        %v1044 = vsel %vm1027, %v940, -inf
        %v1045 = vmax.f32 %v1037, %v1044
        %v1046 = vsel %vm1027, %v943, -inf
        %v1047 = vmax.f32 %v1039, %v1046
        %v1048 = vsel %vm1027, %v948, -inf
        %v1049 = vmax.f32 %v1041, %v1048
        %v1050 = vsel %vm1027, %v951, -inf
        %v1051 = vmax.f32 %v1043, %v1050
        %v1052 = vsel %vm1027, %v956, -inf
        %v1053 = vmax.f32 %v1045, %v1052
        %v1054 = vsel %vm1027, %v959, -inf
        %v1055 = vmax.f32 %v1047, %v1054
        %v1056 = vsel %vm1027, %v964, -inf
        %v1057 = vmax.f32 %v1049, %v1056
        %v1058 = vsel %vm1027, %v967, -inf
        %v1059 = vmax.f32 %v1051, %v1058
        %v1060 = vsel %vm1027, %v972, -inf
        %v1061 = vmax.f32 %v1053, %v1060
        %v1062 = vsel %vm1027, %v975, -inf
        %v1063 = vmax.f32 %v1055, %v1062
        %v1064 = vsel %vm1027, %v980, -inf
        %v1065 = vmax.f32 %v1057, %v1064
        %v1066 = vsel %vm1027, %v983, -inf
        %v1067 = vmax.f32 %v1059, %v1066
        %v1068 = vsel %vm1027, %v988, -inf
        %v1069 = vmax.f32 %v1061, %v1068
        %v1070 = vsel %vm1027, %v991, -inf
        %v1071 = vmax.f32 %v1063, %v1070
        %v1072 = vsel %vm1027, %v996, -inf
        %v1073 = vmax.f32 %v1065, %v1072
        %v1074 = vsel %vm1027, %v999, -inf
        %v1075 = vmax.f32 %v1067, %v1074
        %v1076 = vsel %vm1027, %v1004, -inf
        %v1077 = vmax.f32 %v1069, %v1076
        %v1078 = vsel %vm1027, %v1007, -inf
        %v1079 = vmax.f32 %v1071, %v1078
        %v1080 = vsel %vm1027, %v1012, -inf
        %v1081 = vmax.f32 %v1073, %v1080
        %v1082 = vsel %vm1027, %v1015, -inf
        %v1083 = vmax.f32 %v1075, %v1082
        %v1084 = vsel %vm1027, %v1020, -inf
        %v1085 = vmax.f32 %v1077, %v1084
        %v1086 = vsel %vm1027, %v1023, -inf
        %v1087 = vmax.f32 %v1079, %v1086
        %v1088 = vmax.f32 %v1081, %v1083
        %v1089 = vmax.f32 %v1085, %v1087
        %v1090 = vmax.f32 %v1088, %v1089
        %v1091 = vrot.slane %v1090, 4
        %v1092 = vmax.f32 %v1090, %v1091
        %v1093 = vrot.slane %v1092, 2
        %v1094 = vmax.f32 %v1092, %v1093
        %v1095 = vrot.slane %v1094, 1
        %v1096 = vmax.f32 %v1094, %v1095
        %v1097 = vmax.f32 %v1026, %v1096
        %vm1098 = vcmask 253952
        %1099 = vst.msk [vmem:[#allocation3] sm:$0x1] %vm1098, %v1097
        %v1100 = vpack.c.bf16 %v903, %v900
        %v1101 = vpack.c.bf16 %v911, %v908
        %v1102 = vpack.c.bf16 %v919, %v916
        %v1103 = vpack.c.bf16 %v927, %v924
        %v1104 = vpack.c.bf16 %v935, %v932
        %v1105 = vpack.c.bf16 %v943, %v940
        %v1106 = vpack.c.bf16 %v951, %v948
        %v1107 = vpack.c.bf16 %v959, %v956
        %v1108 = vpack.c.bf16 %v967, %v964
        %v1109 = vpack.c.bf16 %v975, %v972
        %v1110 = vpack.c.bf16 %v983, %v980
        %v1111 = vpack.c.bf16 %v991, %v988
        %v1112 = vpack.c.bf16 %v999, %v996
        %v1113 = vpack.c.bf16 %v1007, %v1004
        %v1114 = vpack.c.bf16 %v1015, %v1012
        %v1115 = vpack.c.bf16 %v1023, %v1020
        %s1116 = smul.u32 %s28, 16
        %s1117 = smul.addr %s1116, 8
        %s1118 = scalar_lea.vmem [#allocation2], %s1117
        %1119 = vst.msk [vmem:[%s1118] sm:$0xff] %vm1027, %v1100
        %1120 = vst.msk [vmem:[%s1118 + $0x8] sm:$0xff] %vm1027, %v1101
        %1121 = vst.msk [vmem:[%s1118 + $0x10] sm:$0xff] %vm1027, %v1102
        %1122 = vst.msk [vmem:[%s1118 + $0x18] sm:$0xff] %vm1027, %v1103
        %1123 = vst.msk [vmem:[%s1118 + $0x20] sm:$0xff] %vm1027, %v1104
        %1124 = vst.msk [vmem:[%s1118 + $0x28] sm:$0xff] %vm1027, %v1105
        %1125 = vst.msk [vmem:[%s1118 + $0x30] sm:$0xff] %vm1027, %v1106
        %1126 = vst.msk [vmem:[%s1118 + $0x38] sm:$0xff] %vm1027, %v1107
        %1127 = vst.msk [vmem:[%s1118 + $0x40] sm:$0xff] %vm1027, %v1108
        %1128 = vst.msk [vmem:[%s1118 + $0x48] sm:$0xff] %vm1027, %v1109
        %1129 = vst.msk [vmem:[%s1118 + $0x50] sm:$0xff] %vm1027, %v1110
        %1130 = vst.msk [vmem:[%s1118 + $0x58] sm:$0xff] %vm1027, %v1111
        %1131 = vst.msk [vmem:[%s1118 + $0x60] sm:$0xff] %vm1027, %v1112
        %1132 = vst.msk [vmem:[%s1118 + $0x68] sm:$0xff] %vm1027, %v1113
        %1133 = vst.msk [vmem:[%s1118 + $0x70] sm:$0xff] %vm1027, %v1114
        %1134 = vst.msk [vmem:[%s1118 + $0x78] sm:$0xff] %vm1027, %v1115
      $region64: #{foldingnet_forward.2} parent=59 // pred_fallthru
        _
      %p1135 = scmp.eq.s32.totalorder %s27, 1
      // Predicated region
      $region69: #{foldingnet_forward.2} parent=59 // pred_check
        %p1136 = pneg %p1135
      $region70: #{foldingnet_forward.2} parent=59 // pred_check_branch
        %1138 = sbr.rel (%p1136) target = $region72
      $region71: #{foldingnet_forward.2} parent=59 // pred_region
        %p1139 = scmp.eq.s32.totalorder %s28, 0
        // Predicated region
        $region73: #{foldingnet_forward.2} parent=71 // pred_check
          %p1140 = pneg %p1139
        $region74: #{foldingnet_forward.2} parent=71 // pred_check_branch
          %1142 = sbr.rel (%p1140) target = $region76
        $region75: #{foldingnet_forward.2} parent=71 // pred_region
          %vm1143 = vcmask 516096
          %1144 = vst.msk [vmem:[#allocation5] sm:$0x1] %vm1143, -inf
          %v1145 = vld [vmem:[#allocation3] sm:$0x1]
          %v1146 = vpack.c.bf16 %v1145, %v1145
          %v1147 = vld [vmem:[%s6] sm:$0xf]
          %v1148 = vld [vmem:[%s6 + $0x4] sm:$0xf]
          %v1149 = vld [vmem:[%s6 + $0x8] sm:$0xf]
          %v1150 = vld [vmem:[%s6 + $0xc] sm:$0xf]
          %v1151 = vld [vmem:[%s7] sm:$0x1]
          %v1156 = vunpack.c.l.b16 %v1147
          %v1157 = vunpack.c.l.b16 %v1148
          %v1158 = vunpack.c.l.b16 %v1149
          %v1159 = vunpack.c.l.b16 %v1150
          %v1160 = vpack.c.b16 %v1157, %v1156
          %v1161 = vpack.c.b16 %v1159, %v1158
          %vm1164 = vcmask 261120
          %v1166 = vsel %vm1164, %v1146, 0
          %1168 = vmatprep.subr.bf16.mxu0 0
          %1169 = vmatpush1.bf16.msra.mxu0 %v1160
          %1170 = vmatprep.subr.bf16.mxu0 0
          %1171 = vmatpush1.bf16.msra.mxu0 %v1161
          %1172 = vmatprep.subr.bf16.mxu0 0
          %1173 = vmatpush1.bf16.msra.mxu0 0
          %1174 = vmatprep.subr.bf16.mxu0 0
          %1175 = vmatpush1.bf16.msra.mxu0 0
          %1176 = vmatprep.subr.bf16.mxu0 0
          %1177 = vmatpush1.bf16.msra.mxu0 0
          %1178 = vmatprep.subr.bf16.mxu0 0
          %1179 = vmatpush1.bf16.msra.mxu0 0
          %1180 = vmatprep.subr.bf16.mxu0 0
          %1181 = vmatpush1.bf16.msra.mxu0 0
          %1182 = vmatprep.subr.bf16.mxu0 0
          %1183 = vmatpush1.bf16.msra.mxu0 0
          %1184 = vmatprep.subr.bf16.mxu0 0
          %1185 = vmatpush1.bf16.msra.mxu0 0
          %1186 = vmatprep.subr.bf16.mxu0 0
          %1187 = vmatpush1.bf16.msra.mxu0 0
          %1188 = vmatprep.subr.bf16.mxu0 0
          %1189 = vmatpush1.bf16.msra.mxu0 0
          %1190 = vmatprep.subr.bf16.mxu0 0
          %1191 = vmatpush1.bf16.msra.mxu0 0
          %1192 = vmatprep.subr.bf16.mxu0 0
          %1193 = vmatpush1.bf16.msra.mxu0 0
          %1194 = vmatprep.subr.bf16.mxu0 0
          %1195 = vmatpush1.bf16.msra.mxu0 0
          %1196 = vmatprep.subr.bf16.mxu0 0
          %1197 = vmatpush1.bf16.msra.mxu0 0
          %1198 = vmatprep.subr.bf16.mxu0 0
          %1199 = vmatpush1.bf16.msra.mxu0 0
          %1200 = vmatprep.mubr.bf16.mxu0 0
          %1201 = vmatmul.mubr.bf16.gmra.mrb[0].mxu0 %v1166
          %v1202 = vpop.f32.mrb[0].mxu0
          %v1203 = vadd.f32 %v1151, %v1202
          %v1204 = vpop.f32.mrb[0].mxu0
          %v1205 = vpop.f32.mrb[0].mxu0
          %v1206 = vpop.f32.mrb[0].mxu0
          %1207 = vdwg.mxu0
          %1208 = vst.msk [vmem:[#allocation4] sm:$0x1] %vm1143, %v1203
        $region76: #{foldingnet_forward.2} parent=71 // pred_fallthru
          _
        %s1209 = smul.u32 %s28, 16
        %s1210 = smul.addr %s1209, 8
        %s1211 = scalar_lea.vmem [#allocation2], %s1210
        %v1212 = vld [vmem:[%s1211] sm:$0xff]
        %v1213 = vld [vmem:[%s1211 + $0x8] sm:$0xff]
        %v1214 = vld [vmem:[%s1211 + $0x10] sm:$0xff]
        %v1215 = vld [vmem:[%s1211 + $0x18] sm:$0xff]
        %v1216 = vld [vmem:[%s1211 + $0x20] sm:$0xff]
        %v1217 = vld [vmem:[%s1211 + $0x28] sm:$0xff]
        %v1218 = vld [vmem:[%s1211 + $0x30] sm:$0xff]
        %v1219 = vld [vmem:[%s1211 + $0x38] sm:$0xff]
        %v1220 = vld [vmem:[%s1211 + $0x40] sm:$0xff]
        %v1221 = vld [vmem:[%s1211 + $0x48] sm:$0xff]
        %v1222 = vld [vmem:[%s1211 + $0x50] sm:$0xff]
        %v1223 = vld [vmem:[%s1211 + $0x58] sm:$0xff]
        %v1224 = vld [vmem:[%s1211 + $0x60] sm:$0xff]
        %v1225 = vld [vmem:[%s1211 + $0x68] sm:$0xff]
        %v1226 = vld [vmem:[%s1211 + $0x70] sm:$0xff]
        %v1227 = vld [vmem:[%s1211 + $0x78] sm:$0xff]
        %v1228 = vld [vmem:[%s5] sm:$0xf]
        %v1229 = vld [vmem:[%s5 + $0x4] sm:$0xf]
        %v1230 = vld [vmem:[%s5 + $0x8] sm:$0xf]
        %v1231 = vld [vmem:[%s5 + $0xc] sm:$0xf]
        %v1232 = vld [vmem:[#allocation4] sm:$0x1]
        %v1234 = vlaneseq
        %v1235 = vshrl.u32 %v1234, 7
        %v1236 = vsub.s32 0, %v1235
        %v1237 = vrot.slane %v1232, %v1236
        %v1243 = vunpack.c.l.b16 %v1228
        %v1244 = vunpack.c.l.b16 %v1229
        %v1245 = vunpack.c.l.b16 %v1230
        %v1246 = vunpack.c.l.b16 %v1231
        %v1247 = vpack.c.b16 %v1244, %v1243
        %v1248 = vpack.c.b16 %v1246, %v1245
        %vm1251 = vcmask 261120
        %v1253 = vsel %vm1251, %v1212, 0
        %v1256 = vsel %vm1251, %v1213, 0
        %v1259 = vsel %vm1251, %v1214, 0
        %v1262 = vsel %vm1251, %v1215, 0
        %v1265 = vsel %vm1251, %v1216, 0
        %v1268 = vsel %vm1251, %v1217, 0
        %v1271 = vsel %vm1251, %v1218, 0
        %v1274 = vsel %vm1251, %v1219, 0
        %v1277 = vsel %vm1251, %v1220, 0
        %v1280 = vsel %vm1251, %v1221, 0
        %v1283 = vsel %vm1251, %v1222, 0
        %v1286 = vsel %vm1251, %v1223, 0
        %v1289 = vsel %vm1251, %v1224, 0
        %v1292 = vsel %vm1251, %v1225, 0
        %v1295 = vsel %vm1251, %v1226, 0
        %v1298 = vsel %vm1251, %v1227, 0
        %1300 = vmatprep.subr.bf16.mxu0 0
        %1301 = vmatpush1.bf16.msra.mxu0 %v1247
        %1302 = vmatprep.subr.bf16.mxu0 0
        %1303 = vmatpush1.bf16.msra.mxu0 %v1248
        %1304 = vmatprep.subr.bf16.mxu0 0
        %1305 = vmatpush1.bf16.msra.mxu0 0
        %1306 = vmatprep.subr.bf16.mxu0 0
        %1307 = vmatpush1.bf16.msra.mxu0 0
        %1308 = vmatprep.subr.bf16.mxu0 0
        %1309 = vmatpush1.bf16.msra.mxu0 0
        %1310 = vmatprep.subr.bf16.mxu0 0
        %1311 = vmatpush1.bf16.msra.mxu0 0
        %1312 = vmatprep.subr.bf16.mxu0 0
        %1313 = vmatpush1.bf16.msra.mxu0 0
        %1314 = vmatprep.subr.bf16.mxu0 0
        %1315 = vmatpush1.bf16.msra.mxu0 0
        %1316 = vmatprep.subr.bf16.mxu0 0
        %1317 = vmatpush1.bf16.msra.mxu0 0
        %1318 = vmatprep.subr.bf16.mxu0 0
        %1319 = vmatpush1.bf16.msra.mxu0 0
        %1320 = vmatprep.subr.bf16.mxu0 0
        %1321 = vmatpush1.bf16.msra.mxu0 0
        %1322 = vmatprep.subr.bf16.mxu0 0
        %1323 = vmatpush1.bf16.msra.mxu0 0
        %1324 = vmatprep.subr.bf16.mxu0 0
        %1325 = vmatpush1.bf16.msra.mxu0 0
        %1326 = vmatprep.subr.bf16.mxu0 0
        %1327 = vmatpush1.bf16.msra.mxu0 0
        %1328 = vmatprep.subr.bf16.mxu0 0
        %1329 = vmatpush1.bf16.msra.mxu0 0
        %1330 = vmatprep.subr.bf16.mxu0 0
        %1331 = vmatpush1.bf16.msra.mxu0 0
        %1332 = vmatprep.mubr.bf16.mxu0 0
        %1333 = vmatmul.mubr.bf16.gmra.mrb[0].mxu0 %v1253
        %v1334 = vpop.f32.mrb[0].mxu0
        %v1335 = vadd.f32 %v1237, %v1334
        %v1336 = vpop.f32.mrb[0].mxu0
        %v1337 = vpop.f32.mrb[0].mxu0
        %v1338 = vadd.f32 %v1237, %v1337
        %v1339 = vpop.f32.mrb[0].mxu0
        %1340 = vmatprep.mubr.bf16.mxu0 0
        %1341 = vmatmul.mubr.bf16.gmra.mrb[0].mxu0 %v1256
        %v1342 = vpop.f32.mrb[0].mxu0
        %v1343 = vadd.f32 %v1237, %v1342
        %v1344 = vpop.f32.mrb[0].mxu0
        %v1345 = vpop.f32.mrb[0].mxu0
        %v1346 = vadd.f32 %v1237, %v1345
        %v1347 = vpop.f32.mrb[0].mxu0
        %1348 = vmatprep.mubr.bf16.mxu0 0
        %1349 = vmatmul.mubr.bf16.gmra.mrb[0].mxu0 %v1259
        %v1350 = vpop.f32.mrb[0].mxu0
        %v1351 = vadd.f32 %v1237, %v1350
        %v1352 = vpop.f32.mrb[0].mxu0
        %v1353 = vpop.f32.mrb[0].mxu0
        %v1354 = vadd.f32 %v1237, %v1353
        %v1355 = vpop.f32.mrb[0].mxu0
        %1356 = vmatprep.mubr.bf16.mxu0 0
        %1357 = vmatmul.mubr.bf16.gmra.mrb[0].mxu0 %v1262
        %v1358 = vpop.f32.mrb[0].mxu0
        %v1359 = vadd.f32 %v1237, %v1358
        %v1360 = vpop.f32.mrb[0].mxu0
        %v1361 = vpop.f32.mrb[0].mxu0
        %v1362 = vadd.f32 %v1237, %v1361
        %v1363 = vpop.f32.mrb[0].mxu0
        %1364 = vmatprep.mubr.bf16.mxu0 0
        %1365 = vmatmul.mubr.bf16.gmra.mrb[0].mxu0 %v1265
        %v1366 = vpop.f32.mrb[0].mxu0
        %v1367 = vadd.f32 %v1237, %v1366
        %v1368 = vpop.f32.mrb[0].mxu0
        %v1369 = vpop.f32.mrb[0].mxu0
        %v1370 = vadd.f32 %v1237, %v1369
        %v1371 = vpop.f32.mrb[0].mxu0
        %1372 = vmatprep.mubr.bf16.mxu0 0
        %1373 = vmatmul.mubr.bf16.gmra.mrb[0].mxu0 %v1268
        %v1374 = vpop.f32.mrb[0].mxu0
        %v1375 = vadd.f32 %v1237, %v1374
        %v1376 = vpop.f32.mrb[0].mxu0
        %v1377 = vpop.f32.mrb[0].mxu0
        %v1378 = vadd.f32 %v1237, %v1377
        %v1379 = vpop.f32.mrb[0].mxu0
        %1380 = vmatprep.mubr.bf16.mxu0 0
        %1381 = vmatmul.mubr.bf16.gmra.mrb[0].mxu0 %v1271
        %v1382 = vpop.f32.mrb[0].mxu0
        %v1383 = vadd.f32 %v1237, %v1382
        %v1384 = vpop.f32.mrb[0].mxu0
        %v1385 = vpop.f32.mrb[0].mxu0
        %v1386 = vadd.f32 %v1237, %v1385
        %v1387 = vpop.f32.mrb[0].mxu0
        %1388 = vmatprep.mubr.bf16.mxu0 0
        %1389 = vmatmul.mubr.bf16.gmra.mrb[0].mxu0 %v1274
        %v1390 = vpop.f32.mrb[0].mxu0
        %v1391 = vadd.f32 %v1237, %v1390
        %v1392 = vpop.f32.mrb[0].mxu0
        %v1393 = vpop.f32.mrb[0].mxu0
        %v1394 = vadd.f32 %v1237, %v1393
        %v1395 = vpop.f32.mrb[0].mxu0
        %1396 = vmatprep.mubr.bf16.mxu0 0
        %1397 = vmatmul.mubr.bf16.gmra.mrb[0].mxu0 %v1277
        %v1398 = vpop.f32.mrb[0].mxu0
        %v1399 = vadd.f32 %v1237, %v1398
        %v1400 = vpop.f32.mrb[0].mxu0
        %v1401 = vpop.f32.mrb[0].mxu0
        %v1402 = vadd.f32 %v1237, %v1401
        %v1403 = vpop.f32.mrb[0].mxu0
        %1404 = vmatprep.mubr.bf16.mxu0 0
        %1405 = vmatmul.mubr.bf16.gmra.mrb[0].mxu0 %v1280
        %v1406 = vpop.f32.mrb[0].mxu0
        %v1407 = vadd.f32 %v1237, %v1406
        %v1408 = vpop.f32.mrb[0].mxu0
        %v1409 = vpop.f32.mrb[0].mxu0
        %v1410 = vadd.f32 %v1237, %v1409
        %v1411 = vpop.f32.mrb[0].mxu0
        %1412 = vmatprep.mubr.bf16.mxu0 0
        %1413 = vmatmul.mubr.bf16.gmra.mrb[0].mxu0 %v1283
        %v1414 = vpop.f32.mrb[0].mxu0
        %v1415 = vadd.f32 %v1237, %v1414
        %v1416 = vpop.f32.mrb[0].mxu0
        %v1417 = vpop.f32.mrb[0].mxu0
        %v1418 = vadd.f32 %v1237, %v1417
        %v1419 = vpop.f32.mrb[0].mxu0
        %1420 = vmatprep.mubr.bf16.mxu0 0
        %1421 = vmatmul.mubr.bf16.gmra.mrb[0].mxu0 %v1286
        %v1422 = vpop.f32.mrb[0].mxu0
        %v1423 = vadd.f32 %v1237, %v1422
        %v1424 = vpop.f32.mrb[0].mxu0
        %v1425 = vpop.f32.mrb[0].mxu0
        %v1426 = vadd.f32 %v1237, %v1425
        %v1427 = vpop.f32.mrb[0].mxu0
        %1428 = vmatprep.mubr.bf16.mxu0 0
        %1429 = vmatmul.mubr.bf16.gmra.mrb[0].mxu0 %v1289
        %v1430 = vpop.f32.mrb[0].mxu0
        %v1431 = vadd.f32 %v1237, %v1430
        %v1432 = vpop.f32.mrb[0].mxu0
        %v1433 = vpop.f32.mrb[0].mxu0
        %v1434 = vadd.f32 %v1237, %v1433
        %v1435 = vpop.f32.mrb[0].mxu0
        %1436 = vmatprep.mubr.bf16.mxu0 0
        %1437 = vmatmul.mubr.bf16.gmra.mrb[0].mxu0 %v1292
        %v1438 = vpop.f32.mrb[0].mxu0
        %v1439 = vadd.f32 %v1237, %v1438
        %v1440 = vpop.f32.mrb[0].mxu0
        %v1441 = vpop.f32.mrb[0].mxu0
        %v1442 = vadd.f32 %v1237, %v1441
        %v1443 = vpop.f32.mrb[0].mxu0
        %1444 = vmatprep.mubr.bf16.mxu0 0
        %1445 = vmatmul.mubr.bf16.gmra.mrb[0].mxu0 %v1295
        %v1446 = vpop.f32.mrb[0].mxu0
        %v1447 = vadd.f32 %v1237, %v1446
        %v1448 = vpop.f32.mrb[0].mxu0
        %v1449 = vpop.f32.mrb[0].mxu0
        %v1450 = vadd.f32 %v1237, %v1449
        %v1451 = vpop.f32.mrb[0].mxu0
        %1452 = vmatprep.mubr.bf16.mxu0 0
        %1453 = vmatmul.mubr.bf16.gmra.mrb[0].mxu0 %v1298
        %v1454 = vpop.f32.mrb[0].mxu0
        %v1455 = vadd.f32 %v1237, %v1454
        %v1456 = vpop.f32.mrb[0].mxu0
        %v1457 = vpop.f32.mrb[0].mxu0
        %v1458 = vadd.f32 %v1237, %v1457
        %v1459 = vpop.f32.mrb[0].mxu0
        %1460 = vdwg.mxu0
        %v1461 = vmax.f32 %v1335, 0.0
        %v1462 = vmax.f32 %v1338, 0.0
        %v1463 = vmax.f32 %v1343, 0.0
        %v1464 = vmax.f32 %v1346, 0.0
        %v1465 = vmax.f32 %v1351, 0.0
        %v1466 = vmax.f32 %v1354, 0.0
        %v1467 = vmax.f32 %v1359, 0.0
        %v1468 = vmax.f32 %v1362, 0.0
        %v1469 = vmax.f32 %v1367, 0.0
        %v1470 = vmax.f32 %v1370, 0.0
        %v1471 = vmax.f32 %v1375, 0.0
        %v1472 = vmax.f32 %v1378, 0.0
        %v1473 = vmax.f32 %v1383, 0.0
        %v1474 = vmax.f32 %v1386, 0.0
        %v1475 = vmax.f32 %v1391, 0.0
        %v1476 = vmax.f32 %v1394, 0.0
        %v1477 = vmax.f32 %v1399, 0.0
        %v1478 = vmax.f32 %v1402, 0.0
        %v1479 = vmax.f32 %v1407, 0.0
        %v1480 = vmax.f32 %v1410, 0.0
        %v1481 = vmax.f32 %v1415, 0.0
        %v1482 = vmax.f32 %v1418, 0.0
        %v1483 = vmax.f32 %v1423, 0.0
        %v1484 = vmax.f32 %v1426, 0.0
        %v1485 = vmax.f32 %v1431, 0.0
        %v1486 = vmax.f32 %v1434, 0.0
        %v1487 = vmax.f32 %v1439, 0.0
        %v1488 = vmax.f32 %v1442, 0.0
        %v1489 = vmax.f32 %v1447, 0.0
        %v1490 = vmax.f32 %v1450, 0.0
        %v1491 = vmax.f32 %v1455, 0.0
        %v1492 = vmax.f32 %v1458, 0.0
        %v1493 = vpack.c.bf16 %v1462, %v1461
        %v1494 = vpack.c.bf16 %v1464, %v1463
        %v1495 = vpack.c.bf16 %v1466, %v1465
        %v1496 = vpack.c.bf16 %v1468, %v1467
        %v1497 = vpack.c.bf16 %v1470, %v1469
        %v1498 = vpack.c.bf16 %v1472, %v1471
        %v1499 = vpack.c.bf16 %v1474, %v1473
        %v1500 = vpack.c.bf16 %v1476, %v1475
        %v1501 = vpack.c.bf16 %v1478, %v1477
        %v1502 = vpack.c.bf16 %v1480, %v1479
        %v1503 = vpack.c.bf16 %v1482, %v1481
        %v1504 = vpack.c.bf16 %v1484, %v1483
        %v1505 = vpack.c.bf16 %v1486, %v1485
        %v1506 = vpack.c.bf16 %v1488, %v1487
        %v1507 = vpack.c.bf16 %v1490, %v1489
        %v1508 = vpack.c.bf16 %v1492, %v1491
        %v1509 = vld [vmem:[%s8] sm:$0xf]
        %v1510 = vld [vmem:[%s8 + $0x4] sm:$0xf]
        %v1511 = vld [vmem:[%s8 + $0x8] sm:$0xf]
        %v1512 = vld [vmem:[%s8 + $0xc] sm:$0xf]
        %v1513 = vld [vmem:[%s8 + $0x10] sm:$0xf]
        %v1514 = vld [vmem:[%s8 + $0x14] sm:$0xf]
        %v1515 = vld [vmem:[%s8 + $0x18] sm:$0xf]
        %v1516 = vld [vmem:[%s8 + $0x1c] sm:$0xf]
        %v1517 = vld [vmem:[%s9] sm:$0x1]
        %v1519 = vlaneseq
        %v1520 = vshrl.u32 %v1519, 7
        %v1521 = vsub.s32 0, %v1520
        %v1522 = vrot.slane %v1517, %v1521
        %v1532 = vunpack.c.l.b16 %v1509
        %v1533 = vunpack.c.l.b16 %v1510
        %v1534 = vunpack.c.l.b16 %v1511
        %v1535 = vunpack.c.l.b16 %v1512
        %v1536 = vunpack.c.l.b16 %v1513
        %v1537 = vunpack.c.l.b16 %v1514
        %v1538 = vunpack.c.l.b16 %v1515
        %v1539 = vunpack.c.l.b16 %v1516
        %v1540 = vpack.c.b16 %v1533, %v1532
        %v1541 = vpack.c.b16 %v1535, %v1534
        %v1542 = vpack.c.b16 %v1537, %v1536
        %v1543 = vpack.c.b16 %v1539, %v1538
        %vm1548 = vcmask 523264
        %v1550 = vsel %vm1548, %v1493, 0
        %v1553 = vsel %vm1548, %v1494, 0
        %v1556 = vsel %vm1548, %v1495, 0
        %v1559 = vsel %vm1548, %v1496, 0
        %v1562 = vsel %vm1548, %v1497, 0
        %v1565 = vsel %vm1548, %v1498, 0
        %v1568 = vsel %vm1548, %v1499, 0
        %v1571 = vsel %vm1548, %v1500, 0
        %v1574 = vsel %vm1548, %v1501, 0
        %v1577 = vsel %vm1548, %v1502, 0
        %v1580 = vsel %vm1548, %v1503, 0
        %v1583 = vsel %vm1548, %v1504, 0
        %v1586 = vsel %vm1548, %v1505, 0
        %v1589 = vsel %vm1548, %v1506, 0
        %v1592 = vsel %vm1548, %v1507, 0
        %v1595 = vsel %vm1548, %v1508, 0
        %1597 = vmatprep.subr.bf16.mxu0 0
        %1598 = vmatpush1.bf16.msra.mxu0 %v1540
        %1599 = vmatprep.subr.bf16.mxu0 0
        %1600 = vmatpush1.bf16.msra.mxu0 %v1541
        %1601 = vmatprep.subr.bf16.mxu0 0
        %1602 = vmatpush1.bf16.msra.mxu0 %v1542
        %1603 = vmatprep.subr.bf16.mxu0 0
        %1604 = vmatpush1.bf16.msra.mxu0 %v1543
        %1605 = vmatprep.subr.bf16.mxu0 0
        %1606 = vmatpush1.bf16.msra.mxu0 0
        %1607 = vmatprep.subr.bf16.mxu0 0
        %1608 = vmatpush1.bf16.msra.mxu0 0
        %1609 = vmatprep.subr.bf16.mxu0 0
        %1610 = vmatpush1.bf16.msra.mxu0 0
        %1611 = vmatprep.subr.bf16.mxu0 0
        %1612 = vmatpush1.bf16.msra.mxu0 0
        %1613 = vmatprep.subr.bf16.mxu0 0
        %1614 = vmatpush1.bf16.msra.mxu0 0
        %1615 = vmatprep.subr.bf16.mxu0 0
        %1616 = vmatpush1.bf16.msra.mxu0 0
        %1617 = vmatprep.subr.bf16.mxu0 0
        %1618 = vmatpush1.bf16.msra.mxu0 0
        %1619 = vmatprep.subr.bf16.mxu0 0
        %1620 = vmatpush1.bf16.msra.mxu0 0
        %1621 = vmatprep.subr.bf16.mxu0 0
        %1622 = vmatpush1.bf16.msra.mxu0 0
        %1623 = vmatprep.subr.bf16.mxu0 0
        %1624 = vmatpush1.bf16.msra.mxu0 0
        %1625 = vmatprep.subr.bf16.mxu0 0
        %1626 = vmatpush1.bf16.msra.mxu0 0
        %1627 = vmatprep.subr.bf16.mxu0 0
        %1628 = vmatpush1.bf16.msra.mxu0 0
        %1629 = vmatprep.mubr.bf16.mxu0 0
        %1630 = vmatmul.mubr.bf16.gmra.mrb[0].mxu0 %v1550
        %v1631 = vpop.f32.mrb[0].mxu0
        %v1632 = vadd.f32 %v1522, %v1631
        %v1633 = vpop.f32.mrb[0].mxu0
        %v1634 = vpop.f32.mrb[0].mxu0
        %v1635 = vadd.f32 %v1522, %v1634
        %v1636 = vpop.f32.mrb[0].mxu0
        %1637 = vmatprep.mubr.bf16.mxu0 0
        %1638 = vmatmul.mubr.bf16.gmra.mrb[0].mxu0 %v1553
        %v1639 = vpop.f32.mrb[0].mxu0
        %v1640 = vadd.f32 %v1522, %v1639
        %v1641 = vpop.f32.mrb[0].mxu0
        %v1642 = vpop.f32.mrb[0].mxu0
        %v1643 = vadd.f32 %v1522, %v1642
        %v1644 = vpop.f32.mrb[0].mxu0
        %1645 = vmatprep.mubr.bf16.mxu0 0
        %1646 = vmatmul.mubr.bf16.gmra.mrb[0].mxu0 %v1556
        %v1647 = vpop.f32.mrb[0].mxu0
        %v1648 = vadd.f32 %v1522, %v1647
        %v1649 = vpop.f32.mrb[0].mxu0
        %v1650 = vpop.f32.mrb[0].mxu0
        %v1651 = vadd.f32 %v1522, %v1650
        %v1652 = vpop.f32.mrb[0].mxu0
        %1653 = vmatprep.mubr.bf16.mxu0 0
        %1654 = vmatmul.mubr.bf16.gmra.mrb[0].mxu0 %v1559
        %v1655 = vpop.f32.mrb[0].mxu0
        %v1656 = vadd.f32 %v1522, %v1655
        %v1657 = vpop.f32.mrb[0].mxu0
        %v1658 = vpop.f32.mrb[0].mxu0
        %v1659 = vadd.f32 %v1522, %v1658
        %v1660 = vpop.f32.mrb[0].mxu0
        %1661 = vmatprep.mubr.bf16.mxu0 0
        %1662 = vmatmul.mubr.bf16.gmra.mrb[0].mxu0 %v1562
        %v1663 = vpop.f32.mrb[0].mxu0
        %v1664 = vadd.f32 %v1522, %v1663
        %v1665 = vpop.f32.mrb[0].mxu0
        %v1666 = vpop.f32.mrb[0].mxu0
        %v1667 = vadd.f32 %v1522, %v1666
        %v1668 = vpop.f32.mrb[0].mxu0
        %1669 = vmatprep.mubr.bf16.mxu0 0
        %1670 = vmatmul.mubr.bf16.gmra.mrb[0].mxu0 %v1565
        %v1671 = vpop.f32.mrb[0].mxu0
        %v1672 = vadd.f32 %v1522, %v1671
        %v1673 = vpop.f32.mrb[0].mxu0
        %v1674 = vpop.f32.mrb[0].mxu0
        %v1675 = vadd.f32 %v1522, %v1674
        %v1676 = vpop.f32.mrb[0].mxu0
        %1677 = vmatprep.mubr.bf16.mxu0 0
        %1678 = vmatmul.mubr.bf16.gmra.mrb[0].mxu0 %v1568
        %v1679 = vpop.f32.mrb[0].mxu0
        %v1680 = vadd.f32 %v1522, %v1679
        %v1681 = vpop.f32.mrb[0].mxu0
        %v1682 = vpop.f32.mrb[0].mxu0
        %v1683 = vadd.f32 %v1522, %v1682
        %v1684 = vpop.f32.mrb[0].mxu0
        %1685 = vmatprep.mubr.bf16.mxu0 0
        %1686 = vmatmul.mubr.bf16.gmra.mrb[0].mxu0 %v1571
        %v1687 = vpop.f32.mrb[0].mxu0
        %v1688 = vadd.f32 %v1522, %v1687
        %v1689 = vpop.f32.mrb[0].mxu0
        %v1690 = vpop.f32.mrb[0].mxu0
        %v1691 = vadd.f32 %v1522, %v1690
        %v1692 = vpop.f32.mrb[0].mxu0
        %1693 = vmatprep.mubr.bf16.mxu0 0
        %1694 = vmatmul.mubr.bf16.gmra.mrb[0].mxu0 %v1574
        %v1695 = vpop.f32.mrb[0].mxu0
        %v1696 = vadd.f32 %v1522, %v1695
        %v1697 = vpop.f32.mrb[0].mxu0
        %v1698 = vpop.f32.mrb[0].mxu0
        %v1699 = vadd.f32 %v1522, %v1698
        %v1700 = vpop.f32.mrb[0].mxu0
        %1701 = vmatprep.mubr.bf16.mxu0 0
        %1702 = vmatmul.mubr.bf16.gmra.mrb[0].mxu0 %v1577
        %v1703 = vpop.f32.mrb[0].mxu0
        %v1704 = vadd.f32 %v1522, %v1703
        %v1705 = vpop.f32.mrb[0].mxu0
        %v1706 = vpop.f32.mrb[0].mxu0
        %v1707 = vadd.f32 %v1522, %v1706
        %v1708 = vpop.f32.mrb[0].mxu0
        %1709 = vmatprep.mubr.bf16.mxu0 0
        %1710 = vmatmul.mubr.bf16.gmra.mrb[0].mxu0 %v1580
        %v1711 = vpop.f32.mrb[0].mxu0
        %v1712 = vadd.f32 %v1522, %v1711
        %v1713 = vpop.f32.mrb[0].mxu0
        %v1714 = vpop.f32.mrb[0].mxu0
        %v1715 = vadd.f32 %v1522, %v1714
        %v1716 = vpop.f32.mrb[0].mxu0
        %1717 = vmatprep.mubr.bf16.mxu0 0
        %1718 = vmatmul.mubr.bf16.gmra.mrb[0].mxu0 %v1583
        %v1719 = vpop.f32.mrb[0].mxu0
        %v1720 = vadd.f32 %v1522, %v1719
        %v1721 = vpop.f32.mrb[0].mxu0
        %v1722 = vpop.f32.mrb[0].mxu0
        %v1723 = vadd.f32 %v1522, %v1722
        %v1724 = vpop.f32.mrb[0].mxu0
        %1725 = vmatprep.mubr.bf16.mxu0 0
        %1726 = vmatmul.mubr.bf16.gmra.mrb[0].mxu0 %v1586
        %v1727 = vpop.f32.mrb[0].mxu0
        %v1728 = vadd.f32 %v1522, %v1727
        %v1729 = vpop.f32.mrb[0].mxu0
        %v1730 = vpop.f32.mrb[0].mxu0
        %v1731 = vadd.f32 %v1522, %v1730
        %v1732 = vpop.f32.mrb[0].mxu0
        %1733 = vmatprep.mubr.bf16.mxu0 0
        %1734 = vmatmul.mubr.bf16.gmra.mrb[0].mxu0 %v1589
        %v1735 = vpop.f32.mrb[0].mxu0
        %v1736 = vadd.f32 %v1522, %v1735
        %v1737 = vpop.f32.mrb[0].mxu0
        %v1738 = vpop.f32.mrb[0].mxu0
        %v1739 = vadd.f32 %v1522, %v1738
        %v1740 = vpop.f32.mrb[0].mxu0
        %1741 = vmatprep.mubr.bf16.mxu0 0
        %1742 = vmatmul.mubr.bf16.gmra.mrb[0].mxu0 %v1592
        %v1743 = vpop.f32.mrb[0].mxu0
        %v1744 = vadd.f32 %v1522, %v1743
        %v1745 = vpop.f32.mrb[0].mxu0
        %v1746 = vpop.f32.mrb[0].mxu0
        %v1747 = vadd.f32 %v1522, %v1746
        %v1748 = vpop.f32.mrb[0].mxu0
        %1749 = vmatprep.mubr.bf16.mxu0 0
        %1750 = vmatmul.mubr.bf16.gmra.mrb[0].mxu0 %v1595
        %v1751 = vpop.f32.mrb[0].mxu0
        %v1752 = vadd.f32 %v1522, %v1751
        %v1753 = vpop.f32.mrb[0].mxu0
        %v1754 = vpop.f32.mrb[0].mxu0
        %v1755 = vadd.f32 %v1522, %v1754
        %v1756 = vpop.f32.mrb[0].mxu0
        %1757 = vdwg.mxu0
        %v1758 = vld [vmem:[#allocation5] sm:$0x1]
        %v1759 = vsel %vm1548, %v1632, -inf
        %v1760 = vsel %vm1548, %v1635, -inf
        %v1761 = vsel %vm1548, %v1640, -inf
        %v1762 = vsel %vm1548, %v1643, -inf
        %v1763 = vsel %vm1548, %v1648, -inf
        %v1764 = vmax.f32 %v1759, %v1763
        %v1765 = vsel %vm1548, %v1651, -inf
        %v1766 = vmax.f32 %v1760, %v1765
        %v1767 = vsel %vm1548, %v1656, -inf
        %v1768 = vmax.f32 %v1761, %v1767
        %v1769 = vsel %vm1548, %v1659, -inf
        %v1770 = vmax.f32 %v1762, %v1769
        %v1771 = vsel %vm1548, %v1664, -inf
        %v1772 = vmax.f32 %v1764, %v1771
        %v1773 = vsel %vm1548, %v1667, -inf
        %v1774 = vmax.f32 %v1766, %v1773
        %v1775 = vsel %vm1548, %v1672, -inf
        %v1776 = vmax.f32 %v1768, %v1775
        %v1777 = vsel %vm1548, %v1675, -inf
        %v1778 = vmax.f32 %v1770, %v1777
        %v1779 = vsel %vm1548, %v1680, -inf
        %v1780 = vmax.f32 %v1772, %v1779
        %v1781 = vsel %vm1548, %v1683, -inf
        %v1782 = vmax.f32 %v1774, %v1781
        %v1783 = vsel %vm1548, %v1688, -inf
        %v1784 = vmax.f32 %v1776, %v1783
        %v1785 = vsel %vm1548, %v1691, -inf
        %v1786 = vmax.f32 %v1778, %v1785
        %v1787 = vsel %vm1548, %v1696, -inf
        %v1788 = vmax.f32 %v1780, %v1787
        %v1789 = vsel %vm1548, %v1699, -inf
        %v1790 = vmax.f32 %v1782, %v1789
        %v1791 = vsel %vm1548, %v1704, -inf
        %v1792 = vmax.f32 %v1784, %v1791
        %v1793 = vsel %vm1548, %v1707, -inf
        %v1794 = vmax.f32 %v1786, %v1793
        %v1795 = vsel %vm1548, %v1712, -inf
        %v1796 = vmax.f32 %v1788, %v1795
        %v1797 = vsel %vm1548, %v1715, -inf
        %v1798 = vmax.f32 %v1790, %v1797
        %v1799 = vsel %vm1548, %v1720, -inf
        %v1800 = vmax.f32 %v1792, %v1799
        %v1801 = vsel %vm1548, %v1723, -inf
        %v1802 = vmax.f32 %v1794, %v1801
        %v1803 = vsel %vm1548, %v1728, -inf
        %v1804 = vmax.f32 %v1796, %v1803
        %v1805 = vsel %vm1548, %v1731, -inf
        %v1806 = vmax.f32 %v1798, %v1805
        %v1807 = vsel %vm1548, %v1736, -inf
        %v1808 = vmax.f32 %v1800, %v1807
        %v1809 = vsel %vm1548, %v1739, -inf
        %v1810 = vmax.f32 %v1802, %v1809
        %v1811 = vsel %vm1548, %v1744, -inf
        %v1812 = vmax.f32 %v1804, %v1811
        %v1813 = vsel %vm1548, %v1747, -inf
        %v1814 = vmax.f32 %v1806, %v1813
        %v1815 = vsel %vm1548, %v1752, -inf
        %v1816 = vmax.f32 %v1808, %v1815
        %v1817 = vsel %vm1548, %v1755, -inf
        %v1818 = vmax.f32 %v1810, %v1817
        %v1819 = vmax.f32 %v1812, %v1814
        %v1820 = vmax.f32 %v1816, %v1818
        %v1821 = vmax.f32 %v1819, %v1820
        %v1822 = vrot.slane %v1821, 4
        %v1823 = vmax.f32 %v1821, %v1822
        %v1824 = vrot.slane %v1823, 2
        %v1825 = vmax.f32 %v1823, %v1824
        %v1826 = vrot.slane %v1825, 1
        %v1827 = vmax.f32 %v1825, %v1826
        %v1828 = vmax.f32 %v1758, %v1827
        %vm1829 = vcmask 516096
        %1830 = vst.msk [vmem:[#allocation5] sm:$0x1] %vm1829, %v1828
        %p1831 = scmp.eq.s32.totalorder %s28, 1
        // Predicated region
        $region77: #{foldingnet_forward.2} parent=71 // pred_check
          %p1832 = pneg %p1831
        $region78: #{foldingnet_forward.2} parent=71 // pred_check_branch
          %1834 = sbr.rel (%p1832) target = $region80
        $region79: #{foldingnet_forward.2} parent=71 // pred_region
          %v1835 = vld [vmem:[#allocation5] sm:$0x1]
          %1836 = vst.msk [vmem:[%s404] sm:$0x1] %vm1829, %v1835
        $region80: #{foldingnet_forward.2} parent=71 // pred_fallthru
          _
      $region72: #{foldingnet_forward.2} parent=59 // pred_fallthru
        _
      %p1837 = scmp.lt.s32.totalorder %s26, 1
      %s1838 = scalar_select %p1837, %s26, 1
      %s1839 = scalar_lea.vmem %s10, %s1838
      // Predicated region
      $region81: #{foldingnet_forward.2} parent=59 // pred_check
        %p1840 = pneg %p279
      $region82: #{foldingnet_forward.2} parent=59 // pred_check_branch
        %1842 = sbr.rel (%p1840) target = $region84
      $region83: #{foldingnet_forward.2} parent=59 // pred_region
        _
      $region84: #{foldingnet_forward.2} parent=59 // pred_fallthru
        _
    $region60: #{foldingnet_forward.2} parent=5 // pred_fallthru
      _
    %p1843 = scmp.le.s32.totalorder 2, %s16
    // Predicated region
    $region85: #{foldingnet_forward.2} parent=5 // pred_check
      %p1844 = pneg %p1843
    $region86: #{foldingnet_forward.2} parent=5 // pred_check_branch
      %1846 = sbr.rel (%p1844) target = $region88
    $region87: #{foldingnet_forward.2} parent=5 // pred_region
      %s1847 = ssub.s32 %s16, 2
      // Predicated region
      $region89: #{foldingnet_forward.2} parent=87 // pred_check
        %p1848 = pneg %p285
      $region90: #{foldingnet_forward.2} parent=87 // pred_check_branch
        %1850 = sbr.rel (%p1848) target = $region92
      $region91: #{foldingnet_forward.2} parent=87 // pred_region
        %p1851 = scmp.lt.s32.totalorder %s29, 1
        %s1852 = scalar_select %p1851, %s29, 1
        %s1853 = scalar_lea.vmem %s10, %s1852
      $region92: #{foldingnet_forward.2} parent=87 // pred_fallthru
        _
    $region88: #{foldingnet_forward.2} parent=5 // pred_fallthru
      _
  $region6: #{foldingnet_forward.2} parent=0 // loop_footer
    %s20 = sadd.s32 1, %s16
  $region7: #{foldingnet_forward.2} parent=0 // loop_footer_branch
    %15 = sbr.rel target = $region3
  $region8: #{foldingnet_forward.2} parent=0 // loop_exit
    _

// kernel: foldingnet_forward.3
$region0: #{foldingnet_forward.3}
  #allocation0 [shape = 'u32[]', space=smem, size = 0x4, offset = 0x4, fixed_abs, tag = 'smem constant byte address 0x4 - core index']
  #allocation1 [shape = 'u32[144,128]{1,0:T(1,128)}', space=vmem, size = 0x12000, scoped, tag = 'internal scratch']
  #allocation2 [shape = 'f32[1,64]{1,0:T(1,128)}', space=vmem, size = 0x200, scoped, tag = 'scratch operand']
  #allocation3 [shape = 'f32[1,64]{1,0:T(1,128)}', space=vmem, size = 0x200, scoped, tag = 'scratch operand']
  %s0 = inlined_call_operand.vmem [shape: bf16[1024,64], index: 0, kind: input, shape index: {}]
  %s1 = inlined_call_operand.vmem [shape: f32[2,1,64], index: 1, kind: input, shape index: {}]
  %s2 = inlined_call_operand.vmem [shape: bf16[64,64], index: 2, kind: input, shape index: {}]
  %s3 = inlined_call_operand.vmem [shape: f32[1,64], index: 3, kind: input, shape index: {}]
  %s4 = inlined_call_operand.vmem [shape: bf16[64,64], index: 4, kind: input, shape index: {}]
  %s5 = inlined_call_operand.vmem [shape: f32[1,64], index: 5, kind: input, shape index: {}]
  %s6 = inlined_call_operand.vmem [shape: bf16[64,64], index: 6, kind: input, shape index: {}]
  %s7 = inlined_call_operand.vmem [shape: f32[1,64], index: 7, kind: input, shape index: {}]
  %s8 = inlined_call_operand.vmem [shape: bf16[64,64], index: 8, kind: input, shape index: {}]
  %s9 = inlined_call_operand.vmem [shape: bf16[64,64], index: 9, kind: input, shape index: {}]
  %s10 = inlined_call_operand.vmem [shape: f32[1,64], index: 10, kind: input, shape index: {}]
  %s11 = inlined_call_operand.vmem [shape: bf16[64,3], index: 11, kind: input, shape index: {}]
  %s12 = inlined_call_operand.vmem [shape: f32[1,3], index: 12, kind: input, shape index: {}]
  %s13 = inlined_call_operand.vmem [shape: f32[2,1024,3], index: 13, kind: output, shape index: {}]
  %s14 = sld [smem:[#allocation0]]
  $region89: #{foldingnet_forward.3} parent=0
    _
  %s16 = ssub.s32 1, %s14
  %s17 = scalar_select 0, %s16, %s14
  loop: start=0, step=1, limit=10
  $region2: #{foldingnet_forward.3} parent=0 // loop_pre_header
    _
  $region3: #{foldingnet_forward.3} parent=0 // loop_header
    %s19 = sphi 0, %s23
    %p20 = scmp.ge.s32.totalorder %s19, 10
    %s26 = sphi 0, %s38
    %s27 = sphi 0, %s34
    %s28 = sphi 0, %s26
    %s29 = sphi 0, %s27
    %s30 = sphi 0, %s28
    %s31 = sphi 0, %s29
    %s41 = sphi 0, %s43
    %s44 = sphi 0, %s41
    %s45 = sphi 0, %s44
    %s61 = sphi 0, %s45
    %s67 = sphi 0, %s69
    %s70 = sphi 0, %s67
    %s71 = sphi 0, %s70
    %s87 = sphi 0, %s71
    %s91 = sphi 0, %s91
    %s93 = sphi 0, %s91
    %s94 = sphi 0, %s93
    %s108 = sphi 0, %s94
    %s112 = sphi 0, %s112
    %s114 = sphi 0, %s112
    %s115 = sphi 0, %s114
    %s129 = sphi 0, %s115
    %s133 = sphi 0, %s133
    %s135 = sphi 0, %s133
    %s136 = sphi 0, %s135
    %s150 = sphi 0, %s136
    %s154 = sphi 0, %s154
    %s156 = sphi 0, %s154
    %s157 = sphi 0, %s156
    %s171 = sphi 0, %s157
    %s175 = sphi 0, %s175
    %s177 = sphi 0, %s175
    %s178 = sphi 0, %s177
    %s192 = sphi 0, %s178
    %s196 = sphi 0, %s196
    %s198 = sphi 0, %s196
    %s199 = sphi 0, %s198
    %s213 = sphi 0, %s199
    %s217 = sphi 0, %s217
    %s219 = sphi 0, %s217
    %s220 = sphi 0, %s219
    %s234 = sphi 0, %s220
    %s238 = sphi 0, %s238
    %s240 = sphi 0, %s238
    %s241 = sphi 0, %s240
    %s255 = sphi 0, %s241
    %s259 = sphi 0, %s259
    %s261 = sphi 0, %s259
    %s262 = sphi 0, %s261
    %s276 = sphi 0, %s262
    %s280 = sphi 0, %s280
    %s282 = sphi 0, %s280
    %s283 = sphi 0, %s282
    %s297 = sphi 0, %s283
    %s301 = sphi 0, %s301
    %s303 = sphi 0, %s301
    %s304 = sphi 0, %s303
    %s318 = sphi 0, %s304
    %s326 = sphi 0, %s328
    %s329 = sphi 0, %s326
    %s330 = sphi 0, %s329
    %s346 = sphi 0, %s330
  $region4: #{foldingnet_forward.3} parent=0 // loop_header_branch
    %22 = sbr.rel (%p20) target = $region8
  $region5: #{foldingnet_forward.3} parent=0 // loop_body
    %s24 = ssub.s32 %s19, 1
    %s25 = ssub.s32 %s19, 2
    %s32 = sadd.s32 1, %s27
    %p33 = scmp.ge.s32.totalorder %s32, 4
    %s34 = scalar_select %p33, 0, %s32
    %s35 = sadd.s32 1, %s26
    %s36 = scalar_select %p33, %s35, %s26
    %p37 = scmp.ge.s32.totalorder %s36, 2
    %s38 = scalar_select %p37, 0, %s36
    %s39 = ssub.s32 %s27, %s34
    %p40 = scmp.eq.s32.totalorder %s39, 0
    %s42 = sadd.s32 %s41, 1
    %s43 = scalar_select %p40, %s41, %s42
    %p46 = pneg %p40
    %p47 = scmp.eq.s32.totalorder %s19, 7
    %p48 = por %p46, %p47
    %p49 = scmp.ne.s32.totalorder %s41, %s44
    %p50 = scmp.eq.s32.totalorder %s19, 0
    %p51 = por %p49, %p50
    %p52 = scmp.ne.s32.totalorder %s41, %s44
    %p53 = scmp.eq.s32.totalorder %s24, 7
    %p54 = por %p52, %p53
    %p55 = scmp.ne.s32.totalorder %s44, %s45
    %p56 = scmp.eq.s32.totalorder %s24, 0
    %p57 = por %p55, %p56
    %p58 = scmp.ne.s32.totalorder %s44, %s45
    %p59 = scmp.eq.s32.totalorder %s25, 7
    %p60 = por %p58, %p59
    %p62 = scmp.ne.s32.totalorder %s45, %s61
    %p63 = scmp.eq.s32.totalorder %s25, 0
    %p64 = por %p62, %p63
    %s65 = ssub.s32 %s26, %s38
    %p66 = scmp.eq.s32.totalorder %s65, 0
    %s68 = sadd.s32 %s67, 1
    %s69 = scalar_select %p66, %s67, %s68
    %p72 = pneg %p66
    %p73 = scmp.eq.s32.totalorder %s19, 7
    %p74 = por %p72, %p73
    %p75 = scmp.ne.s32.totalorder %s67, %s70
    %p76 = scmp.eq.s32.totalorder %s19, 0
    %p77 = por %p75, %p76
    %p78 = scmp.ne.s32.totalorder %s67, %s70
    %p79 = scmp.eq.s32.totalorder %s24, 7
    %p80 = por %p78, %p79
    %p81 = scmp.ne.s32.totalorder %s70, %s71
    %p82 = scmp.eq.s32.totalorder %s24, 0
    %p83 = por %p81, %p82
    %p84 = scmp.ne.s32.totalorder %s70, %s71
    %p85 = scmp.eq.s32.totalorder %s25, 7
    %p86 = por %p84, %p85
    %p88 = scmp.ne.s32.totalorder %s71, %s87
    %p89 = scmp.eq.s32.totalorder %s25, 0
    %p90 = por %p88, %p89
    %s92 = sadd.s32 %s91, 1
    %p95 = scmp.eq.s32.totalorder %s19, 7
    %p96 = scmp.ne.s32.totalorder %s91, %s93
    %p97 = scmp.eq.s32.totalorder %s19, 0
    %p98 = por %p96, %p97
    %p99 = scmp.ne.s32.totalorder %s91, %s93
    %p100 = scmp.eq.s32.totalorder %s24, 7
    %p101 = por %p99, %p100
    %p102 = scmp.ne.s32.totalorder %s93, %s94
    %p103 = scmp.eq.s32.totalorder %s24, 0
    %p104 = por %p102, %p103
    %p105 = scmp.ne.s32.totalorder %s93, %s94
    %p106 = scmp.eq.s32.totalorder %s25, 7
    %p107 = por %p105, %p106
    %p109 = scmp.ne.s32.totalorder %s94, %s108
    %p110 = scmp.eq.s32.totalorder %s25, 0
    %p111 = por %p109, %p110
    %s113 = sadd.s32 %s112, 1
    %p116 = scmp.eq.s32.totalorder %s19, 7
    %p117 = scmp.ne.s32.totalorder %s112, %s114
    %p118 = scmp.eq.s32.totalorder %s19, 0
    %p119 = por %p117, %p118
    %p120 = scmp.ne.s32.totalorder %s112, %s114
    %p121 = scmp.eq.s32.totalorder %s24, 7
    %p122 = por %p120, %p121
    %p123 = scmp.ne.s32.totalorder %s114, %s115
    %p124 = scmp.eq.s32.totalorder %s24, 0
    %p125 = por %p123, %p124
    %p126 = scmp.ne.s32.totalorder %s114, %s115
    %p127 = scmp.eq.s32.totalorder %s25, 7
    %p128 = por %p126, %p127
    %p130 = scmp.ne.s32.totalorder %s115, %s129
    %p131 = scmp.eq.s32.totalorder %s25, 0
    %p132 = por %p130, %p131
    %s134 = sadd.s32 %s133, 1
    %p137 = scmp.eq.s32.totalorder %s19, 7
    %p138 = scmp.ne.s32.totalorder %s133, %s135
    %p139 = scmp.eq.s32.totalorder %s19, 0
    %p140 = por %p138, %p139
    %p141 = scmp.ne.s32.totalorder %s133, %s135
    %p142 = scmp.eq.s32.totalorder %s24, 7
    %p143 = por %p141, %p142
    %p144 = scmp.ne.s32.totalorder %s135, %s136
    %p145 = scmp.eq.s32.totalorder %s24, 0
    %p146 = por %p144, %p145
    %p147 = scmp.ne.s32.totalorder %s135, %s136
    %p148 = scmp.eq.s32.totalorder %s25, 7
    %p149 = por %p147, %p148
    %p151 = scmp.ne.s32.totalorder %s136, %s150
    %p152 = scmp.eq.s32.totalorder %s25, 0
    %p153 = por %p151, %p152
    %s155 = sadd.s32 %s154, 1
    %p158 = scmp.eq.s32.totalorder %s19, 7
    %p159 = scmp.ne.s32.totalorder %s154, %s156
    %p160 = scmp.eq.s32.totalorder %s19, 0
    %p161 = por %p159, %p160
    %p162 = scmp.ne.s32.totalorder %s154, %s156
    %p163 = scmp.eq.s32.totalorder %s24, 7
    %p164 = por %p162, %p163
    %p165 = scmp.ne.s32.totalorder %s156, %s157
    %p166 = scmp.eq.s32.totalorder %s24, 0
    %p167 = por %p165, %p166
    %p168 = scmp.ne.s32.totalorder %s156, %s157
    %p169 = scmp.eq.s32.totalorder %s25, 7
    %p170 = por %p168, %p169
    %p172 = scmp.ne.s32.totalorder %s157, %s171
    %p173 = scmp.eq.s32.totalorder %s25, 0
    %p174 = por %p172, %p173
    %s176 = sadd.s32 %s175, 1
    %p179 = scmp.eq.s32.totalorder %s19, 7
    %p180 = scmp.ne.s32.totalorder %s175, %s177
    %p181 = scmp.eq.s32.totalorder %s19, 0
    %p182 = por %p180, %p181
    %p183 = scmp.ne.s32.totalorder %s175, %s177
    %p184 = scmp.eq.s32.totalorder %s24, 7
    %p185 = por %p183, %p184
    %p186 = scmp.ne.s32.totalorder %s177, %s178
    %p187 = scmp.eq.s32.totalorder %s24, 0
    %p188 = por %p186, %p187
    %p189 = scmp.ne.s32.totalorder %s177, %s178
    %p190 = scmp.eq.s32.totalorder %s25, 7
    %p191 = por %p189, %p190
    %p193 = scmp.ne.s32.totalorder %s178, %s192
    %p194 = scmp.eq.s32.totalorder %s25, 0
    %p195 = por %p193, %p194
    %s197 = sadd.s32 %s196, 1
    %p200 = scmp.eq.s32.totalorder %s19, 7
    %p201 = scmp.ne.s32.totalorder %s196, %s198
    %p202 = scmp.eq.s32.totalorder %s19, 0
    %p203 = por %p201, %p202
    %p204 = scmp.ne.s32.totalorder %s196, %s198
    %p205 = scmp.eq.s32.totalorder %s24, 7
    %p206 = por %p204, %p205
    %p207 = scmp.ne.s32.totalorder %s198, %s199
    %p208 = scmp.eq.s32.totalorder %s24, 0
    %p209 = por %p207, %p208
    %p210 = scmp.ne.s32.totalorder %s198, %s199
    %p211 = scmp.eq.s32.totalorder %s25, 7
    %p212 = por %p210, %p211
    %p214 = scmp.ne.s32.totalorder %s199, %s213
    %p215 = scmp.eq.s32.totalorder %s25, 0
    %p216 = por %p214, %p215
    %s218 = sadd.s32 %s217, 1
    %p221 = scmp.eq.s32.totalorder %s19, 7
    %p222 = scmp.ne.s32.totalorder %s217, %s219
    %p223 = scmp.eq.s32.totalorder %s19, 0
    %p224 = por %p222, %p223
    %p225 = scmp.ne.s32.totalorder %s217, %s219
    %p226 = scmp.eq.s32.totalorder %s24, 7
    %p227 = por %p225, %p226
    %p228 = scmp.ne.s32.totalorder %s219, %s220
    %p229 = scmp.eq.s32.totalorder %s24, 0
    %p230 = por %p228, %p229
    %p231 = scmp.ne.s32.totalorder %s219, %s220
    %p232 = scmp.eq.s32.totalorder %s25, 7
    %p233 = por %p231, %p232
    %p235 = scmp.ne.s32.totalorder %s220, %s234
    %p236 = scmp.eq.s32.totalorder %s25, 0
    %p237 = por %p235, %p236
    %s239 = sadd.s32 %s238, 1
    %p242 = scmp.eq.s32.totalorder %s19, 7
    %p243 = scmp.ne.s32.totalorder %s238, %s240
    %p244 = scmp.eq.s32.totalorder %s19, 0
    %p245 = por %p243, %p244
    %p246 = scmp.ne.s32.totalorder %s238, %s240
    %p247 = scmp.eq.s32.totalorder %s24, 7
    %p248 = por %p246, %p247
    %p249 = scmp.ne.s32.totalorder %s240, %s241
    %p250 = scmp.eq.s32.totalorder %s24, 0
    %p251 = por %p249, %p250
    %p252 = scmp.ne.s32.totalorder %s240, %s241
    %p253 = scmp.eq.s32.totalorder %s25, 7
    %p254 = por %p252, %p253
    %p256 = scmp.ne.s32.totalorder %s241, %s255
    %p257 = scmp.eq.s32.totalorder %s25, 0
    %p258 = por %p256, %p257
    %s260 = sadd.s32 %s259, 1
    %p263 = scmp.eq.s32.totalorder %s19, 7
    %p264 = scmp.ne.s32.totalorder %s259, %s261
    %p265 = scmp.eq.s32.totalorder %s19, 0
    %p266 = por %p264, %p265
    %p267 = scmp.ne.s32.totalorder %s259, %s261
    %p268 = scmp.eq.s32.totalorder %s24, 7
    %p269 = por %p267, %p268
    %p270 = scmp.ne.s32.totalorder %s261, %s262
    %p271 = scmp.eq.s32.totalorder %s24, 0
    %p272 = por %p270, %p271
    %p273 = scmp.ne.s32.totalorder %s261, %s262
    %p274 = scmp.eq.s32.totalorder %s25, 7
    %p275 = por %p273, %p274
    %p277 = scmp.ne.s32.totalorder %s262, %s276
    %p278 = scmp.eq.s32.totalorder %s25, 0
    %p279 = por %p277, %p278
    %s281 = sadd.s32 %s280, 1
    %p284 = scmp.eq.s32.totalorder %s19, 7
    %p285 = scmp.ne.s32.totalorder %s280, %s282
    %p286 = scmp.eq.s32.totalorder %s19, 0
    %p287 = por %p285, %p286
    %p288 = scmp.ne.s32.totalorder %s280, %s282
    %p289 = scmp.eq.s32.totalorder %s24, 7
    %p290 = por %p288, %p289
    %p291 = scmp.ne.s32.totalorder %s282, %s283
    %p292 = scmp.eq.s32.totalorder %s24, 0
    %p293 = por %p291, %p292
    %p294 = scmp.ne.s32.totalorder %s282, %s283
    %p295 = scmp.eq.s32.totalorder %s25, 7
    %p296 = por %p294, %p295
    %p298 = scmp.ne.s32.totalorder %s283, %s297
    %p299 = scmp.eq.s32.totalorder %s25, 0
    %p300 = por %p298, %p299
    %s302 = sadd.s32 %s301, 1
    %p305 = scmp.eq.s32.totalorder %s19, 7
    %p306 = scmp.ne.s32.totalorder %s301, %s303
    %p307 = scmp.eq.s32.totalorder %s19, 0
    %p308 = por %p306, %p307
    %p309 = scmp.ne.s32.totalorder %s301, %s303
    %p310 = scmp.eq.s32.totalorder %s24, 7
    %p311 = por %p309, %p310
    %p312 = scmp.ne.s32.totalorder %s303, %s304
    %p313 = scmp.eq.s32.totalorder %s24, 0
    %p314 = por %p312, %p313
    %p315 = scmp.ne.s32.totalorder %s303, %s304
    %p316 = scmp.eq.s32.totalorder %s25, 7
    %p317 = por %p315, %p316
    %p319 = scmp.ne.s32.totalorder %s304, %s318
    %p320 = scmp.eq.s32.totalorder %s25, 0
    %p321 = por %p319, %p320
    %s322 = ssub.s32 %s26, %s38
    %s323 = ssub.s32 %s27, %s34
    %s324 = sor.u32 %s322, %s323
    %p325 = scmp.eq.s32.totalorder %s324, 0
    %s327 = sadd.s32 %s326, 1
    %s328 = scalar_select %p325, %s326, %s327
    %p331 = pneg %p325
    %p332 = scmp.eq.s32.totalorder %s19, 7
    %p333 = por %p331, %p332
    %p334 = scmp.ne.s32.totalorder %s326, %s329
    %p335 = scmp.eq.s32.totalorder %s19, 0
    %p336 = por %p334, %p335
    %p337 = scmp.ne.s32.totalorder %s326, %s329
    %p338 = scmp.eq.s32.totalorder %s24, 7
    %p339 = por %p337, %p338
    %p340 = scmp.ne.s32.totalorder %s329, %s330
    %p341 = scmp.eq.s32.totalorder %s24, 0
    %p342 = por %p340, %p341
    %p343 = scmp.ne.s32.totalorder %s329, %s330
    %p344 = scmp.eq.s32.totalorder %s25, 7
    %p345 = por %p343, %p344
    %p347 = scmp.ne.s32.totalorder %s330, %s346
    %p348 = scmp.eq.s32.totalorder %s25, 0
    %p349 = por %p347, %p348
    %p350 = scmp.le.s32.totalorder 1, %s19
    %p351 = scmp.lt.s32.totalorder %s19, 9
    %p352 = pnand %p350, %p351
    %p353 = pneg %p352
    // Predicated region
    $region9: #{foldingnet_forward.3} parent=5 // pred_check
      _
    $region10: #{foldingnet_forward.3} parent=5 // pred_check_branch
      %355 = sbr.rel (%p352) target = $region12
    $region11: #{foldingnet_forward.3} parent=5 // pred_region
      %s356 = ssub.s32 %s19, 1
      // Predicated region
      $region13: #{foldingnet_forward.3} parent=11 // pred_check
        %p357 = pneg %p104
      $region14: #{foldingnet_forward.3} parent=11 // pred_check_branch
        %359 = sbr.rel (%p357) target = $region16
      $region15: #{foldingnet_forward.3} parent=11 // pred_region
        _
      $region16: #{foldingnet_forward.3} parent=11 // pred_fallthru
        _
      // Predicated region
      $region17: #{foldingnet_forward.3} parent=11 // pred_check
        %p360 = pneg %p125
      $region18: #{foldingnet_forward.3} parent=11 // pred_check_branch
        %362 = sbr.rel (%p360) target = $region20
      $region19: #{foldingnet_forward.3} parent=11 // pred_region
        _
      $region20: #{foldingnet_forward.3} parent=11 // pred_fallthru
        _
      // Predicated region
      $region21: #{foldingnet_forward.3} parent=11 // pred_check
        %p363 = pneg %p146
      $region22: #{foldingnet_forward.3} parent=11 // pred_check_branch
        %365 = sbr.rel (%p363) target = $region24
      $region23: #{foldingnet_forward.3} parent=11 // pred_region
        _
      $region24: #{foldingnet_forward.3} parent=11 // pred_fallthru
        _
      // Predicated region
      $region25: #{foldingnet_forward.3} parent=11 // pred_check
        %p366 = pneg %p167
      $region26: #{foldingnet_forward.3} parent=11 // pred_check_branch
        %368 = sbr.rel (%p366) target = $region28
      $region27: #{foldingnet_forward.3} parent=11 // pred_region
        _
      $region28: #{foldingnet_forward.3} parent=11 // pred_fallthru
        _
      // Predicated region
      $region29: #{foldingnet_forward.3} parent=11 // pred_check
        %p369 = pneg %p188
      $region30: #{foldingnet_forward.3} parent=11 // pred_check_branch
        %371 = sbr.rel (%p369) target = $region32
      $region31: #{foldingnet_forward.3} parent=11 // pred_region
        _
      $region32: #{foldingnet_forward.3} parent=11 // pred_fallthru
        _
      // Predicated region
      $region33: #{foldingnet_forward.3} parent=11 // pred_check
        %p372 = pneg %p209
      $region34: #{foldingnet_forward.3} parent=11 // pred_check_branch
        %374 = sbr.rel (%p372) target = $region36
      $region35: #{foldingnet_forward.3} parent=11 // pred_region
        _
      $region36: #{foldingnet_forward.3} parent=11 // pred_fallthru
        _
      // Predicated region
      $region37: #{foldingnet_forward.3} parent=11 // pred_check
        %p375 = pneg %p230
      $region38: #{foldingnet_forward.3} parent=11 // pred_check_branch
        %377 = sbr.rel (%p375) target = $region40
      $region39: #{foldingnet_forward.3} parent=11 // pred_region
        _
      $region40: #{foldingnet_forward.3} parent=11 // pred_fallthru
        _
      // Predicated region
      $region41: #{foldingnet_forward.3} parent=11 // pred_check
        %p378 = pneg %p251
      $region42: #{foldingnet_forward.3} parent=11 // pred_check_branch
        %380 = sbr.rel (%p378) target = $region44
      $region43: #{foldingnet_forward.3} parent=11 // pred_region
        _
      $region44: #{foldingnet_forward.3} parent=11 // pred_fallthru
        _
      // Predicated region
      $region45: #{foldingnet_forward.3} parent=11 // pred_check
        %p381 = pneg %p272
      $region46: #{foldingnet_forward.3} parent=11 // pred_check_branch
        %383 = sbr.rel (%p381) target = $region48
      $region47: #{foldingnet_forward.3} parent=11 // pred_region
        _
      $region48: #{foldingnet_forward.3} parent=11 // pred_fallthru
        _
      // Predicated region
      $region49: #{foldingnet_forward.3} parent=11 // pred_check
        %p384 = pneg %p293
      $region50: #{foldingnet_forward.3} parent=11 // pred_check_branch
        %386 = sbr.rel (%p384) target = $region52
      $region51: #{foldingnet_forward.3} parent=11 // pred_region
        _
      $region52: #{foldingnet_forward.3} parent=11 // pred_fallthru
        _
      // Predicated region
      $region53: #{foldingnet_forward.3} parent=11 // pred_check
        %p387 = pneg %p314
      $region54: #{foldingnet_forward.3} parent=11 // pred_check_branch
        %389 = sbr.rel (%p387) target = $region56
      $region55: #{foldingnet_forward.3} parent=11 // pred_region
        _
      $region56: #{foldingnet_forward.3} parent=11 // pred_fallthru
        _
    $region12: #{foldingnet_forward.3} parent=5 // pred_fallthru
      _
    %p390 = scmp.lt.s32.totalorder %s19, 8
    // Predicated region
    $region57: #{foldingnet_forward.3} parent=5 // pred_check
      %p391 = pneg %p390
    $region58: #{foldingnet_forward.3} parent=5 // pred_check_branch
      %393 = sbr.rel (%p391) target = $region60
    $region59: #{foldingnet_forward.3} parent=5 // pred_region
      // Predicated region
      $region61: #{foldingnet_forward.3} parent=59 // pred_check
        %p394 = pneg %p51
      $region62: #{foldingnet_forward.3} parent=59 // pred_check_branch
        %396 = sbr.rel (%p394) target = $region64
      $region63: #{foldingnet_forward.3} parent=59 // pred_region
        %s397 = smul.u32 32, %s27
        %p398 = scmp.lt.s32.totalorder %s397, 127
        %s399 = scalar_select %p398, %s397, 127
        %s400 = smul.addr %s399, 4
        %s401 = scalar_lea.vmem %s0, %s400
        %s402 = smul.u32 32, %s27
      $region64: #{foldingnet_forward.3} parent=59 // pred_fallthru
        _
      // Predicated region
      $region65: #{foldingnet_forward.3} parent=59 // pred_check
        %p403 = pneg %p77
      $region66: #{foldingnet_forward.3} parent=59 // pred_check_branch
        %405 = sbr.rel (%p403) target = $region68
      $region67: #{foldingnet_forward.3} parent=59 // pred_region
        %p406 = scmp.lt.s32.totalorder %s26, 1
        %s407 = scalar_select %p406, %s26, 1
        %s408 = scalar_lea.vmem %s1, %s407
      $region68: #{foldingnet_forward.3} parent=59 // pred_fallthru
        _
    $region60: #{foldingnet_forward.3} parent=5 // pred_fallthru
      _
    %p409 = scmp.le.s32.totalorder 1, %s19
    %p410 = scmp.lt.s32.totalorder %s19, 9
    %p411 = pnand %p409, %p410
    %p412 = pneg %p411
    // Predicated region
    $region69: #{foldingnet_forward.3} parent=5 // pred_check
      _
    $region70: #{foldingnet_forward.3} parent=5 // pred_check_branch
      %414 = sbr.rel (%p411) target = $region72
    $region71: #{foldingnet_forward.3} parent=5 // pred_region
      %s415 = ssub.s32 %s19, 1
      %s416 = smul.u32 32, %s29
      %p417 = scmp.lt.s32.totalorder %s416, 127
      %s418 = scalar_select %p417, %s416, 127
      %s419 = smul.addr %s418, 4
      %s420 = scalar_lea.vmem %s0, %s419
      %p421 = pneg %p57
      %p422 = pneg %p54
      %p423 = scmp.lt.s32.totalorder %s28, 1
      %s424 = scalar_select %p423, %s28, 1
      %s425 = scalar_lea.vmem %s1, %s424
      %p426 = pneg %p83
      %p427 = pneg %p80
      %p428 = pneg %p104
      %p429 = pneg %p101
      %p430 = pneg %p125
      %p431 = pneg %p122
      %p432 = pneg %p146
      %p433 = pneg %p143
      %p434 = pneg %p167
      %p435 = pneg %p164
      %p436 = pneg %p188
      %p437 = pneg %p185
      %p438 = pneg %p209
      %p439 = pneg %p206
      %p440 = pneg %p230
      %p441 = pneg %p227
      %p442 = pneg %p251
      %p443 = pneg %p248
      %p444 = pneg %p272
      %p445 = pneg %p269
      %p446 = pneg %p293
      %p447 = pneg %p290
      %p448 = pneg %p314
      %p449 = pneg %p311
      %p450 = pneg %p342
      %p451 = pneg %p339
      %s452 = smul.u32 32, %s29
      %p453 = scmp.lt.s32.totalorder %s28, 1
      %s454 = scalar_select %p453, %s28, 1
      %p455 = scmp.lt.s32.totalorder %s452, 127
      %s456 = scalar_select %p455, %s452, 127
      %s457 = smul.addr %s454, 128
      %s458 = sadd.s32 %s456, %s457
      %s459 = smul.addr %s458, 8
      %s460 = scalar_lea.vmem %s13, %s459
      %s461 = smul.u32 32, %s29
      %p462 = scmp.lt.s32.totalorder %s461, 127
      %s463 = scalar_select %p462, %s461, 127
      %s464 = smul.addr %s463, 4
      %s465 = scalar_lea.vmem %s0, %s464
      %s466 = smul.u32 32, %s29
      %p467 = scmp.lt.s32.totalorder %s28, 1
      %s468 = scalar_select %p467, %s28, 1
      %s469 = scalar_lea.vmem %s1, %s468
      %s470 = smul.u32 32, %s29
      %p471 = scmp.lt.s32.totalorder %s28, 1
      %s472 = scalar_select %p471, %s28, 1
      %p473 = scmp.lt.s32.totalorder %s470, 127
      %s474 = scalar_select %p473, %s470, 127
      %s475 = smul.addr %s472, 128
      %s476 = sadd.s32 %s474, %s475
      %s477 = smul.addr %s476, 8
      %s478 = scalar_lea.vmem %s13, %s477
      %s479 = smul.u32 32, %s29
      %p481 = scmp.eq.s32.totalorder %s29, 0
      // Predicated region
      $region73: #{foldingnet_forward.3} parent=71 // pred_check
        %p482 = pneg %p481
      $region74: #{foldingnet_forward.3} parent=71 // pred_check_branch
        %484 = sbr.rel (%p482) target = $region76
      $region75: #{foldingnet_forward.3} parent=71 // pred_region
        %v485 = vld [vmem:[%s469] sm:$0x1]
        %v486 = vpack.c.bf16 %v485, %v485
        %v487 = vld [vmem:[%s2] sm:$0xf]
        %v488 = vld [vmem:[%s2 + $0x4] sm:$0xf]
        %v489 = vld [vmem:[%s2 + $0x8] sm:$0xf]
        %v490 = vld [vmem:[%s2 + $0xc] sm:$0xf]
        %v491 = vld [vmem:[%s2 + $0x10] sm:$0xf]
        %v492 = vld [vmem:[%s2 + $0x14] sm:$0xf]
        %v493 = vld [vmem:[%s2 + $0x18] sm:$0xf]
        %v494 = vld [vmem:[%s2 + $0x1c] sm:$0xf]
        %v495 = vld [vmem:[%s3] sm:$0x1]
        %v504 = vunpack.c.l.b16 %v487
        %v505 = vunpack.c.l.b16 %v488
        %v506 = vunpack.c.l.b16 %v489
        %v507 = vunpack.c.l.b16 %v490
        %v508 = vunpack.c.l.b16 %v491
        %v509 = vunpack.c.l.b16 %v492
        %v510 = vunpack.c.l.b16 %v493
        %v511 = vunpack.c.l.b16 %v494
        %v512 = vpack.c.b16 %v505, %v504
        %v513 = vpack.c.b16 %v507, %v506
        %v514 = vpack.c.b16 %v509, %v508
        %v515 = vpack.c.b16 %v511, %v510
        %vm520 = vcmask 523264
        %v522 = vsel %vm520, %v486, 0
        %524 = vmatprep.subr.bf16.mxu0 0
        %525 = vmatpush1.bf16.msra.mxu0 %v512
        %526 = vmatprep.subr.bf16.mxu0 0
        %527 = vmatpush1.bf16.msra.mxu0 %v513
        %528 = vmatprep.subr.bf16.mxu0 0
        %529 = vmatpush1.bf16.msra.mxu0 %v514
        %530 = vmatprep.subr.bf16.mxu0 0
        %531 = vmatpush1.bf16.msra.mxu0 %v515
        %532 = vmatprep.subr.bf16.mxu0 0
        %533 = vmatpush1.bf16.msra.mxu0 0
        %534 = vmatprep.subr.bf16.mxu0 0
        %535 = vmatpush1.bf16.msra.mxu0 0
        %536 = vmatprep.subr.bf16.mxu0 0
        %537 = vmatpush1.bf16.msra.mxu0 0
        %538 = vmatprep.subr.bf16.mxu0 0
        %539 = vmatpush1.bf16.msra.mxu0 0
        %540 = vmatprep.subr.bf16.mxu0 0
        %541 = vmatpush1.bf16.msra.mxu0 0
        %542 = vmatprep.subr.bf16.mxu0 0
        %543 = vmatpush1.bf16.msra.mxu0 0
        %544 = vmatprep.subr.bf16.mxu0 0
        %545 = vmatpush1.bf16.msra.mxu0 0
        %546 = vmatprep.subr.bf16.mxu0 0
        %547 = vmatpush1.bf16.msra.mxu0 0
        %548 = vmatprep.subr.bf16.mxu0 0
        %549 = vmatpush1.bf16.msra.mxu0 0
        %550 = vmatprep.subr.bf16.mxu0 0
        %551 = vmatpush1.bf16.msra.mxu0 0
        %552 = vmatprep.subr.bf16.mxu0 0
        %553 = vmatpush1.bf16.msra.mxu0 0
        %554 = vmatprep.subr.bf16.mxu0 0
        %555 = vmatpush1.bf16.msra.mxu0 0
        %556 = vmatprep.mubr.bf16.mxu0 0
        %557 = vmatmul.mubr.bf16.gmra.mrb[0].mxu0 %v522
        %v558 = vpop.f32.mrb[0].mxu0
        %v559 = vadd.f32 %v495, %v558
        %v560 = vpop.f32.mrb[0].mxu0
        %v561 = vpop.f32.mrb[0].mxu0
        %v562 = vpop.f32.mrb[0].mxu0
        %563 = vdwg.mxu0
        %vm564 = vcmask 516096
        %565 = vst.msk [vmem:[#allocation2] sm:$0x1] %vm564, %v559
        %v566 = vld [vmem:[%s4] sm:$0xf]
        %v567 = vld [vmem:[%s4 + $0x4] sm:$0xf]
        %v568 = vld [vmem:[%s4 + $0x8] sm:$0xf]
        %v569 = vld [vmem:[%s4 + $0xc] sm:$0xf]
        %v570 = vld [vmem:[%s4 + $0x10] sm:$0xf]
        %v571 = vld [vmem:[%s4 + $0x14] sm:$0xf]
        %v572 = vld [vmem:[%s4 + $0x18] sm:$0xf]
        %v573 = vld [vmem:[%s4 + $0x1c] sm:$0xf]
        %v574 = vld [vmem:[%s5] sm:$0x1]
        %v583 = vunpack.c.l.b16 %v566
        %v584 = vunpack.c.l.b16 %v567
        %v585 = vunpack.c.l.b16 %v568
        %v586 = vunpack.c.l.b16 %v569
        %v587 = vunpack.c.l.b16 %v570
        %v588 = vunpack.c.l.b16 %v571
        %v589 = vunpack.c.l.b16 %v572
        %v590 = vunpack.c.l.b16 %v573
        %v591 = vpack.c.b16 %v584, %v583
        %v592 = vpack.c.b16 %v586, %v585
        %v593 = vpack.c.b16 %v588, %v587
        %v594 = vpack.c.b16 %v590, %v589
        %599 = vmatprep.subr.bf16.mxu0 0
        %600 = vmatpush1.bf16.msra.mxu0 %v591
        %601 = vmatprep.subr.bf16.mxu0 0
        %602 = vmatpush1.bf16.msra.mxu0 %v592
        %603 = vmatprep.subr.bf16.mxu0 0
        %604 = vmatpush1.bf16.msra.mxu0 %v593
        %605 = vmatprep.subr.bf16.mxu0 0
        %606 = vmatpush1.bf16.msra.mxu0 %v594
        %607 = vmatprep.subr.bf16.mxu0 0
        %608 = vmatpush1.bf16.msra.mxu0 0
        %609 = vmatprep.subr.bf16.mxu0 0
        %610 = vmatpush1.bf16.msra.mxu0 0
        %611 = vmatprep.subr.bf16.mxu0 0
        %612 = vmatpush1.bf16.msra.mxu0 0
        %613 = vmatprep.subr.bf16.mxu0 0
        %614 = vmatpush1.bf16.msra.mxu0 0
        %615 = vmatprep.subr.bf16.mxu0 0
        %616 = vmatpush1.bf16.msra.mxu0 0
        %617 = vmatprep.subr.bf16.mxu0 0
        %618 = vmatpush1.bf16.msra.mxu0 0
        %619 = vmatprep.subr.bf16.mxu0 0
        %620 = vmatpush1.bf16.msra.mxu0 0
        %621 = vmatprep.subr.bf16.mxu0 0
        %622 = vmatpush1.bf16.msra.mxu0 0
        %623 = vmatprep.subr.bf16.mxu0 0
        %624 = vmatpush1.bf16.msra.mxu0 0
        %625 = vmatprep.subr.bf16.mxu0 0
        %626 = vmatpush1.bf16.msra.mxu0 0
        %627 = vmatprep.subr.bf16.mxu0 0
        %628 = vmatpush1.bf16.msra.mxu0 0
        %629 = vmatprep.subr.bf16.mxu0 0
        %630 = vmatpush1.bf16.msra.mxu0 0
        %631 = vmatprep.mubr.bf16.mxu0 0
        %632 = vmatmul.mubr.bf16.gmra.mrb[0].mxu0 %v522
        %v633 = vpop.f32.mrb[0].mxu0
        %v634 = vadd.f32 %v574, %v633
        %v635 = vpop.f32.mrb[0].mxu0
        %v636 = vpop.f32.mrb[0].mxu0
        %v637 = vpop.f32.mrb[0].mxu0
        %638 = vdwg.mxu0
        %639 = vst.msk [vmem:[#allocation3] sm:$0x1] %vm564, %v634
      $region76: #{foldingnet_forward.3} parent=71 // pred_fallthru
        _
      %v640 = vld [vmem:[%s465] sm:$0xf]
      %v641 = vld [vmem:[%s465 + $0x4] sm:$0xf]
      %v642 = vld [vmem:[%s465 + $0x8] sm:$0xf]
      %v643 = vld [vmem:[%s465 + $0xc] sm:$0xf]
      %v644 = vld [vmem:[%s465 + $0x10] sm:$0xf]
      %v645 = vld [vmem:[%s465 + $0x14] sm:$0xf]
      %v646 = vld [vmem:[%s465 + $0x18] sm:$0xf]
      %v647 = vld [vmem:[%s465 + $0x1c] sm:$0xf]
      %v648 = vld [vmem:[%s465 + $0x20] sm:$0xf]
      %v649 = vld [vmem:[%s465 + $0x24] sm:$0xf]
      %v650 = vld [vmem:[%s465 + $0x28] sm:$0xf]
      %v651 = vld [vmem:[%s465 + $0x2c] sm:$0xf]
      %v652 = vld [vmem:[%s465 + $0x30] sm:$0xf]
      %v653 = vld [vmem:[%s465 + $0x34] sm:$0xf]
      %v654 = vld [vmem:[%s465 + $0x38] sm:$0xf]
      %v655 = vld [vmem:[%s465 + $0x3c] sm:$0xf]
      %v656 = vld [vmem:[%s465 + $0x40] sm:$0xf]
      %v657 = vld [vmem:[%s465 + $0x44] sm:$0xf]
      %v658 = vld [vmem:[%s465 + $0x48] sm:$0xf]
      %v659 = vld [vmem:[%s465 + $0x4c] sm:$0xf]
      %v660 = vld [vmem:[%s465 + $0x50] sm:$0xf]
      %v661 = vld [vmem:[%s465 + $0x54] sm:$0xf]
      %v662 = vld [vmem:[%s465 + $0x58] sm:$0xf]
      %v663 = vld [vmem:[%s465 + $0x5c] sm:$0xf]
      %v664 = vld [vmem:[%s465 + $0x60] sm:$0xf]
      %v665 = vld [vmem:[%s465 + $0x64] sm:$0xf]
      %v666 = vld [vmem:[%s465 + $0x68] sm:$0xf]
      %v667 = vld [vmem:[%s465 + $0x6c] sm:$0xf]
      %v668 = vld [vmem:[%s465 + $0x70] sm:$0xf]
      %v669 = vld [vmem:[%s465 + $0x74] sm:$0xf]
      %v670 = vld [vmem:[%s465 + $0x78] sm:$0xf]
      %v671 = vld [vmem:[%s465 + $0x7c] sm:$0xf]
      %v672 = vunpack.c.l.bf16 %v640
      %v673 = vunpack.c.l.bf16 %v641
      %v674 = vunpack.c.l.bf16 %v642
      %v675 = vunpack.c.l.bf16 %v643
      %v676 = vunpack.c.l.bf16 %v644
      %v677 = vunpack.c.l.bf16 %v645
      %v678 = vunpack.c.l.bf16 %v646
      %v679 = vunpack.c.l.bf16 %v647
      %v680 = vunpack.c.l.bf16 %v648
      %v681 = vunpack.c.l.bf16 %v649
      %v682 = vunpack.c.l.bf16 %v650
      %v683 = vunpack.c.l.bf16 %v651
      %v684 = vunpack.c.l.bf16 %v652
      %v685 = vunpack.c.l.bf16 %v653
      %v686 = vunpack.c.l.bf16 %v654
      %v687 = vunpack.c.l.bf16 %v655
      %v688 = vunpack.c.l.bf16 %v656
      %v689 = vunpack.c.l.bf16 %v657
      %v690 = vunpack.c.l.bf16 %v658
      %v691 = vunpack.c.l.bf16 %v659
      %v692 = vunpack.c.l.bf16 %v660
      %v693 = vunpack.c.l.bf16 %v661
      %v694 = vunpack.c.l.bf16 %v662
      %v695 = vunpack.c.l.bf16 %v663
      %v696 = vunpack.c.l.bf16 %v664
      %v697 = vunpack.c.l.bf16 %v665
      %v698 = vunpack.c.l.bf16 %v666
      %v699 = vunpack.c.l.bf16 %v667
      %v700 = vunpack.c.l.bf16 %v668
      %v701 = vunpack.c.l.bf16 %v669
      %v702 = vunpack.c.l.bf16 %v670
      %v703 = vunpack.c.l.bf16 %v671
      %v704 = vld [vmem:[#allocation2] sm:$0x1]
      %v706 = vlaneseq
      %v707 = vshrl.u32 %v706, 7
      %v708 = vsub.s32 0, %v707
      %v709 = vrot.slane %v704, %v708
      %v711 = vadd.f32 %v672, %v709
      %v712 = vadd.f32 %v673, %v709
      %v713 = vadd.f32 %v674, %v709
      %v714 = vadd.f32 %v675, %v709
      %v715 = vadd.f32 %v676, %v709
      %v716 = vadd.f32 %v677, %v709
      %v717 = vadd.f32 %v678, %v709
      %v718 = vadd.f32 %v679, %v709
      %v719 = vadd.f32 %v680, %v709
      %v720 = vadd.f32 %v681, %v709
      %v721 = vadd.f32 %v682, %v709
      %v722 = vadd.f32 %v683, %v709
      %v723 = vadd.f32 %v684, %v709
      %v724 = vadd.f32 %v685, %v709
      %v725 = vadd.f32 %v686, %v709
      %v726 = vadd.f32 %v687, %v709
      %v727 = vadd.f32 %v688, %v709
      %v728 = vadd.f32 %v689, %v709
      %v729 = vadd.f32 %v690, %v709
      %v730 = vadd.f32 %v691, %v709
      %v731 = vadd.f32 %v692, %v709
      %v732 = vadd.f32 %v693, %v709
      %v733 = vadd.f32 %v694, %v709
      %v734 = vadd.f32 %v695, %v709
      %v735 = vadd.f32 %v696, %v709
      %v736 = vadd.f32 %v697, %v709
      %v737 = vadd.f32 %v698, %v709
      %v738 = vadd.f32 %v699, %v709
      %v739 = vadd.f32 %v700, %v709
      %v740 = vadd.f32 %v701, %v709
      %v741 = vadd.f32 %v702, %v709
      %v742 = vadd.f32 %v703, %v709
      %v743 = vmax.f32 %v711, 0.0
      %v744 = vmax.f32 %v712, 0.0
      %v745 = vmax.f32 %v713, 0.0
      %v746 = vmax.f32 %v714, 0.0
      %v747 = vmax.f32 %v715, 0.0
      %v748 = vmax.f32 %v716, 0.0
      %v749 = vmax.f32 %v717, 0.0
      %v750 = vmax.f32 %v718, 0.0
      %v751 = vmax.f32 %v719, 0.0
      %v752 = vmax.f32 %v720, 0.0
      %v753 = vmax.f32 %v721, 0.0
      %v754 = vmax.f32 %v722, 0.0
      %v755 = vmax.f32 %v723, 0.0
      %v756 = vmax.f32 %v724, 0.0
      %v757 = vmax.f32 %v725, 0.0
      %v758 = vmax.f32 %v726, 0.0
      %v759 = vmax.f32 %v727, 0.0
      %v760 = vmax.f32 %v728, 0.0
      %v761 = vmax.f32 %v729, 0.0
      %v762 = vmax.f32 %v730, 0.0
      %v763 = vmax.f32 %v731, 0.0
      %v764 = vmax.f32 %v732, 0.0
      %v765 = vmax.f32 %v733, 0.0
      %v766 = vmax.f32 %v734, 0.0
      %v767 = vmax.f32 %v735, 0.0
      %v768 = vmax.f32 %v736, 0.0
      %v769 = vmax.f32 %v737, 0.0
      %v770 = vmax.f32 %v738, 0.0
      %v771 = vmax.f32 %v739, 0.0
      %v772 = vmax.f32 %v740, 0.0
      %v773 = vmax.f32 %v741, 0.0
      %v774 = vmax.f32 %v742, 0.0
      %v775 = vpack.c.bf16 %v744, %v743
      %v776 = vpack.c.bf16 %v746, %v745
      %v777 = vpack.c.bf16 %v748, %v747
      %v778 = vpack.c.bf16 %v750, %v749
      %v779 = vpack.c.bf16 %v752, %v751
      %v780 = vpack.c.bf16 %v754, %v753
      %v781 = vpack.c.bf16 %v756, %v755
      %v782 = vpack.c.bf16 %v758, %v757
      %v783 = vpack.c.bf16 %v760, %v759
      %v784 = vpack.c.bf16 %v762, %v761
      %v785 = vpack.c.bf16 %v764, %v763
      %v786 = vpack.c.bf16 %v766, %v765
      %v787 = vpack.c.bf16 %v768, %v767
      %v788 = vpack.c.bf16 %v770, %v769
      %v789 = vpack.c.bf16 %v772, %v771
      %v790 = vpack.c.bf16 %v774, %v773
      %v791 = vld [vmem:[%s6] sm:$0xf]
      %v792 = vld [vmem:[%s6 + $0x4] sm:$0xf]
      %v793 = vld [vmem:[%s6 + $0x8] sm:$0xf]
      %v794 = vld [vmem:[%s6 + $0xc] sm:$0xf]
      %v795 = vld [vmem:[%s6 + $0x10] sm:$0xf]
      %v796 = vld [vmem:[%s6 + $0x14] sm:$0xf]
      %v797 = vld [vmem:[%s6 + $0x18] sm:$0xf]
      %v798 = vld [vmem:[%s6 + $0x1c] sm:$0xf]
      %v799 = vld [vmem:[%s7] sm:$0x1]
      %v801 = vlaneseq
      %v802 = vshrl.u32 %v801, 7
      %v803 = vsub.s32 0, %v802
      %v804 = vrot.slane %v799, %v803
      %v814 = vunpack.c.l.b16 %v791
      %v815 = vunpack.c.l.b16 %v792
      %v816 = vunpack.c.l.b16 %v793
      %v817 = vunpack.c.l.b16 %v794
      %v818 = vunpack.c.l.b16 %v795
      %v819 = vunpack.c.l.b16 %v796
      %v820 = vunpack.c.l.b16 %v797
      %v821 = vunpack.c.l.b16 %v798
      %v822 = vpack.c.b16 %v815, %v814
      %v823 = vpack.c.b16 %v817, %v816
      %v824 = vpack.c.b16 %v819, %v818
      %v825 = vpack.c.b16 %v821, %v820
      %vm830 = vcmask 523264
      %v832 = vsel %vm830, %v775, 0
      %v835 = vsel %vm830, %v776, 0
      %v838 = vsel %vm830, %v777, 0
      %v841 = vsel %vm830, %v778, 0
      %v844 = vsel %vm830, %v779, 0
      %v847 = vsel %vm830, %v780, 0
      %v850 = vsel %vm830, %v781, 0
      %v853 = vsel %vm830, %v782, 0
      %v856 = vsel %vm830, %v783, 0
      %v859 = vsel %vm830, %v784, 0
      %v862 = vsel %vm830, %v785, 0
      %v865 = vsel %vm830, %v786, 0
      %v868 = vsel %vm830, %v787, 0
      %v871 = vsel %vm830, %v788, 0
      %v874 = vsel %vm830, %v789, 0
      %v877 = vsel %vm830, %v790, 0
      %879 = vmatprep.subr.bf16.mxu0 0
      %880 = vmatpush1.bf16.msra.mxu0 %v822
      %881 = vmatprep.subr.bf16.mxu0 0
      %882 = vmatpush1.bf16.msra.mxu0 %v823
      %883 = vmatprep.subr.bf16.mxu0 0
      %884 = vmatpush1.bf16.msra.mxu0 %v824
      %885 = vmatprep.subr.bf16.mxu0 0
      %886 = vmatpush1.bf16.msra.mxu0 %v825
      %887 = vmatprep.subr.bf16.mxu0 0
      %888 = vmatpush1.bf16.msra.mxu0 0
      %889 = vmatprep.subr.bf16.mxu0 0
      %890 = vmatpush1.bf16.msra.mxu0 0
      %891 = vmatprep.subr.bf16.mxu0 0
      %892 = vmatpush1.bf16.msra.mxu0 0
      %893 = vmatprep.subr.bf16.mxu0 0
      %894 = vmatpush1.bf16.msra.mxu0 0
      %895 = vmatprep.subr.bf16.mxu0 0
      %896 = vmatpush1.bf16.msra.mxu0 0
      %897 = vmatprep.subr.bf16.mxu0 0
      %898 = vmatpush1.bf16.msra.mxu0 0
      %899 = vmatprep.subr.bf16.mxu0 0
      %900 = vmatpush1.bf16.msra.mxu0 0
      %901 = vmatprep.subr.bf16.mxu0 0
      %902 = vmatpush1.bf16.msra.mxu0 0
      %903 = vmatprep.subr.bf16.mxu0 0
      %904 = vmatpush1.bf16.msra.mxu0 0
      %905 = vmatprep.subr.bf16.mxu0 0
      %906 = vmatpush1.bf16.msra.mxu0 0
      %907 = vmatprep.subr.bf16.mxu0 0
      %908 = vmatpush1.bf16.msra.mxu0 0
      %909 = vmatprep.subr.bf16.mxu0 0
      %910 = vmatpush1.bf16.msra.mxu0 0
      %911 = vmatprep.mubr.bf16.mxu0 0
      %912 = vmatmul.mubr.bf16.gmra.mrb[0].mxu0 %v832
      %v913 = vpop.f32.mrb[0].mxu0
      %v914 = vadd.f32 %v804, %v913
      %v915 = vpop.f32.mrb[0].mxu0
      %v916 = vpop.f32.mrb[0].mxu0
      %v917 = vadd.f32 %v804, %v916
      %v918 = vpop.f32.mrb[0].mxu0
      %919 = vmatprep.mubr.bf16.mxu0 0
      %920 = vmatmul.mubr.bf16.gmra.mrb[0].mxu0 %v835
      %v921 = vpop.f32.mrb[0].mxu0
      %v922 = vadd.f32 %v804, %v921
      %v923 = vpop.f32.mrb[0].mxu0
      %v924 = vpop.f32.mrb[0].mxu0
      %v925 = vadd.f32 %v804, %v924
      %v926 = vpop.f32.mrb[0].mxu0
      %927 = vmatprep.mubr.bf16.mxu0 0
      %928 = vmatmul.mubr.bf16.gmra.mrb[0].mxu0 %v838
      %v929 = vpop.f32.mrb[0].mxu0
      %v930 = vadd.f32 %v804, %v929
      %v931 = vpop.f32.mrb[0].mxu0
      %v932 = vpop.f32.mrb[0].mxu0
      %v933 = vadd.f32 %v804, %v932
      %v934 = vpop.f32.mrb[0].mxu0
      %935 = vmatprep.mubr.bf16.mxu0 0
      %936 = vmatmul.mubr.bf16.gmra.mrb[0].mxu0 %v841
      %v937 = vpop.f32.mrb[0].mxu0
      %v938 = vadd.f32 %v804, %v937
      %v939 = vpop.f32.mrb[0].mxu0
      %v940 = vpop.f32.mrb[0].mxu0
      %v941 = vadd.f32 %v804, %v940
      %v942 = vpop.f32.mrb[0].mxu0
      %943 = vmatprep.mubr.bf16.mxu0 0
      %944 = vmatmul.mubr.bf16.gmra.mrb[0].mxu0 %v844
      %v945 = vpop.f32.mrb[0].mxu0
      %v946 = vadd.f32 %v804, %v945
      %v947 = vpop.f32.mrb[0].mxu0
      %v948 = vpop.f32.mrb[0].mxu0
      %v949 = vadd.f32 %v804, %v948
      %v950 = vpop.f32.mrb[0].mxu0
      %951 = vmatprep.mubr.bf16.mxu0 0
      %952 = vmatmul.mubr.bf16.gmra.mrb[0].mxu0 %v847
      %v953 = vpop.f32.mrb[0].mxu0
      %v954 = vadd.f32 %v804, %v953
      %v955 = vpop.f32.mrb[0].mxu0
      %v956 = vpop.f32.mrb[0].mxu0
      %v957 = vadd.f32 %v804, %v956
      %v958 = vpop.f32.mrb[0].mxu0
      %959 = vmatprep.mubr.bf16.mxu0 0
      %960 = vmatmul.mubr.bf16.gmra.mrb[0].mxu0 %v850
      %v961 = vpop.f32.mrb[0].mxu0
      %v962 = vadd.f32 %v804, %v961
      %v963 = vpop.f32.mrb[0].mxu0
      %v964 = vpop.f32.mrb[0].mxu0
      %v965 = vadd.f32 %v804, %v964
      %v966 = vpop.f32.mrb[0].mxu0
      %967 = vmatprep.mubr.bf16.mxu0 0
      %968 = vmatmul.mubr.bf16.gmra.mrb[0].mxu0 %v853
      %v969 = vpop.f32.mrb[0].mxu0
      %v970 = vadd.f32 %v804, %v969
      %v971 = vpop.f32.mrb[0].mxu0
      %v972 = vpop.f32.mrb[0].mxu0
      %v973 = vadd.f32 %v804, %v972
      %v974 = vpop.f32.mrb[0].mxu0
      %975 = vmatprep.mubr.bf16.mxu0 0
      %976 = vmatmul.mubr.bf16.gmra.mrb[0].mxu0 %v856
      %v977 = vpop.f32.mrb[0].mxu0
      %v978 = vadd.f32 %v804, %v977
      %v979 = vpop.f32.mrb[0].mxu0
      %v980 = vpop.f32.mrb[0].mxu0
      %v981 = vadd.f32 %v804, %v980
      %v982 = vpop.f32.mrb[0].mxu0
      %983 = vmatprep.mubr.bf16.mxu0 0
      %984 = vmatmul.mubr.bf16.gmra.mrb[0].mxu0 %v859
      %v985 = vpop.f32.mrb[0].mxu0
      %v986 = vadd.f32 %v804, %v985
      %v987 = vpop.f32.mrb[0].mxu0
      %v988 = vpop.f32.mrb[0].mxu0
      %v989 = vadd.f32 %v804, %v988
      %v990 = vpop.f32.mrb[0].mxu0
      %991 = vmatprep.mubr.bf16.mxu0 0
      %992 = vmatmul.mubr.bf16.gmra.mrb[0].mxu0 %v862
      %v993 = vpop.f32.mrb[0].mxu0
      %v994 = vadd.f32 %v804, %v993
      %v995 = vpop.f32.mrb[0].mxu0
      %v996 = vpop.f32.mrb[0].mxu0
      %v997 = vadd.f32 %v804, %v996
      %v998 = vpop.f32.mrb[0].mxu0
      %999 = vmatprep.mubr.bf16.mxu0 0
      %1000 = vmatmul.mubr.bf16.gmra.mrb[0].mxu0 %v865
      %v1001 = vpop.f32.mrb[0].mxu0
      %v1002 = vadd.f32 %v804, %v1001
      %v1003 = vpop.f32.mrb[0].mxu0
      %v1004 = vpop.f32.mrb[0].mxu0
      %v1005 = vadd.f32 %v804, %v1004
      %v1006 = vpop.f32.mrb[0].mxu0
      %1007 = vmatprep.mubr.bf16.mxu0 0
      %1008 = vmatmul.mubr.bf16.gmra.mrb[0].mxu0 %v868
      %v1009 = vpop.f32.mrb[0].mxu0
      %v1010 = vadd.f32 %v804, %v1009
      %v1011 = vpop.f32.mrb[0].mxu0
      %v1012 = vpop.f32.mrb[0].mxu0
      %v1013 = vadd.f32 %v804, %v1012
      %v1014 = vpop.f32.mrb[0].mxu0
      %1015 = vmatprep.mubr.bf16.mxu0 0
      %1016 = vmatmul.mubr.bf16.gmra.mrb[0].mxu0 %v871
      %v1017 = vpop.f32.mrb[0].mxu0
      %v1018 = vadd.f32 %v804, %v1017
      %v1019 = vpop.f32.mrb[0].mxu0
      %v1020 = vpop.f32.mrb[0].mxu0
      %v1021 = vadd.f32 %v804, %v1020
      %v1022 = vpop.f32.mrb[0].mxu0
      %1023 = vmatprep.mubr.bf16.mxu0 0
      %1024 = vmatmul.mubr.bf16.gmra.mrb[0].mxu0 %v874
      %v1025 = vpop.f32.mrb[0].mxu0
      %v1026 = vadd.f32 %v804, %v1025
      %v1027 = vpop.f32.mrb[0].mxu0
      %v1028 = vpop.f32.mrb[0].mxu0
      %v1029 = vadd.f32 %v804, %v1028
      %v1030 = vpop.f32.mrb[0].mxu0
      %1031 = vmatprep.mubr.bf16.mxu0 0
      %1032 = vmatmul.mubr.bf16.gmra.mrb[0].mxu0 %v877
      %v1033 = vpop.f32.mrb[0].mxu0
      %v1034 = vadd.f32 %v804, %v1033
      %v1035 = vpop.f32.mrb[0].mxu0
      %v1036 = vpop.f32.mrb[0].mxu0
      %v1037 = vadd.f32 %v804, %v1036
      %v1038 = vpop.f32.mrb[0].mxu0
      %1039 = vdwg.mxu0
      %v1040 = vmax.f32 %v914, 0.0
      %v1041 = vmax.f32 %v917, 0.0
      %v1042 = vmax.f32 %v922, 0.0
      %v1043 = vmax.f32 %v925, 0.0
      %v1044 = vmax.f32 %v930, 0.0
      %v1045 = vmax.f32 %v933, 0.0
      %v1046 = vmax.f32 %v938, 0.0
      %v1047 = vmax.f32 %v941, 0.0
      %v1048 = vmax.f32 %v946, 0.0
      %v1049 = vmax.f32 %v949, 0.0
      %v1050 = vmax.f32 %v954, 0.0
      %v1051 = vmax.f32 %v957, 0.0
      %v1052 = vmax.f32 %v962, 0.0
      %v1053 = vmax.f32 %v965, 0.0
      %v1054 = vmax.f32 %v970, 0.0
      %v1055 = vmax.f32 %v973, 0.0
      %v1056 = vmax.f32 %v978, 0.0
      %v1057 = vmax.f32 %v981, 0.0
      %v1058 = vmax.f32 %v986, 0.0
      %v1059 = vmax.f32 %v989, 0.0
      %v1060 = vmax.f32 %v994, 0.0
      %v1061 = vmax.f32 %v997, 0.0
      %v1062 = vmax.f32 %v1002, 0.0
      %v1063 = vmax.f32 %v1005, 0.0
      %v1064 = vmax.f32 %v1010, 0.0
      %v1065 = vmax.f32 %v1013, 0.0
      %v1066 = vmax.f32 %v1018, 0.0
      %v1067 = vmax.f32 %v1021, 0.0
      %v1068 = vmax.f32 %v1026, 0.0
      %v1069 = vmax.f32 %v1029, 0.0
      %v1070 = vmax.f32 %v1034, 0.0
      %v1071 = vmax.f32 %v1037, 0.0
      %v1072 = vpack.c.bf16 %v1041, %v1040
      %v1073 = vpack.c.bf16 %v1043, %v1042
      %v1074 = vpack.c.bf16 %v1045, %v1044
      %v1075 = vpack.c.bf16 %v1047, %v1046
      %v1076 = vpack.c.bf16 %v1049, %v1048
      %v1077 = vpack.c.bf16 %v1051, %v1050
      %v1078 = vpack.c.bf16 %v1053, %v1052
      %v1079 = vpack.c.bf16 %v1055, %v1054
      %v1080 = vpack.c.bf16 %v1057, %v1056
      %v1081 = vpack.c.bf16 %v1059, %v1058
      %v1082 = vpack.c.bf16 %v1061, %v1060
      %v1083 = vpack.c.bf16 %v1063, %v1062
      %v1084 = vpack.c.bf16 %v1065, %v1064
      %v1085 = vpack.c.bf16 %v1067, %v1066
      %v1086 = vpack.c.bf16 %v1069, %v1068
      %v1087 = vpack.c.bf16 %v1071, %v1070
      %v1088 = vld [vmem:[%s8] sm:$0xf]
      %v1089 = vld [vmem:[%s8 + $0x4] sm:$0xf]
      %v1090 = vld [vmem:[%s8 + $0x8] sm:$0xf]
      %v1091 = vld [vmem:[%s8 + $0xc] sm:$0xf]
      %v1092 = vld [vmem:[%s8 + $0x10] sm:$0xf]
      %v1093 = vld [vmem:[%s8 + $0x14] sm:$0xf]
      %v1094 = vld [vmem:[%s8 + $0x18] sm:$0xf]
      %v1095 = vld [vmem:[%s8 + $0x1c] sm:$0xf]
      %v1096 = vld [vmem:[#allocation3] sm:$0x1]
      %v1098 = vlaneseq
      %v1099 = vshrl.u32 %v1098, 7
      %v1100 = vsub.s32 0, %v1099
      %v1101 = vrot.slane %v1096, %v1100
      %v1111 = vunpack.c.l.b16 %v1088
      %v1112 = vunpack.c.l.b16 %v1089
      %v1113 = vunpack.c.l.b16 %v1090
      %v1114 = vunpack.c.l.b16 %v1091
      %v1115 = vunpack.c.l.b16 %v1092
      %v1116 = vunpack.c.l.b16 %v1093
      %v1117 = vunpack.c.l.b16 %v1094
      %v1118 = vunpack.c.l.b16 %v1095
      %v1119 = vpack.c.b16 %v1112, %v1111
      %v1120 = vpack.c.b16 %v1114, %v1113
      %v1121 = vpack.c.b16 %v1116, %v1115
      %v1122 = vpack.c.b16 %v1118, %v1117
      %v1128 = vsel %vm830, %v1072, 0
      %v1131 = vsel %vm830, %v1073, 0
      %v1134 = vsel %vm830, %v1074, 0
      %v1137 = vsel %vm830, %v1075, 0
      %v1140 = vsel %vm830, %v1076, 0
      %v1143 = vsel %vm830, %v1077, 0
      %v1146 = vsel %vm830, %v1078, 0
      %v1149 = vsel %vm830, %v1079, 0
      %v1152 = vsel %vm830, %v1080, 0
      %v1155 = vsel %vm830, %v1081, 0
      %v1158 = vsel %vm830, %v1082, 0
      %v1161 = vsel %vm830, %v1083, 0
      %v1164 = vsel %vm830, %v1084, 0
      %v1167 = vsel %vm830, %v1085, 0
      %v1170 = vsel %vm830, %v1086, 0
      %v1173 = vsel %vm830, %v1087, 0
      %1175 = vmatprep.subr.bf16.mxu0 0
      %1176 = vmatpush1.bf16.msra.mxu0 %v1119
      %1177 = vmatprep.subr.bf16.mxu0 0
      %1178 = vmatpush1.bf16.msra.mxu0 %v1120
      %1179 = vmatprep.subr.bf16.mxu0 0
      %1180 = vmatpush1.bf16.msra.mxu0 %v1121
      %1181 = vmatprep.subr.bf16.mxu0 0
      %1182 = vmatpush1.bf16.msra.mxu0 %v1122
      %1183 = vmatprep.subr.bf16.mxu0 0
      %1184 = vmatpush1.bf16.msra.mxu0 0
      %1185 = vmatprep.subr.bf16.mxu0 0
      %1186 = vmatpush1.bf16.msra.mxu0 0
      %1187 = vmatprep.subr.bf16.mxu0 0
      %1188 = vmatpush1.bf16.msra.mxu0 0
      %1189 = vmatprep.subr.bf16.mxu0 0
      %1190 = vmatpush1.bf16.msra.mxu0 0
      %1191 = vmatprep.subr.bf16.mxu0 0
      %1192 = vmatpush1.bf16.msra.mxu0 0
      %1193 = vmatprep.subr.bf16.mxu0 0
      %1194 = vmatpush1.bf16.msra.mxu0 0
      %1195 = vmatprep.subr.bf16.mxu0 0
      %1196 = vmatpush1.bf16.msra.mxu0 0
      %1197 = vmatprep.subr.bf16.mxu0 0
      %1198 = vmatpush1.bf16.msra.mxu0 0
      %1199 = vmatprep.subr.bf16.mxu0 0
      %1200 = vmatpush1.bf16.msra.mxu0 0
      %1201 = vmatprep.subr.bf16.mxu0 0
      %1202 = vmatpush1.bf16.msra.mxu0 0
      %1203 = vmatprep.subr.bf16.mxu0 0
      %1204 = vmatpush1.bf16.msra.mxu0 0
      %1205 = vmatprep.subr.bf16.mxu0 0
      %1206 = vmatpush1.bf16.msra.mxu0 0
      %1207 = vmatprep.mubr.bf16.mxu0 0
      %1208 = vmatmul.mubr.bf16.gmra.mrb[0].mxu0 %v1128
      %v1209 = vpop.f32.mrb[0].mxu0
      %v1210 = vadd.f32 %v1101, %v1209
      %v1211 = vpop.f32.mrb[0].mxu0
      %v1212 = vpop.f32.mrb[0].mxu0
      %v1213 = vadd.f32 %v1101, %v1212
      %v1214 = vpop.f32.mrb[0].mxu0
      %1215 = vmatprep.mubr.bf16.mxu0 0
      %1216 = vmatmul.mubr.bf16.gmra.mrb[0].mxu0 %v1131
      %v1217 = vpop.f32.mrb[0].mxu0
      %v1218 = vadd.f32 %v1101, %v1217
      %v1219 = vpop.f32.mrb[0].mxu0
      %v1220 = vpop.f32.mrb[0].mxu0
      %v1221 = vadd.f32 %v1101, %v1220
      %v1222 = vpop.f32.mrb[0].mxu0
      %1223 = vmatprep.mubr.bf16.mxu0 0
      %1224 = vmatmul.mubr.bf16.gmra.mrb[0].mxu0 %v1134
      %v1225 = vpop.f32.mrb[0].mxu0
      %v1226 = vadd.f32 %v1101, %v1225
      %v1227 = vpop.f32.mrb[0].mxu0
      %v1228 = vpop.f32.mrb[0].mxu0
      %v1229 = vadd.f32 %v1101, %v1228
      %v1230 = vpop.f32.mrb[0].mxu0
      %1231 = vmatprep.mubr.bf16.mxu0 0
      %1232 = vmatmul.mubr.bf16.gmra.mrb[0].mxu0 %v1137
      %v1233 = vpop.f32.mrb[0].mxu0
      %v1234 = vadd.f32 %v1101, %v1233
      %v1235 = vpop.f32.mrb[0].mxu0
      %v1236 = vpop.f32.mrb[0].mxu0
      %v1237 = vadd.f32 %v1101, %v1236
      %v1238 = vpop.f32.mrb[0].mxu0
      %1239 = vmatprep.mubr.bf16.mxu0 0
      %1240 = vmatmul.mubr.bf16.gmra.mrb[0].mxu0 %v1140
      %v1241 = vpop.f32.mrb[0].mxu0
      %v1242 = vadd.f32 %v1101, %v1241
      %v1243 = vpop.f32.mrb[0].mxu0
      %v1244 = vpop.f32.mrb[0].mxu0
      %v1245 = vadd.f32 %v1101, %v1244
      %v1246 = vpop.f32.mrb[0].mxu0
      %1247 = vmatprep.mubr.bf16.mxu0 0
      %1248 = vmatmul.mubr.bf16.gmra.mrb[0].mxu0 %v1143
      %v1249 = vpop.f32.mrb[0].mxu0
      %v1250 = vadd.f32 %v1101, %v1249
      %v1251 = vpop.f32.mrb[0].mxu0
      %v1252 = vpop.f32.mrb[0].mxu0
      %v1253 = vadd.f32 %v1101, %v1252
      %v1254 = vpop.f32.mrb[0].mxu0
      %1255 = vmatprep.mubr.bf16.mxu0 0
      %1256 = vmatmul.mubr.bf16.gmra.mrb[0].mxu0 %v1146
      %v1257 = vpop.f32.mrb[0].mxu0
      %v1258 = vadd.f32 %v1101, %v1257
      %v1259 = vpop.f32.mrb[0].mxu0
      %v1260 = vpop.f32.mrb[0].mxu0
      %v1261 = vadd.f32 %v1101, %v1260
      %v1262 = vpop.f32.mrb[0].mxu0
      %1263 = vmatprep.mubr.bf16.mxu0 0
      %1264 = vmatmul.mubr.bf16.gmra.mrb[0].mxu0 %v1149
      %v1265 = vpop.f32.mrb[0].mxu0
      %v1266 = vadd.f32 %v1101, %v1265
      %v1267 = vpop.f32.mrb[0].mxu0
      %v1268 = vpop.f32.mrb[0].mxu0
      %v1269 = vadd.f32 %v1101, %v1268
      %v1270 = vpop.f32.mrb[0].mxu0
      %1271 = vmatprep.mubr.bf16.mxu0 0
      %1272 = vmatmul.mubr.bf16.gmra.mrb[0].mxu0 %v1152
      %v1273 = vpop.f32.mrb[0].mxu0
      %v1274 = vadd.f32 %v1101, %v1273
      %v1275 = vpop.f32.mrb[0].mxu0
      %v1276 = vpop.f32.mrb[0].mxu0
      %v1277 = vadd.f32 %v1101, %v1276
      %v1278 = vpop.f32.mrb[0].mxu0
      %1279 = vmatprep.mubr.bf16.mxu0 0
      %1280 = vmatmul.mubr.bf16.gmra.mrb[0].mxu0 %v1155
      %v1281 = vpop.f32.mrb[0].mxu0
      %v1282 = vadd.f32 %v1101, %v1281
      %v1283 = vpop.f32.mrb[0].mxu0
      %v1284 = vpop.f32.mrb[0].mxu0
      %v1285 = vadd.f32 %v1101, %v1284
      %v1286 = vpop.f32.mrb[0].mxu0
      %1287 = vmatprep.mubr.bf16.mxu0 0
      %1288 = vmatmul.mubr.bf16.gmra.mrb[0].mxu0 %v1158
      %v1289 = vpop.f32.mrb[0].mxu0
      %v1290 = vadd.f32 %v1101, %v1289
      %v1291 = vpop.f32.mrb[0].mxu0
      %v1292 = vpop.f32.mrb[0].mxu0
      %v1293 = vadd.f32 %v1101, %v1292
      %v1294 = vpop.f32.mrb[0].mxu0
      %1295 = vmatprep.mubr.bf16.mxu0 0
      %1296 = vmatmul.mubr.bf16.gmra.mrb[0].mxu0 %v1161
      %v1297 = vpop.f32.mrb[0].mxu0
      %v1298 = vadd.f32 %v1101, %v1297
      %v1299 = vpop.f32.mrb[0].mxu0
      %v1300 = vpop.f32.mrb[0].mxu0
      %v1301 = vadd.f32 %v1101, %v1300
      %v1302 = vpop.f32.mrb[0].mxu0
      %1303 = vmatprep.mubr.bf16.mxu0 0
      %1304 = vmatmul.mubr.bf16.gmra.mrb[0].mxu0 %v1164
      %v1305 = vpop.f32.mrb[0].mxu0
      %v1306 = vadd.f32 %v1101, %v1305
      %v1307 = vpop.f32.mrb[0].mxu0
      %v1308 = vpop.f32.mrb[0].mxu0
      %v1309 = vadd.f32 %v1101, %v1308
      %v1310 = vpop.f32.mrb[0].mxu0
      %1311 = vmatprep.mubr.bf16.mxu0 0
      %1312 = vmatmul.mubr.bf16.gmra.mrb[0].mxu0 %v1167
      %v1313 = vpop.f32.mrb[0].mxu0
      %v1314 = vadd.f32 %v1101, %v1313
      %v1315 = vpop.f32.mrb[0].mxu0
      %v1316 = vpop.f32.mrb[0].mxu0
      %v1317 = vadd.f32 %v1101, %v1316
      %v1318 = vpop.f32.mrb[0].mxu0
      %1319 = vmatprep.mubr.bf16.mxu0 0
      %1320 = vmatmul.mubr.bf16.gmra.mrb[0].mxu0 %v1170
      %v1321 = vpop.f32.mrb[0].mxu0
      %v1322 = vadd.f32 %v1101, %v1321
      %v1323 = vpop.f32.mrb[0].mxu0
      %v1324 = vpop.f32.mrb[0].mxu0
      %v1325 = vadd.f32 %v1101, %v1324
      %v1326 = vpop.f32.mrb[0].mxu0
      %1327 = vmatprep.mubr.bf16.mxu0 0
      %1328 = vmatmul.mubr.bf16.gmra.mrb[0].mxu0 %v1173
      %v1329 = vpop.f32.mrb[0].mxu0
      %v1330 = vadd.f32 %v1101, %v1329
      %v1331 = vpop.f32.mrb[0].mxu0
      %v1332 = vpop.f32.mrb[0].mxu0
      %v1333 = vadd.f32 %v1101, %v1332
      %v1334 = vpop.f32.mrb[0].mxu0
      %1335 = vdwg.mxu0
      %v1336 = vmax.f32 %v1210, 0.0
      %v1337 = vmax.f32 %v1213, 0.0
      %v1338 = vmax.f32 %v1218, 0.0
      %v1339 = vmax.f32 %v1221, 0.0
      %v1340 = vmax.f32 %v1226, 0.0
      %v1341 = vmax.f32 %v1229, 0.0
      %v1342 = vmax.f32 %v1234, 0.0
      %v1343 = vmax.f32 %v1237, 0.0
      %v1344 = vmax.f32 %v1242, 0.0
      %v1345 = vmax.f32 %v1245, 0.0
      %v1346 = vmax.f32 %v1250, 0.0
      %v1347 = vmax.f32 %v1253, 0.0
      %v1348 = vmax.f32 %v1258, 0.0
      %v1349 = vmax.f32 %v1261, 0.0
      %v1350 = vmax.f32 %v1266, 0.0
      %v1351 = vmax.f32 %v1269, 0.0
      %v1352 = vmax.f32 %v1274, 0.0
      %v1353 = vmax.f32 %v1277, 0.0
      %v1354 = vmax.f32 %v1282, 0.0
      %v1355 = vmax.f32 %v1285, 0.0
      %v1356 = vmax.f32 %v1290, 0.0
      %v1357 = vmax.f32 %v1293, 0.0
      %v1358 = vmax.f32 %v1298, 0.0
      %v1359 = vmax.f32 %v1301, 0.0
      %v1360 = vmax.f32 %v1306, 0.0
      %v1361 = vmax.f32 %v1309, 0.0
      %v1362 = vmax.f32 %v1314, 0.0
      %v1363 = vmax.f32 %v1317, 0.0
      %v1364 = vmax.f32 %v1322, 0.0
      %v1365 = vmax.f32 %v1325, 0.0
      %v1366 = vmax.f32 %v1330, 0.0
      %v1367 = vmax.f32 %v1333, 0.0
      %v1368 = vpack.c.bf16 %v1337, %v1336
      %v1369 = vpack.c.bf16 %v1339, %v1338
      %v1370 = vpack.c.bf16 %v1341, %v1340
      %v1371 = vpack.c.bf16 %v1343, %v1342
      %v1372 = vpack.c.bf16 %v1345, %v1344
      %v1373 = vpack.c.bf16 %v1347, %v1346
      %v1374 = vpack.c.bf16 %v1349, %v1348
      %v1375 = vpack.c.bf16 %v1351, %v1350
      %v1376 = vpack.c.bf16 %v1353, %v1352
      %v1377 = vpack.c.bf16 %v1355, %v1354
      %v1378 = vpack.c.bf16 %v1357, %v1356
      %v1379 = vpack.c.bf16 %v1359, %v1358
      %v1380 = vpack.c.bf16 %v1361, %v1360
      %v1381 = vpack.c.bf16 %v1363, %v1362
      %v1382 = vpack.c.bf16 %v1365, %v1364
      %v1383 = vpack.c.bf16 %v1367, %v1366
      %v1384 = vld [vmem:[%s9] sm:$0xf]
      %v1385 = vld [vmem:[%s9 + $0x4] sm:$0xf]
      %v1386 = vld [vmem:[%s9 + $0x8] sm:$0xf]
      %v1387 = vld [vmem:[%s9 + $0xc] sm:$0xf]
      %v1388 = vld [vmem:[%s9 + $0x10] sm:$0xf]
      %v1389 = vld [vmem:[%s9 + $0x14] sm:$0xf]
      %v1390 = vld [vmem:[%s9 + $0x18] sm:$0xf]
      %v1391 = vld [vmem:[%s9 + $0x1c] sm:$0xf]
      %v1392 = vld [vmem:[%s10] sm:$0x1]
      %v1394 = vlaneseq
      %v1395 = vshrl.u32 %v1394, 7
      %v1396 = vsub.s32 0, %v1395
      %v1397 = vrot.slane %v1392, %v1396
      %v1407 = vunpack.c.l.b16 %v1384
      %v1408 = vunpack.c.l.b16 %v1385
      %v1409 = vunpack.c.l.b16 %v1386
      %v1410 = vunpack.c.l.b16 %v1387
      %v1411 = vunpack.c.l.b16 %v1388
      %v1412 = vunpack.c.l.b16 %v1389
      %v1413 = vunpack.c.l.b16 %v1390
      %v1414 = vunpack.c.l.b16 %v1391
      %v1415 = vpack.c.b16 %v1408, %v1407
      %v1416 = vpack.c.b16 %v1410, %v1409
      %v1417 = vpack.c.b16 %v1412, %v1411
      %v1418 = vpack.c.b16 %v1414, %v1413
      %v1424 = vsel %vm830, %v1368, 0
      %v1427 = vsel %vm830, %v1369, 0
      %v1430 = vsel %vm830, %v1370, 0
      %v1433 = vsel %vm830, %v1371, 0
      %v1436 = vsel %vm830, %v1372, 0
      %v1439 = vsel %vm830, %v1373, 0
      %v1442 = vsel %vm830, %v1374, 0
      %v1445 = vsel %vm830, %v1375, 0
      %v1448 = vsel %vm830, %v1376, 0
      %v1451 = vsel %vm830, %v1377, 0
      %v1454 = vsel %vm830, %v1378, 0
      %v1457 = vsel %vm830, %v1379, 0
      %v1460 = vsel %vm830, %v1380, 0
      %v1463 = vsel %vm830, %v1381, 0
      %v1466 = vsel %vm830, %v1382, 0
      %v1469 = vsel %vm830, %v1383, 0
      %1471 = vmatprep.subr.bf16.mxu0 0
      %1472 = vmatpush1.bf16.msra.mxu0 %v1415
      %1473 = vmatprep.subr.bf16.mxu0 0
      %1474 = vmatpush1.bf16.msra.mxu0 %v1416
      %1475 = vmatprep.subr.bf16.mxu0 0
      %1476 = vmatpush1.bf16.msra.mxu0 %v1417
      %1477 = vmatprep.subr.bf16.mxu0 0
      %1478 = vmatpush1.bf16.msra.mxu0 %v1418
      %1479 = vmatprep.subr.bf16.mxu0 0
      %1480 = vmatpush1.bf16.msra.mxu0 0
      %1481 = vmatprep.subr.bf16.mxu0 0
      %1482 = vmatpush1.bf16.msra.mxu0 0
      %1483 = vmatprep.subr.bf16.mxu0 0
      %1484 = vmatpush1.bf16.msra.mxu0 0
      %1485 = vmatprep.subr.bf16.mxu0 0
      %1486 = vmatpush1.bf16.msra.mxu0 0
      %1487 = vmatprep.subr.bf16.mxu0 0
      %1488 = vmatpush1.bf16.msra.mxu0 0
      %1489 = vmatprep.subr.bf16.mxu0 0
      %1490 = vmatpush1.bf16.msra.mxu0 0
      %1491 = vmatprep.subr.bf16.mxu0 0
      %1492 = vmatpush1.bf16.msra.mxu0 0
      %1493 = vmatprep.subr.bf16.mxu0 0
      %1494 = vmatpush1.bf16.msra.mxu0 0
      %1495 = vmatprep.subr.bf16.mxu0 0
      %1496 = vmatpush1.bf16.msra.mxu0 0
      %1497 = vmatprep.subr.bf16.mxu0 0
      %1498 = vmatpush1.bf16.msra.mxu0 0
      %1499 = vmatprep.subr.bf16.mxu0 0
      %1500 = vmatpush1.bf16.msra.mxu0 0
      %1501 = vmatprep.subr.bf16.mxu0 0
      %1502 = vmatpush1.bf16.msra.mxu0 0
      %1503 = vmatprep.mubr.bf16.mxu0 0
      %1504 = vmatmul.mubr.bf16.gmra.mrb[0].mxu0 %v1424
      %v1505 = vpop.f32.mrb[0].mxu0
      %v1506 = vadd.f32 %v1397, %v1505
      %v1507 = vpop.f32.mrb[0].mxu0
      %v1508 = vpop.f32.mrb[0].mxu0
      %v1509 = vadd.f32 %v1397, %v1508
      %v1510 = vpop.f32.mrb[0].mxu0
      %1511 = vmatprep.mubr.bf16.mxu0 0
      %1512 = vmatmul.mubr.bf16.gmra.mrb[0].mxu0 %v1427
      %v1513 = vpop.f32.mrb[0].mxu0
      %v1514 = vadd.f32 %v1397, %v1513
      %v1515 = vpop.f32.mrb[0].mxu0
      %v1516 = vpop.f32.mrb[0].mxu0
      %v1517 = vadd.f32 %v1397, %v1516
      %v1518 = vpop.f32.mrb[0].mxu0
      %1519 = vmatprep.mubr.bf16.mxu0 0
      %1520 = vmatmul.mubr.bf16.gmra.mrb[0].mxu0 %v1430
      %v1521 = vpop.f32.mrb[0].mxu0
      %v1522 = vadd.f32 %v1397, %v1521
      %v1523 = vpop.f32.mrb[0].mxu0
      %v1524 = vpop.f32.mrb[0].mxu0
      %v1525 = vadd.f32 %v1397, %v1524
      %v1526 = vpop.f32.mrb[0].mxu0
      %1527 = vmatprep.mubr.bf16.mxu0 0
      %1528 = vmatmul.mubr.bf16.gmra.mrb[0].mxu0 %v1433
      %v1529 = vpop.f32.mrb[0].mxu0
      %v1530 = vadd.f32 %v1397, %v1529
      %v1531 = vpop.f32.mrb[0].mxu0
      %v1532 = vpop.f32.mrb[0].mxu0
      %v1533 = vadd.f32 %v1397, %v1532
      %v1534 = vpop.f32.mrb[0].mxu0
      %1535 = vmatprep.mubr.bf16.mxu0 0
      %1536 = vmatmul.mubr.bf16.gmra.mrb[0].mxu0 %v1436
      %v1537 = vpop.f32.mrb[0].mxu0
      %v1538 = vadd.f32 %v1397, %v1537
      %v1539 = vpop.f32.mrb[0].mxu0
      %v1540 = vpop.f32.mrb[0].mxu0
      %v1541 = vadd.f32 %v1397, %v1540
      %v1542 = vpop.f32.mrb[0].mxu0
      %1543 = vmatprep.mubr.bf16.mxu0 0
      %1544 = vmatmul.mubr.bf16.gmra.mrb[0].mxu0 %v1439
      %v1545 = vpop.f32.mrb[0].mxu0
      %v1546 = vadd.f32 %v1397, %v1545
      %v1547 = vpop.f32.mrb[0].mxu0
      %v1548 = vpop.f32.mrb[0].mxu0
      %v1549 = vadd.f32 %v1397, %v1548
      %v1550 = vpop.f32.mrb[0].mxu0
      %1551 = vmatprep.mubr.bf16.mxu0 0
      %1552 = vmatmul.mubr.bf16.gmra.mrb[0].mxu0 %v1442
      %v1553 = vpop.f32.mrb[0].mxu0
      %v1554 = vadd.f32 %v1397, %v1553
      %v1555 = vpop.f32.mrb[0].mxu0
      %v1556 = vpop.f32.mrb[0].mxu0
      %v1557 = vadd.f32 %v1397, %v1556
      %v1558 = vpop.f32.mrb[0].mxu0
      %1559 = vmatprep.mubr.bf16.mxu0 0
      %1560 = vmatmul.mubr.bf16.gmra.mrb[0].mxu0 %v1445
      %v1561 = vpop.f32.mrb[0].mxu0
      %v1562 = vadd.f32 %v1397, %v1561
      %v1563 = vpop.f32.mrb[0].mxu0
      %v1564 = vpop.f32.mrb[0].mxu0
      %v1565 = vadd.f32 %v1397, %v1564
      %v1566 = vpop.f32.mrb[0].mxu0
      %1567 = vmatprep.mubr.bf16.mxu0 0
      %1568 = vmatmul.mubr.bf16.gmra.mrb[0].mxu0 %v1448
      %v1569 = vpop.f32.mrb[0].mxu0
      %v1570 = vadd.f32 %v1397, %v1569
      %v1571 = vpop.f32.mrb[0].mxu0
      %v1572 = vpop.f32.mrb[0].mxu0
      %v1573 = vadd.f32 %v1397, %v1572
      %v1574 = vpop.f32.mrb[0].mxu0
      %1575 = vmatprep.mubr.bf16.mxu0 0
      %1576 = vmatmul.mubr.bf16.gmra.mrb[0].mxu0 %v1451
      %v1577 = vpop.f32.mrb[0].mxu0
      %v1578 = vadd.f32 %v1397, %v1577
      %v1579 = vpop.f32.mrb[0].mxu0
      %v1580 = vpop.f32.mrb[0].mxu0
      %v1581 = vadd.f32 %v1397, %v1580
      %v1582 = vpop.f32.mrb[0].mxu0
      %1583 = vmatprep.mubr.bf16.mxu0 0
      %1584 = vmatmul.mubr.bf16.gmra.mrb[0].mxu0 %v1454
      %v1585 = vpop.f32.mrb[0].mxu0
      %v1586 = vadd.f32 %v1397, %v1585
      %v1587 = vpop.f32.mrb[0].mxu0
      %v1588 = vpop.f32.mrb[0].mxu0
      %v1589 = vadd.f32 %v1397, %v1588
      %v1590 = vpop.f32.mrb[0].mxu0
      %1591 = vmatprep.mubr.bf16.mxu0 0
      %1592 = vmatmul.mubr.bf16.gmra.mrb[0].mxu0 %v1457
      %v1593 = vpop.f32.mrb[0].mxu0
      %v1594 = vadd.f32 %v1397, %v1593
      %v1595 = vpop.f32.mrb[0].mxu0
      %v1596 = vpop.f32.mrb[0].mxu0
      %v1597 = vadd.f32 %v1397, %v1596
      %v1598 = vpop.f32.mrb[0].mxu0
      %1599 = vmatprep.mubr.bf16.mxu0 0
      %1600 = vmatmul.mubr.bf16.gmra.mrb[0].mxu0 %v1460
      %v1601 = vpop.f32.mrb[0].mxu0
      %v1602 = vadd.f32 %v1397, %v1601
      %v1603 = vpop.f32.mrb[0].mxu0
      %v1604 = vpop.f32.mrb[0].mxu0
      %v1605 = vadd.f32 %v1397, %v1604
      %v1606 = vpop.f32.mrb[0].mxu0
      %1607 = vmatprep.mubr.bf16.mxu0 0
      %1608 = vmatmul.mubr.bf16.gmra.mrb[0].mxu0 %v1463
      %v1609 = vpop.f32.mrb[0].mxu0
      %v1610 = vadd.f32 %v1397, %v1609
      %v1611 = vpop.f32.mrb[0].mxu0
      %v1612 = vpop.f32.mrb[0].mxu0
      %v1613 = vadd.f32 %v1397, %v1612
      %v1614 = vpop.f32.mrb[0].mxu0
      %1615 = vmatprep.mubr.bf16.mxu0 0
      %1616 = vmatmul.mubr.bf16.gmra.mrb[0].mxu0 %v1466
      %v1617 = vpop.f32.mrb[0].mxu0
      %v1618 = vadd.f32 %v1397, %v1617
      %v1619 = vpop.f32.mrb[0].mxu0
      %v1620 = vpop.f32.mrb[0].mxu0
      %v1621 = vadd.f32 %v1397, %v1620
      %v1622 = vpop.f32.mrb[0].mxu0
      %1623 = vmatprep.mubr.bf16.mxu0 0
      %1624 = vmatmul.mubr.bf16.gmra.mrb[0].mxu0 %v1469
      %v1625 = vpop.f32.mrb[0].mxu0
      %v1626 = vadd.f32 %v1397, %v1625
      %v1627 = vpop.f32.mrb[0].mxu0
      %v1628 = vpop.f32.mrb[0].mxu0
      %v1629 = vadd.f32 %v1397, %v1628
      %v1630 = vpop.f32.mrb[0].mxu0
      %1631 = vdwg.mxu0
      %v1632 = vmax.f32 %v1506, 0.0
      %v1633 = vmax.f32 %v1509, 0.0
      %v1634 = vmax.f32 %v1514, 0.0
      %v1635 = vmax.f32 %v1517, 0.0
      %v1636 = vmax.f32 %v1522, 0.0
      %v1637 = vmax.f32 %v1525, 0.0
      %v1638 = vmax.f32 %v1530, 0.0
      %v1639 = vmax.f32 %v1533, 0.0
      %v1640 = vmax.f32 %v1538, 0.0
      %v1641 = vmax.f32 %v1541, 0.0
      %v1642 = vmax.f32 %v1546, 0.0
      %v1643 = vmax.f32 %v1549, 0.0
      %v1644 = vmax.f32 %v1554, 0.0
      %v1645 = vmax.f32 %v1557, 0.0
      %v1646 = vmax.f32 %v1562, 0.0
      %v1647 = vmax.f32 %v1565, 0.0
      %v1648 = vmax.f32 %v1570, 0.0
      %v1649 = vmax.f32 %v1573, 0.0
      %v1650 = vmax.f32 %v1578, 0.0
      %v1651 = vmax.f32 %v1581, 0.0
      %v1652 = vmax.f32 %v1586, 0.0
      %v1653 = vmax.f32 %v1589, 0.0
      %v1654 = vmax.f32 %v1594, 0.0
      %v1655 = vmax.f32 %v1597, 0.0
      %v1656 = vmax.f32 %v1602, 0.0
      %v1657 = vmax.f32 %v1605, 0.0
      %v1658 = vmax.f32 %v1610, 0.0
      %v1659 = vmax.f32 %v1613, 0.0
      %v1660 = vmax.f32 %v1618, 0.0
      %v1661 = vmax.f32 %v1621, 0.0
      %v1662 = vmax.f32 %v1626, 0.0
      %v1663 = vmax.f32 %v1629, 0.0
      %v1664 = vpack.c.bf16 %v1633, %v1632
      %v1665 = vpack.c.bf16 %v1635, %v1634
      %v1666 = vpack.c.bf16 %v1637, %v1636
      %v1667 = vpack.c.bf16 %v1639, %v1638
      %v1668 = vpack.c.bf16 %v1641, %v1640
      %v1669 = vpack.c.bf16 %v1643, %v1642
      %v1670 = vpack.c.bf16 %v1645, %v1644
      %v1671 = vpack.c.bf16 %v1647, %v1646
      %v1672 = vpack.c.bf16 %v1649, %v1648
      %v1673 = vpack.c.bf16 %v1651, %v1650
      %v1674 = vpack.c.bf16 %v1653, %v1652
      %v1675 = vpack.c.bf16 %v1655, %v1654
      %v1676 = vpack.c.bf16 %v1657, %v1656
      %v1677 = vpack.c.bf16 %v1659, %v1658
      %v1678 = vpack.c.bf16 %v1661, %v1660
      %v1679 = vpack.c.bf16 %v1663, %v1662
      %v1680 = vld [vmem:[%s11] sm:$0xf]
      %v1681 = vld [vmem:[%s11 + $0x4] sm:$0xf]
      %v1682 = vld [vmem:[%s11 + $0x8] sm:$0xf]
      %v1683 = vld [vmem:[%s11 + $0xc] sm:$0xf]
      %v1684 = vld [vmem:[%s11 + $0x10] sm:$0xf]
      %v1685 = vld [vmem:[%s11 + $0x14] sm:$0xf]
      %v1686 = vld [vmem:[%s11 + $0x18] sm:$0xf]
      %v1687 = vld [vmem:[%s11 + $0x1c] sm:$0xf]
      %v1688 = vld [vmem:[%s12] sm:$0x1]
      %v1690 = vlaneseq
      %v1691 = vshrl.u32 %v1690, 7
      %v1692 = vsub.s32 0, %v1691
      %v1693 = vrot.slane %v1688, %v1692
      %v1703 = vunpack.c.l.b16 %v1680
      %v1704 = vunpack.c.l.b16 %v1681
      %v1705 = vunpack.c.l.b16 %v1682
      %v1706 = vunpack.c.l.b16 %v1683
      %v1707 = vunpack.c.l.b16 %v1684
      %v1708 = vunpack.c.l.b16 %v1685
      %v1709 = vunpack.c.l.b16 %v1686
      %v1710 = vunpack.c.l.b16 %v1687
      %v1711 = vpack.c.b16 %v1704, %v1703
      %v1712 = vpack.c.b16 %v1706, %v1705
      %v1713 = vpack.c.b16 %v1708, %v1707
      %v1714 = vpack.c.b16 %v1710, %v1709
      %v1720 = vsel %vm830, %v1664, 0
      %v1723 = vsel %vm830, %v1665, 0
      %v1726 = vsel %vm830, %v1666, 0
      %v1729 = vsel %vm830, %v1667, 0
      %v1732 = vsel %vm830, %v1668, 0
      %v1735 = vsel %vm830, %v1669, 0
      %v1738 = vsel %vm830, %v1670, 0
      %v1741 = vsel %vm830, %v1671, 0
      %v1744 = vsel %vm830, %v1672, 0
      %v1747 = vsel %vm830, %v1673, 0
      %v1750 = vsel %vm830, %v1674, 0
      %v1753 = vsel %vm830, %v1675, 0
      %v1756 = vsel %vm830, %v1676, 0
      %v1759 = vsel %vm830, %v1677, 0
      %v1762 = vsel %vm830, %v1678, 0
      %v1765 = vsel %vm830, %v1679, 0
      %1767 = vmatprep.subr.bf16.mxu0 0
      %1768 = vmatpush1.bf16.msra.mxu0 %v1711
      %1769 = vmatprep.subr.bf16.mxu0 0
      %1770 = vmatpush1.bf16.msra.mxu0 %v1712
      %1771 = vmatprep.subr.bf16.mxu0 0
      %1772 = vmatpush1.bf16.msra.mxu0 %v1713
      %1773 = vmatprep.subr.bf16.mxu0 0
      %1774 = vmatpush1.bf16.msra.mxu0 %v1714
      %1775 = vmatprep.subr.bf16.mxu0 0
      %1776 = vmatpush1.bf16.msra.mxu0 0
      %1777 = vmatprep.subr.bf16.mxu0 0
      %1778 = vmatpush1.bf16.msra.mxu0 0
      %1779 = vmatprep.subr.bf16.mxu0 0
      %1780 = vmatpush1.bf16.msra.mxu0 0
      %1781 = vmatprep.subr.bf16.mxu0 0
      %1782 = vmatpush1.bf16.msra.mxu0 0
      %1783 = vmatprep.subr.bf16.mxu0 0
      %1784 = vmatpush1.bf16.msra.mxu0 0
      %1785 = vmatprep.subr.bf16.mxu0 0
      %1786 = vmatpush1.bf16.msra.mxu0 0
      %1787 = vmatprep.subr.bf16.mxu0 0
      %1788 = vmatpush1.bf16.msra.mxu0 0
      %1789 = vmatprep.subr.bf16.mxu0 0
      %1790 = vmatpush1.bf16.msra.mxu0 0
      %1791 = vmatprep.subr.bf16.mxu0 0
      %1792 = vmatpush1.bf16.msra.mxu0 0
      %1793 = vmatprep.subr.bf16.mxu0 0
      %1794 = vmatpush1.bf16.msra.mxu0 0
      %1795 = vmatprep.subr.bf16.mxu0 0
      %1796 = vmatpush1.bf16.msra.mxu0 0
      %1797 = vmatprep.subr.bf16.mxu0 0
      %1798 = vmatpush1.bf16.msra.mxu0 0
      %1799 = vmatprep.mubr.bf16.mxu0 0
      %1800 = vmatmul.mubr.bf16.gmra.mrb[0].mxu0 %v1720
      %v1801 = vpop.f32.mrb[0].mxu0
      %v1802 = vadd.f32 %v1693, %v1801
      %v1803 = vpop.f32.mrb[0].mxu0
      %v1804 = vpop.f32.mrb[0].mxu0
      %v1805 = vadd.f32 %v1693, %v1804
      %v1806 = vpop.f32.mrb[0].mxu0
      %1807 = vmatprep.mubr.bf16.mxu0 0
      %1808 = vmatmul.mubr.bf16.gmra.mrb[0].mxu0 %v1723
      %v1809 = vpop.f32.mrb[0].mxu0
      %v1810 = vadd.f32 %v1693, %v1809
      %v1811 = vpop.f32.mrb[0].mxu0
      %v1812 = vpop.f32.mrb[0].mxu0
      %v1813 = vadd.f32 %v1693, %v1812
      %v1814 = vpop.f32.mrb[0].mxu0
      %1815 = vmatprep.mubr.bf16.mxu0 0
      %1816 = vmatmul.mubr.bf16.gmra.mrb[0].mxu0 %v1726
      %v1817 = vpop.f32.mrb[0].mxu0
      %v1818 = vadd.f32 %v1693, %v1817
      %v1819 = vpop.f32.mrb[0].mxu0
      %v1820 = vpop.f32.mrb[0].mxu0
      %v1821 = vadd.f32 %v1693, %v1820
      %v1822 = vpop.f32.mrb[0].mxu0
      %1823 = vmatprep.mubr.bf16.mxu0 0
      %1824 = vmatmul.mubr.bf16.gmra.mrb[0].mxu0 %v1729
      %v1825 = vpop.f32.mrb[0].mxu0
      %v1826 = vadd.f32 %v1693, %v1825
      %v1827 = vpop.f32.mrb[0].mxu0
      %v1828 = vpop.f32.mrb[0].mxu0
      %v1829 = vadd.f32 %v1693, %v1828
      %v1830 = vpop.f32.mrb[0].mxu0
      %1831 = vmatprep.mubr.bf16.mxu0 0
      %1832 = vmatmul.mubr.bf16.gmra.mrb[0].mxu0 %v1732
      %v1833 = vpop.f32.mrb[0].mxu0
      %v1834 = vadd.f32 %v1693, %v1833
      %v1835 = vpop.f32.mrb[0].mxu0
      %v1836 = vpop.f32.mrb[0].mxu0
      %v1837 = vadd.f32 %v1693, %v1836
      %v1838 = vpop.f32.mrb[0].mxu0
      %1839 = vmatprep.mubr.bf16.mxu0 0
      %1840 = vmatmul.mubr.bf16.gmra.mrb[0].mxu0 %v1735
      %v1841 = vpop.f32.mrb[0].mxu0
      %v1842 = vadd.f32 %v1693, %v1841
      %v1843 = vpop.f32.mrb[0].mxu0
      %v1844 = vpop.f32.mrb[0].mxu0
      %v1845 = vadd.f32 %v1693, %v1844
      %v1846 = vpop.f32.mrb[0].mxu0
      %1847 = vmatprep.mubr.bf16.mxu0 0
      %1848 = vmatmul.mubr.bf16.gmra.mrb[0].mxu0 %v1738
      %v1849 = vpop.f32.mrb[0].mxu0
      %v1850 = vadd.f32 %v1693, %v1849
      %v1851 = vpop.f32.mrb[0].mxu0
      %v1852 = vpop.f32.mrb[0].mxu0
      %v1853 = vadd.f32 %v1693, %v1852
      %v1854 = vpop.f32.mrb[0].mxu0
      %1855 = vmatprep.mubr.bf16.mxu0 0
      %1856 = vmatmul.mubr.bf16.gmra.mrb[0].mxu0 %v1741
      %v1857 = vpop.f32.mrb[0].mxu0
      %v1858 = vadd.f32 %v1693, %v1857
      %v1859 = vpop.f32.mrb[0].mxu0
      %v1860 = vpop.f32.mrb[0].mxu0
      %v1861 = vadd.f32 %v1693, %v1860
      %v1862 = vpop.f32.mrb[0].mxu0
      %1863 = vmatprep.mubr.bf16.mxu0 0
      %1864 = vmatmul.mubr.bf16.gmra.mrb[0].mxu0 %v1744
      %v1865 = vpop.f32.mrb[0].mxu0
      %v1866 = vadd.f32 %v1693, %v1865
      %v1867 = vpop.f32.mrb[0].mxu0
      %v1868 = vpop.f32.mrb[0].mxu0
      %v1869 = vadd.f32 %v1693, %v1868
      %v1870 = vpop.f32.mrb[0].mxu0
      %1871 = vmatprep.mubr.bf16.mxu0 0
      %1872 = vmatmul.mubr.bf16.gmra.mrb[0].mxu0 %v1747
      %v1873 = vpop.f32.mrb[0].mxu0
      %v1874 = vadd.f32 %v1693, %v1873
      %v1875 = vpop.f32.mrb[0].mxu0
      %v1876 = vpop.f32.mrb[0].mxu0
      %v1877 = vadd.f32 %v1693, %v1876
      %v1878 = vpop.f32.mrb[0].mxu0
      %1879 = vmatprep.mubr.bf16.mxu0 0
      %1880 = vmatmul.mubr.bf16.gmra.mrb[0].mxu0 %v1750
      %v1881 = vpop.f32.mrb[0].mxu0
      %v1882 = vadd.f32 %v1693, %v1881
      %v1883 = vpop.f32.mrb[0].mxu0
      %v1884 = vpop.f32.mrb[0].mxu0
      %v1885 = vadd.f32 %v1693, %v1884
      %v1886 = vpop.f32.mrb[0].mxu0
      %1887 = vmatprep.mubr.bf16.mxu0 0
      %1888 = vmatmul.mubr.bf16.gmra.mrb[0].mxu0 %v1753
      %v1889 = vpop.f32.mrb[0].mxu0
      %v1890 = vadd.f32 %v1693, %v1889
      %v1891 = vpop.f32.mrb[0].mxu0
      %v1892 = vpop.f32.mrb[0].mxu0
      %v1893 = vadd.f32 %v1693, %v1892
      %v1894 = vpop.f32.mrb[0].mxu0
      %1895 = vmatprep.mubr.bf16.mxu0 0
      %1896 = vmatmul.mubr.bf16.gmra.mrb[0].mxu0 %v1756
      %v1897 = vpop.f32.mrb[0].mxu0
      %v1898 = vadd.f32 %v1693, %v1897
      %v1899 = vpop.f32.mrb[0].mxu0
      %v1900 = vpop.f32.mrb[0].mxu0
      %v1901 = vadd.f32 %v1693, %v1900
      %v1902 = vpop.f32.mrb[0].mxu0
      %1903 = vmatprep.mubr.bf16.mxu0 0
      %1904 = vmatmul.mubr.bf16.gmra.mrb[0].mxu0 %v1759
      %v1905 = vpop.f32.mrb[0].mxu0
      %v1906 = vadd.f32 %v1693, %v1905
      %v1907 = vpop.f32.mrb[0].mxu0
      %v1908 = vpop.f32.mrb[0].mxu0
      %v1909 = vadd.f32 %v1693, %v1908
      %v1910 = vpop.f32.mrb[0].mxu0
      %1911 = vmatprep.mubr.bf16.mxu0 0
      %1912 = vmatmul.mubr.bf16.gmra.mrb[0].mxu0 %v1762
      %v1913 = vpop.f32.mrb[0].mxu0
      %v1914 = vadd.f32 %v1693, %v1913
      %v1915 = vpop.f32.mrb[0].mxu0
      %v1916 = vpop.f32.mrb[0].mxu0
      %v1917 = vadd.f32 %v1693, %v1916
      %v1918 = vpop.f32.mrb[0].mxu0
      %1919 = vmatprep.mubr.bf16.mxu0 0
      %1920 = vmatmul.mubr.bf16.gmra.mrb[0].mxu0 %v1765
      %v1921 = vpop.f32.mrb[0].mxu0
      %v1922 = vadd.f32 %v1693, %v1921
      %v1923 = vpop.f32.mrb[0].mxu0
      %v1924 = vpop.f32.mrb[0].mxu0
      %v1925 = vadd.f32 %v1693, %v1924
      %v1926 = vpop.f32.mrb[0].mxu0
      %1927 = vdwg.mxu0
      %vm1928 = vcmask 23552
      %1929 = vst.msk [vmem:[%s478] sm:$0xff] %vm1928, %v1802
      %1930 = vst.msk [vmem:[%s478 + $0x8] sm:$0xff] %vm1928, %v1805
      %1931 = vst.msk [vmem:[%s478 + $0x10] sm:$0xff] %vm1928, %v1810
      %1932 = vst.msk [vmem:[%s478 + $0x18] sm:$0xff] %vm1928, %v1813
      %1933 = vst.msk [vmem:[%s478 + $0x20] sm:$0xff] %vm1928, %v1818
      %1934 = vst.msk [vmem:[%s478 + $0x28] sm:$0xff] %vm1928, %v1821
      %1935 = vst.msk [vmem:[%s478 + $0x30] sm:$0xff] %vm1928, %v1826
      %1936 = vst.msk [vmem:[%s478 + $0x38] sm:$0xff] %vm1928, %v1829
      %1937 = vst.msk [vmem:[%s478 + $0x40] sm:$0xff] %vm1928, %v1834
      %1938 = vst.msk [vmem:[%s478 + $0x48] sm:$0xff] %vm1928, %v1837
      %1939 = vst.msk [vmem:[%s478 + $0x50] sm:$0xff] %vm1928, %v1842
      %1940 = vst.msk [vmem:[%s478 + $0x58] sm:$0xff] %vm1928, %v1845
      %1941 = vst.msk [vmem:[%s478 + $0x60] sm:$0xff] %vm1928, %v1850
      %1942 = vst.msk [vmem:[%s478 + $0x68] sm:$0xff] %vm1928, %v1853
      %1943 = vst.msk [vmem:[%s478 + $0x70] sm:$0xff] %vm1928, %v1858
      %1944 = vst.msk [vmem:[%s478 + $0x78] sm:$0xff] %vm1928, %v1861
      %1945 = vst.msk [vmem:[%s478 + $0x80] sm:$0xff] %vm1928, %v1866
      %1946 = vst.msk [vmem:[%s478 + $0x88] sm:$0xff] %vm1928, %v1869
      %1947 = vst.msk [vmem:[%s478 + $0x90] sm:$0xff] %vm1928, %v1874
      %1948 = vst.msk [vmem:[%s478 + $0x98] sm:$0xff] %vm1928, %v1877
      %1949 = vst.msk [vmem:[%s478 + $0xa0] sm:$0xff] %vm1928, %v1882
      %1950 = vst.msk [vmem:[%s478 + $0xa8] sm:$0xff] %vm1928, %v1885
      %1951 = vst.msk [vmem:[%s478 + $0xb0] sm:$0xff] %vm1928, %v1890
      %1952 = vst.msk [vmem:[%s478 + $0xb8] sm:$0xff] %vm1928, %v1893
      %1953 = vst.msk [vmem:[%s478 + $0xc0] sm:$0xff] %vm1928, %v1898
      %1954 = vst.msk [vmem:[%s478 + $0xc8] sm:$0xff] %vm1928, %v1901
      %1955 = vst.msk [vmem:[%s478 + $0xd0] sm:$0xff] %vm1928, %v1906
      %1956 = vst.msk [vmem:[%s478 + $0xd8] sm:$0xff] %vm1928, %v1909
      %1957 = vst.msk [vmem:[%s478 + $0xe0] sm:$0xff] %vm1928, %v1914
      %1958 = vst.msk [vmem:[%s478 + $0xe8] sm:$0xff] %vm1928, %v1917
      %1959 = vst.msk [vmem:[%s478 + $0xf0] sm:$0xff] %vm1928, %v1922
      %1960 = vst.msk [vmem:[%s478 + $0xf8] sm:$0xff] %vm1928, %v1925
      %s1961 = smul.u32 32, %s29
      %p1962 = scmp.lt.s32.totalorder %s28, 1
      %s1963 = scalar_select %p1962, %s28, 1
      %p1964 = scmp.lt.s32.totalorder %s1961, 127
      %s1965 = scalar_select %p1964, %s1961, 127
      %s1966 = smul.addr %s1963, 128
      %s1967 = sadd.s32 %s1965, %s1966
      %s1968 = smul.addr %s1967, 8
      %s1969 = scalar_lea.vmem %s13, %s1968
      // Predicated region
      $region77: #{foldingnet_forward.3} parent=71 // pred_check
        %p1970 = pneg %p339
      $region78: #{foldingnet_forward.3} parent=71 // pred_check_branch
        %1972 = sbr.rel (%p1970) target = $region80
      $region79: #{foldingnet_forward.3} parent=71 // pred_region
        %s1973 = smul.u32 32, %s29
      $region80: #{foldingnet_forward.3} parent=71 // pred_fallthru
        _
    $region72: #{foldingnet_forward.3} parent=5 // pred_fallthru
      _
    %p1974 = scmp.le.s32.totalorder 2, %s19
    // Predicated region
    $region81: #{foldingnet_forward.3} parent=5 // pred_check
      %p1975 = pneg %p1974
    $region82: #{foldingnet_forward.3} parent=5 // pred_check_branch
      %1977 = sbr.rel (%p1975) target = $region84
    $region83: #{foldingnet_forward.3} parent=5 // pred_region
      %s1978 = ssub.s32 %s19, 2
      // Predicated region
      $region85: #{foldingnet_forward.3} parent=83 // pred_check
        %p1979 = pneg %p345
      $region86: #{foldingnet_forward.3} parent=83 // pred_check_branch
        %1981 = sbr.rel (%p1979) target = $region88
      $region87: #{foldingnet_forward.3} parent=83 // pred_region
        %s1982 = smul.u32 32, %s31
        %p1983 = scmp.lt.s32.totalorder %s30, 1
        %s1984 = scalar_select %p1983, %s30, 1
        %p1985 = scmp.lt.s32.totalorder %s1982, 127
        %s1986 = scalar_select %p1985, %s1982, 127
        %s1987 = smul.addr %s1984, 128
        %s1988 = sadd.s32 %s1986, %s1987
        %s1989 = smul.addr %s1988, 8
        %s1990 = scalar_lea.vmem %s13, %s1989
      $region88: #{foldingnet_forward.3} parent=83 // pred_fallthru
        _
    $region84: #{foldingnet_forward.3} parent=5 // pred_fallthru
      _
  $region6: #{foldingnet_forward.3} parent=0 // loop_footer
    %s23 = sadd.s32 1, %s19
  $region7: #{foldingnet_forward.3} parent=0 // loop_footer_branch
    %18 = sbr.rel target = $region3
  $region8: #{foldingnet_forward.3} parent=0 // loop_exit
    _

</llo_original>
